<compile_context>
chip_gen: v5e
topology: v5e:2x2
jax: 0.10.0
libtpu: 0.0.40
codegen_flags: <defaults>
</compile_context>

<pallas_src>
import functools

import jax
import jax.numpy as jnp
from jax.experimental import pallas as pl
from jax.experimental.pallas import tpu as pltpu


def _round_up(x, m):
    return ((x + m - 1) // m) * m


# ----------------------------------------------------------------------------
# Single fused GRDB kernel (one grid step per batch element)
# ----------------------------------------------------------------------------
def _grdb_kernel(alpha_ref, mask_ref, b_ref, x_ref, *refs,
                 D, L, C, G, Wp, Mo, P):
    # alpha_ref : (D*L,) f32 SMEM                  PReLU slopes
    # mask_ref  : (1, Mo) f32                      1.0 on real image columns
    # b_ref     : (C, 1) f32                       final 1x1 bias
    # x_ref     : (1, C, P) bf16                   padded-flat input, zero halo
    # refs[0:D*L]   w3[d*L+l]  (9, G, Cin_l) bf16  tap-major 3x3 weights
    # refs[D*L]     w1_stack   (D, C, Ctot)  bf16  per-RDB 1x1 (bias=False)
    # refs[D*L+1]   wf_stack   (D, C, C)     bf16  final 1x1 split per RDB
    # refs[D*L+2]   out        (1, C, P)     f32
    # refs[D*L+3]   slab       (Ctot, P)     bf16  VMEM scratch (dense slab)
    w3_refs = refs[0:D * L]
    w1_ref = refs[D * L]
    wf_ref = refs[D * L + 1]
    out_ref = refs[D * L + 2]
    slab_ref = refs[D * L + 3]

    # Hoist the halo-column mask broadcast out of all loops (no per-layer
    # broadcast_in_dim duplication).
    maskG = jnp.broadcast_to(mask_ref[...], (G, Mo))            # (G, Mo) f32

    x = x_ref[0]                                                # (C, P) bf16
    cur = x                                                     # running RDB output
    # Global residual + final bias accumulated up-front (halo lanes of the
    # bias leak are discarded by the final slice outside the kernel).
    acc = x.astype(jnp.float32) + b_ref[...]                    # (C, P) f32

    for d in range(D):
        # (Re)initialize the dense slab: zero everywhere keeps the halo and
        # slack lanes of the growth channels zero; then drop the current
        # (already zero-halo) features in.
        slab_ref[...] = jnp.zeros((slab_ref.shape[0], P), slab_ref.dtype)
        slab_ref[0:C, :] = cur

        cin = C
        for l in range(L):
            # 3x3 conv as 9 shifted lane-window matmuls over the padded image.
            w3 = w3_refs[d * L + l]
            s = jnp.zeros((G, Mo), jnp.float32)
            for kh in range(3):
                for kw in range(3):
                    off = kh * Wp + kw
                    s = s + jnp.dot(w3[kh * 3 + kw],
                                    slab_ref[0:cin, off:off + Mo],
                                    preferred_element_type=jnp.float32)
            a = alpha_ref[d * L + l]
            y = jnp.where(s > 0.0, s, a * s) * maskG            # PReLU + halo mask
            # Store the new growth channels in padded coordinates so the next
            # dense layer sees a correct zero halo.
            slab_ref[cin:cin + G, Wp + 1:Wp + 1 + Mo] = y.astype(slab_ref.dtype)
            cin += G

        # Local feature fusion (1x1, bias=False) + local residual.  Halo/slack
        # lanes stay zero because both slab and `cur` are zero there.
        z = jnp.dot(w1_ref[d], slab_ref[...],
                    preferred_element_type=jnp.float32)
        z = z + cur.astype(jnp.float32)
        cur = z.astype(jnp.bfloat16)

        # Fold this RDB's contribution to the final 1x1 immediately -- the
        # channel concat of RDB outputs never exists.
        acc = acc + jnp.dot(wf_ref[d], cur,
                            preferred_element_type=jnp.float32)

    out_ref[0] = acc


def grdb_apply(xflat, params, *, H, W):
    """xflat: (N, C, P) bf16 padded-flat image with zero halo -> (N, C, P) f32."""
    N, C, P = xflat.shape
    rdbs = params["rdbs"]
    D = len(rdbs)
    L = len(rdbs[0]["w3"])
    G = rdbs[0]["w3"][0].shape[1]
    Ctot = C + L * G
    Wp = W + 2
    Mo = H * Wp

    mask = (jnp.arange(Mo) % Wp < W).astype(jnp.float32).reshape(1, Mo)
    alphas = jnp.concatenate([r["alphas"] for r in rdbs])         # (D*L,)
    w3_flat = [w for r in rdbs for w in r["w3"]]                  # D*L tensors
    w1_stack = jnp.stack([r["w1"] for r in rdbs])                 # (D, C, Ctot)
    wf_stack = params["w_final"]                                  # (D, C, C)
    bias = params["b_final"].reshape(C, 1).astype(jnp.float32)

    kern = functools.partial(_grdb_kernel, D=D, L=L, C=C, G=G,
                             Wp=Wp, Mo=Mo, P=P)

    in_specs = [
        pl.BlockSpec(memory_space=pltpu.MemorySpace.SMEM),        # alphas
        pl.BlockSpec((1, Mo), lambda n: (0, 0)),                  # column mask
        pl.BlockSpec((C, 1), lambda n: (0, 0)),                   # final bias
        pl.BlockSpec((1, C, P), lambda n: (n, 0, 0)),             # x (padded-flat)
    ]
    for w3 in w3_flat:
        cin_l = w3.shape[2]
        in_specs.append(pl.BlockSpec((9, G, cin_l), lambda n: (0, 0, 0)))
    in_specs.append(pl.BlockSpec((D, C, Ctot), lambda n: (0, 0, 0)))   # w1_stack
    in_specs.append(pl.BlockSpec((D, C, C), lambda n: (0, 0, 0)))      # wf_stack

    return pl.pallas_call(
        kern,
        out_shape=jax.ShapeDtypeStruct((N, C, P), jnp.float32),
        grid=(N,),
        in_specs=in_specs,
        out_specs=pl.BlockSpec((1, C, P), lambda n: (n, 0, 0)),
        scratch_shapes=[pltpu.VMEM((Ctot, P), jnp.bfloat16)],
        compiler_params=pltpu.CompilerParams(
            dimension_semantics=("parallel",)),
    )(alphas, mask, bias, xflat, *w3_flat, w1_stack, wf_stack)


# ----------------------------------------------------------------------------
# Parameters + GRDB forward (glue is plain JAX; the hot path is one kernel)
# ----------------------------------------------------------------------------
def init_grdb_params(key, numofkernels, nDenselayer, growthRate, numdb):
    C, L, G, D = numofkernels, nDenselayer, growthRate, numdb
    params = {"rdbs": []}
    for _ in range(D):
        w3_list, alphas = [], []
        cin = C
        for _ in range(L):
            key, k1 = jax.random.split(key)
            # tap-major layout (9, G, Cin): tap t = kh*3+kw holds W[:, :, kh, kw]
            w3 = jax.random.normal(k1, (9, G, cin), jnp.float32) * 0.05
            w3_list.append(w3.astype(jnp.bfloat16))
            alphas.append(0.25)                          # nn.PReLU() default init
            cin += G
        key, k2 = jax.random.split(key)
        w1 = jax.random.normal(k2, (C, cin), jnp.float32) * 0.05      # bias=False
        params["rdbs"].append({
            "w3": w3_list,
            "alphas": jnp.asarray(alphas, jnp.float32),
            "w1": w1.astype(jnp.bfloat16),
        })
    key, k3, k4 = jax.random.split(key, 3)
    # W_final[:, d*C:(d+1)*C] stored as w_final[d]  (so the kernel consumes
    # each RDB output directly, without an HBM channel concat)
    params["w_final"] = (jax.random.normal(k3, (D, C, C), jnp.float32) * 0.05
                         ).astype(jnp.bfloat16)
    params["b_final"] = jax.random.normal(k4, (C,), jnp.float32) * 0.05
    return params


def grdb_forward(params, x_nchw):
    N, C, H, W = x_nchw.shape
    Hp, Wp = H + 2, W + 2
    Pimg = Hp * Wp
    P = _round_up(Pimg + 2, 128)          # +2 slack lanes for the last conv taps

    # Build the zero halo ONCE (channels-first, spatial flattened onto lanes).
    xpad = jnp.pad(x_nchw, ((0, 0), (0, 0), (1, 1), (1, 1)))       # (N,C,Hp,Wp)
    xflat = xpad.reshape(N, C, Pimg)
    xflat = jnp.pad(xflat, ((0, 0), (0, 0), (0, P - Pimg))).astype(jnp.bfloat16)

    y = grdb_apply(xflat, params, H=H, W=W)                        # (N,C,P) f32
    y = y[:, :, :Pimg].reshape(N, C, Hp, Wp)[:, :, 1:1 + H, 1:1 + W]
    return y                                                       # NCHW f32


# ----------------------------------------------------------------------------
# Pure-JAX f32 reference (loose numerical check against the bf16 kernel)
# ----------------------------------------------------------------------------
def grdb_reference(params, x_nchw):
    x = x_nchw.astype(jnp.float32)
    out = x
    outs = []
    for rdb in params["rdbs"]:
        h = out
        for l, w9 in enumerate(rdb["w3"]):
            G, cin = w9.shape[1], w9.shape[2]
            w_oihw = jnp.transpose(
                w9.astype(jnp.float32).reshape(3, 3, G, cin), (2, 3, 0, 1))
            y = jax.lax.conv_general_dilated(
                h, w_oihw, window_strides=(1, 1), padding=((1, 1), (1, 1)),
                dimension_numbers=("NCHW", "OIHW", "NCHW"))
            a = rdb["alphas"][l]
            y = jnp.where(y > 0, y, a * y)
            h = jnp.concatenate([h, y], axis=1)
        z = jnp.einsum("oi,nihw->nohw", rdb["w1"].astype(jnp.float32), h)
        out = z + out
        outs.append(out)
    wf = params["w_final"].astype(jnp.float32)
    z = sum(jnp.einsum("oi,nihw->nohw", wf[d], outs[d]) for d in range(wf.shape[0]))
    z = z + params["b_final"].reshape(1, -1, 1, 1)
    return x + z


if __name__ == "__main__":
    key = jax.random.PRNGKey(0)
    kx, kp = jax.random.split(key)

    # GRDB(numofkernels=4, nDenselayer=2, growthRate=4, numdb=2)
    N, C, H, W = 2, 4, 16, 16
    nDenselayer, growthRate, numdb = 2, 4, 2

    x = jax.random.normal(kx, (N, C, H, W), jnp.float32)   # PyTorch NCHW input
    params = init_grdb_params(kp, C, nDenselayer, growthRate, numdb)

    fwd = jax.jit(grdb_forward)
    out = jax.block_until_ready(fwd(params, x))
    assert out.shape == (N, C, H, W)
    assert bool(jnp.all(jnp.isfinite(out)))

    # Loose check vs f32 reference (bf16 activations => small deviations).
    ref = grdb_reference(params, x)
    max_err = float(jnp.max(jnp.abs(out - ref)))
    assert max_err < 0.15, f"max abs err vs reference: {max_err}"

    print("KERNEL_OK")
</pallas_src>

<mosaic_0001>
module attributes {stable_mosaic.version = 11 : i64} {
  func.func @_grdb_kernel(%arg0: i32, %arg1: memref<4xf32, #tpu.memory_space<smem>>, %arg2: memref<1x288xf32, #tpu.memory_space<vmem>>, %arg3: memref<4x1xf32, #tpu.memory_space<vmem>>, %arg4: memref<1x4x384xbf16, #tpu.memory_space<vmem>>, %arg5: memref<9x4x4xbf16, #tpu.memory_space<vmem>>, %arg6: memref<9x4x8xbf16, #tpu.memory_space<vmem>>, %arg7: memref<9x4x4xbf16, #tpu.memory_space<vmem>>, %arg8: memref<9x4x8xbf16, #tpu.memory_space<vmem>>, %arg9: memref<2x4x12xbf16, #tpu.memory_space<vmem>>, %arg10: memref<2x4x4xbf16, #tpu.memory_space<vmem>>, %arg11: memref<1x4x384xf32, #tpu.memory_space<vmem>>, %arg12: memref<12x384xbf16, #tpu.memory_space<vmem>>) attributes {dimension_semantics = [#tpu.dimension_semantics<parallel>], iteration_bounds = array<i64: 2>, scalar_prefetch = 0 : i64, scratch_operands = 1 : i64, tpu.core_type = #tpu.core_type<tc>, window_params = [{transform_indices = @transform_0, window_bounds = array<i64: 4>}, {pipeline_mode = #tpu.pipeline_mode<synchronous>, transform_indices = @transform_1, window_bounds = array<i64: 1, 288>}, {pipeline_mode = #tpu.pipeline_mode<synchronous>, transform_indices = @transform_2, window_bounds = array<i64: 4, 1>}, {transform_indices = @transform_3, window_bounds = array<i64: 1, 4, 384>}, {pipeline_mode = #tpu.pipeline_mode<synchronous>, transform_indices = @transform_4, window_bounds = array<i64: 9, 4, 4>}, {pipeline_mode = #tpu.pipeline_mode<synchronous>, transform_indices = @transform_5, window_bounds = array<i64: 9, 4, 8>}, {pipeline_mode = #tpu.pipeline_mode<synchronous>, transform_indices = @transform_6, window_bounds = array<i64: 9, 4, 4>}, {pipeline_mode = #tpu.pipeline_mode<synchronous>, transform_indices = @transform_7, window_bounds = array<i64: 9, 4, 8>}, {pipeline_mode = #tpu.pipeline_mode<synchronous>, transform_indices = @transform_8, window_bounds = array<i64: 2, 4, 12>}, {pipeline_mode = #tpu.pipeline_mode<synchronous>, transform_indices = @transform_9, window_bounds = array<i64: 2, 4, 4>}, {transform_indices = @transform_10, window_bounds = array<i64: 1, 4, 384>}]} {
    %c0 = arith.constant 0 : index
    %c0_0 = arith.constant 0 : index
    %0 = vector.load %arg2[%c0, %c0_0] : memref<1x288xf32, #tpu.memory_space<vmem>>, vector<1x288xf32>
    %1 = vector.shape_cast %0 : vector<1x288xf32> to vector<1x288xf32>
    %2 = vector.broadcast %1 : vector<1x288xf32> to vector<4x288xf32>
    %c0_1 = arith.constant 0 : index
    %c0_2 = arith.constant 0 : index
    %c0_3 = arith.constant 0 : index
    %3 = vector.load %arg4[%c0_1, %c0_2, %c0_3] : memref<1x4x384xbf16, #tpu.memory_space<vmem>>, vector<1x4x384xbf16>
    %4 = vector.shape_cast %3 : vector<1x4x384xbf16> to vector<4x384xbf16>
    %5 = arith.extf %4 : vector<4x384xbf16> to vector<4x384xf32>
    %c0_4 = arith.constant 0 : index
    %c0_5 = arith.constant 0 : index
    %6 = vector.load %arg3[%c0_4, %c0_5] : memref<4x1xf32, #tpu.memory_space<vmem>>, vector<4x1xf32>
    %7 = vector.broadcast %6 : vector<4x1xf32> to vector<4x384xf32>
    %8 = arith.addf %5, %7 : vector<4x384xf32>
    %cst = arith.constant 0.000000e+00 : bf16
    %9 = vector.broadcast %cst : bf16 to vector<12x384xbf16>
    %c0_6 = arith.constant 0 : index
    %c0_7 = arith.constant 0 : index
    %10 = vector.load %arg12[%c0_6, %c0_7] : memref<12x384xbf16, #tpu.memory_space<vmem>>, vector<12x384xbf16>
    tpu.vector_store %arg12[%c0_6, %c0_7], %9 {strides = array<i32>} : memref<12x384xbf16, #tpu.memory_space<vmem>>, vector<12x384xbf16>,
    %c0_8 = arith.constant 0 : index
    %c0_9 = arith.constant 0 : index
    %11 = vector.load %arg12[%c0_8, %c0_9] : memref<12x384xbf16, #tpu.memory_space<vmem>>, vector<4x384xbf16>
    tpu.vector_store %arg12[%c0_8, %c0_9], %4 {strides = array<i32>} : memref<12x384xbf16, #tpu.memory_space<vmem>>, vector<4x384xbf16>,
    %cst_10 = arith.constant 0.000000e+00 : f32
    %12 = vector.broadcast %cst_10 : f32 to vector<4x288xf32>
    %c0_11 = arith.constant 0 : index
    %c0_12 = arith.constant 0 : index
    %c0_13 = arith.constant 0 : index
    %13 = vector.load %arg5[%c0_11, %c0_12, %c0_13] : memref<9x4x4xbf16, #tpu.memory_space<vmem>>, vector<1x4x4xbf16>
    %14 = vector.shape_cast %13 : vector<1x4x4xbf16> to vector<4x4xbf16>
    %c0_14 = arith.constant 0 : index
    %c0_15 = arith.constant 0 : index
    %15 = vector.load %arg12[%c0_14, %c0_15] : memref<12x384xbf16, #tpu.memory_space<vmem>>, vector<4x288xbf16>
    %cst_16 = arith.constant dense<0.000000e+00> : vector<4x288xf32>
    %16 = tpu.matmul %14, %15, %cst_16 {dimension_numbers = #tpu.dot_dimension_numbers<[1], [0], [0], [1], [0, 0, 1, 1], [], []>} : vector<4x4xbf16>, vector<4x288xbf16>, vector<4x288xf32> -> vector<4x288xf32>
    %17 = arith.addf %12, %16 : vector<4x288xf32>
    %c1 = arith.constant 1 : index
    %c0_17 = arith.constant 0 : index
    %c0_18 = arith.constant 0 : index
    %18 = vector.load %arg5[%c1, %c0_17, %c0_18] : memref<9x4x4xbf16, #tpu.memory_space<vmem>>, vector<1x4x4xbf16>
    %19 = vector.shape_cast %18 : vector<1x4x4xbf16> to vector<4x4xbf16>
    %c0_19 = arith.constant 0 : index
    %c1_20 = arith.constant 1 : index
    %20 = vector.load %arg12[%c0_19, %c1_20] : memref<12x384xbf16, #tpu.memory_space<vmem>>, vector<4x288xbf16>
    %cst_21 = arith.constant dense<0.000000e+00> : vector<4x288xf32>
    %21 = tpu.matmul %19, %20, %cst_21 {dimension_numbers = #tpu.dot_dimension_numbers<[1], [0], [0], [1], [0, 0, 1, 1], [], []>} : vector<4x4xbf16>, vector<4x288xbf16>, vector<4x288xf32> -> vector<4x288xf32>
    %22 = arith.addf %17, %21 : vector<4x288xf32>
    %c2 = arith.constant 2 : index
    %c0_22 = arith.constant 0 : index
    %c0_23 = arith.constant 0 : index
    %23 = vector.load %arg5[%c2, %c0_22, %c0_23] : memref<9x4x4xbf16, #tpu.memory_space<vmem>>, vector<1x4x4xbf16>
    %24 = vector.shape_cast %23 : vector<1x4x4xbf16> to vector<4x4xbf16>
    %c0_24 = arith.constant 0 : index
    %c2_25 = arith.constant 2 : index
    %25 = vector.load %arg12[%c0_24, %c2_25] : memref<12x384xbf16, #tpu.memory_space<vmem>>, vector<4x288xbf16>
    %cst_26 = arith.constant dense<0.000000e+00> : vector<4x288xf32>
    %26 = tpu.matmul %24, %25, %cst_26 {dimension_numbers = #tpu.dot_dimension_numbers<[1], [0], [0], [1], [0, 0, 1, 1], [], []>} : vector<4x4xbf16>, vector<4x288xbf16>, vector<4x288xf32> -> vector<4x288xf32>
    %27 = arith.addf %22, %26 : vector<4x288xf32>
    %c3 = arith.constant 3 : index
    %c0_27 = arith.constant 0 : index
    %c0_28 = arith.constant 0 : index
    %28 = vector.load %arg5[%c3, %c0_27, %c0_28] : memref<9x4x4xbf16, #tpu.memory_space<vmem>>, vector<1x4x4xbf16>
    %29 = vector.shape_cast %28 : vector<1x4x4xbf16> to vector<4x4xbf16>
    %c0_29 = arith.constant 0 : index
    %c18 = arith.constant 18 : index
    %30 = vector.load %arg12[%c0_29, %c18] : memref<12x384xbf16, #tpu.memory_space<vmem>>, vector<4x288xbf16>
    %cst_30 = arith.constant dense<0.000000e+00> : vector<4x288xf32>
    %31 = tpu.matmul %29, %30, %cst_30 {dimension_numbers = #tpu.dot_dimension_numbers<[1], [0], [0], [1], [0, 0, 1, 1], [], []>} : vector<4x4xbf16>, vector<4x288xbf16>, vector<4x288xf32> -> vector<4x288xf32>
    %32 = arith.addf %27, %31 : vector<4x288xf32>
    %c4 = arith.constant 4 : index
    %c0_31 = arith.constant 0 : index
    %c0_32 = arith.constant 0 : index
    %33 = vector.load %arg5[%c4, %c0_31, %c0_32] : memref<9x4x4xbf16, #tpu.memory_space<vmem>>, vector<1x4x4xbf16>
    %34 = vector.shape_cast %33 : vector<1x4x4xbf16> to vector<4x4xbf16>
    %c0_33 = arith.constant 0 : index
    %c19 = arith.constant 19 : index
    %35 = vector.load %arg12[%c0_33, %c19] : memref<12x384xbf16, #tpu.memory_space<vmem>>, vector<4x288xbf16>
    %cst_34 = arith.constant dense<0.000000e+00> : vector<4x288xf32>
    %36 = tpu.matmul %34, %35, %cst_34 {dimension_numbers = #tpu.dot_dimension_numbers<[1], [0], [0], [1], [0, 0, 1, 1], [], []>} : vector<4x4xbf16>, vector<4x288xbf16>, vector<4x288xf32> -> vector<4x288xf32>
    %37 = arith.addf %32, %36 : vector<4x288xf32>
    %c5 = arith.constant 5 : index
    %c0_35 = arith.constant 0 : index
    %c0_36 = arith.constant 0 : index
    %38 = vector.load %arg5[%c5, %c0_35, %c0_36] : memref<9x4x4xbf16, #tpu.memory_space<vmem>>, vector<1x4x4xbf16>
    %39 = vector.shape_cast %38 : vector<1x4x4xbf16> to vector<4x4xbf16>
    %c0_37 = arith.constant 0 : index
    %c20 = arith.constant 20 : index
    %40 = vector.load %arg12[%c0_37, %c20] : memref<12x384xbf16, #tpu.memory_space<vmem>>, vector<4x288xbf16>
    %cst_38 = arith.constant dense<0.000000e+00> : vector<4x288xf32>
    %41 = tpu.matmul %39, %40, %cst_38 {dimension_numbers = #tpu.dot_dimension_numbers<[1], [0], [0], [1], [0, 0, 1, 1], [], []>} : vector<4x4xbf16>, vector<4x288xbf16>, vector<4x288xf32> -> vector<4x288xf32>
    %42 = arith.addf %37, %41 : vector<4x288xf32>
    %c6 = arith.constant 6 : index
    %c0_39 = arith.constant 0 : index
    %c0_40 = arith.constant 0 : index
    %43 = vector.load %arg5[%c6, %c0_39, %c0_40] : memref<9x4x4xbf16, #tpu.memory_space<vmem>>, vector<1x4x4xbf16>
    %44 = vector.shape_cast %43 : vector<1x4x4xbf16> to vector<4x4xbf16>
    %c0_41 = arith.constant 0 : index
    %c36 = arith.constant 36 : index
    %45 = vector.load %arg12[%c0_41, %c36] : memref<12x384xbf16, #tpu.memory_space<vmem>>, vector<4x288xbf16>
    %cst_42 = arith.constant dense<0.000000e+00> : vector<4x288xf32>
    %46 = tpu.matmul %44, %45, %cst_42 {dimension_numbers = #tpu.dot_dimension_numbers<[1], [0], [0], [1], [0, 0, 1, 1], [], []>} : vector<4x4xbf16>, vector<4x288xbf16>, vector<4x288xf32> -> vector<4x288xf32>
    %47 = arith.addf %42, %46 : vector<4x288xf32>
    %c7 = arith.constant 7 : index
    %c0_43 = arith.constant 0 : index
    %c0_44 = arith.constant 0 : index
    %48 = vector.load %arg5[%c7, %c0_43, %c0_44] : memref<9x4x4xbf16, #tpu.memory_space<vmem>>, vector<1x4x4xbf16>
    %49 = vector.shape_cast %48 : vector<1x4x4xbf16> to vector<4x4xbf16>
    %c0_45 = arith.constant 0 : index
    %c37 = arith.constant 37 : index
    %50 = vector.load %arg12[%c0_45, %c37] : memref<12x384xbf16, #tpu.memory_space<vmem>>, vector<4x288xbf16>
    %cst_46 = arith.constant dense<0.000000e+00> : vector<4x288xf32>
    %51 = tpu.matmul %49, %50, %cst_46 {dimension_numbers = #tpu.dot_dimension_numbers<[1], [0], [0], [1], [0, 0, 1, 1], [], []>} : vector<4x4xbf16>, vector<4x288xbf16>, vector<4x288xf32> -> vector<4x288xf32>
    %52 = arith.addf %47, %51 : vector<4x288xf32>
    %c8 = arith.constant 8 : index
    %c0_47 = arith.constant 0 : index
    %c0_48 = arith.constant 0 : index
    %53 = vector.load %arg5[%c8, %c0_47, %c0_48] : memref<9x4x4xbf16, #tpu.memory_space<vmem>>, vector<1x4x4xbf16>
    %54 = vector.shape_cast %53 : vector<1x4x4xbf16> to vector<4x4xbf16>
    %c0_49 = arith.constant 0 : index
    %c38 = arith.constant 38 : index
    %55 = vector.load %arg12[%c0_49, %c38] : memref<12x384xbf16, #tpu.memory_space<vmem>>, vector<4x288xbf16>
    %cst_50 = arith.constant dense<0.000000e+00> : vector<4x288xf32>
    %56 = tpu.matmul %54, %55, %cst_50 {dimension_numbers = #tpu.dot_dimension_numbers<[1], [0], [0], [1], [0, 0, 1, 1], [], []>} : vector<4x4xbf16>, vector<4x288xbf16>, vector<4x288xf32> -> vector<4x288xf32>
    %57 = arith.addf %52, %56 : vector<4x288xf32>
    %c0_51 = arith.constant 0 : index
    %58 = memref.load %arg1[%c0_51] : memref<4xf32, #tpu.memory_space<smem>>
    %cst_52 = arith.constant 0.000000e+00 : f32
    %59 = vector.broadcast %cst_52 : f32 to vector<4x288xf32>
    %60 = arith.cmpf ogt, %57, %59 : vector<4x288xf32>
    %61 = vector.broadcast %58 : f32 to vector<4x288xf32>
    %62 = arith.mulf %61, %57 : vector<4x288xf32>
    %63 = arith.select %60, %57, %62 : vector<4x288xi1>, vector<4x288xf32>
    %64 = arith.mulf %63, %2 : vector<4x288xf32>
    %65 = arith.truncf %64 : vector<4x288xf32> to vector<4x288xbf16>
    %c4_53 = arith.constant 4 : index
    %c19_54 = arith.constant 19 : index
    %66 = vector.load %arg12[%c4_53, %c19_54] : memref<12x384xbf16, #tpu.memory_space<vmem>>, vector<4x288xbf16>
    tpu.vector_store %arg12[%c4_53, %c19_54], %65 {strides = array<i32>} : memref<12x384xbf16, #tpu.memory_space<vmem>>, vector<4x288xbf16>,
    %cst_55 = arith.constant 0.000000e+00 : f32
    %67 = vector.broadcast %cst_55 : f32 to vector<4x288xf32>
    %c0_56 = arith.constant 0 : index
    %c0_57 = arith.constant 0 : index
    %c0_58 = arith.constant 0 : index
    %68 = vector.load %arg6[%c0_56, %c0_57, %c0_58] : memref<9x4x8xbf16, #tpu.memory_space<vmem>>, vector<1x4x8xbf16>
    %69 = vector.shape_cast %68 : vector<1x4x8xbf16> to vector<4x8xbf16>
    %c0_59 = arith.constant 0 : index
    %c0_60 = arith.constant 0 : index
    %70 = vector.load %arg12[%c0_59, %c0_60] : memref<12x384xbf16, #tpu.memory_space<vmem>>, vector<8x288xbf16>
    %cst_61 = arith.constant dense<0.000000e+00> : vector<4x288xf32>
    %71 = tpu.matmul %69, %70, %cst_61 {dimension_numbers = #tpu.dot_dimension_numbers<[1], [0], [0], [1], [0, 0, 1, 1], [], []>} : vector<4x8xbf16>, vector<8x288xbf16>, vector<4x288xf32> -> vector<4x288xf32>
    %72 = arith.addf %67, %71 : vector<4x288xf32>
    %c1_62 = arith.constant 1 : index
    %c0_63 = arith.constant 0 : index
    %c0_64 = arith.constant 0 : index
    %73 = vector.load %arg6[%c1_62, %c0_63, %c0_64] : memref<9x4x8xbf16, #tpu.memory_space<vmem>>, vector<1x4x8xbf16>
    %74 = vector.shape_cast %73 : vector<1x4x8xbf16> to vector<4x8xbf16>
    %c0_65 = arith.constant 0 : index
    %c1_66 = arith.constant 1 : index
    %75 = vector.load %arg12[%c0_65, %c1_66] : memref<12x384xbf16, #tpu.memory_space<vmem>>, vector<8x288xbf16>
    %cst_67 = arith.constant dense<0.000000e+00> : vector<4x288xf32>
    %76 = tpu.matmul %74, %75, %cst_67 {dimension_numbers = #tpu.dot_dimension_numbers<[1], [0], [0], [1], [0, 0, 1, 1], [], []>} : vector<4x8xbf16>, vector<8x288xbf16>, vector<4x288xf32> -> vector<4x288xf32>
    %77 = arith.addf %72, %76 : vector<4x288xf32>
    %c2_68 = arith.constant 2 : index
    %c0_69 = arith.constant 0 : index
    %c0_70 = arith.constant 0 : index
    %78 = vector.load %arg6[%c2_68, %c0_69, %c0_70] : memref<9x4x8xbf16, #tpu.memory_space<vmem>>, vector<1x4x8xbf16>
    %79 = vector.shape_cast %78 : vector<1x4x8xbf16> to vector<4x8xbf16>
    %c0_71 = arith.constant 0 : index
    %c2_72 = arith.constant 2 : index
    %80 = vector.load %arg12[%c0_71, %c2_72] : memref<12x384xbf16, #tpu.memory_space<vmem>>, vector<8x288xbf16>
    %cst_73 = arith.constant dense<0.000000e+00> : vector<4x288xf32>
    %81 = tpu.matmul %79, %80, %cst_73 {dimension_numbers = #tpu.dot_dimension_numbers<[1], [0], [0], [1], [0, 0, 1, 1], [], []>} : vector<4x8xbf16>, vector<8x288xbf16>, vector<4x288xf32> -> vector<4x288xf32>
    %82 = arith.addf %77, %81 : vector<4x288xf32>
    %c3_74 = arith.constant 3 : index
    %c0_75 = arith.constant 0 : index
    %c0_76 = arith.constant 0 : index
    %83 = vector.load %arg6[%c3_74, %c0_75, %c0_76] : memref<9x4x8xbf16, #tpu.memory_space<vmem>>, vector<1x4x8xbf16>
    %84 = vector.shape_cast %83 : vector<1x4x8xbf16> to vector<4x8xbf16>
    %c0_77 = arith.constant 0 : index
    %c18_78 = arith.constant 18 : index
    %85 = vector.load %arg12[%c0_77, %c18_78] : memref<12x384xbf16, #tpu.memory_space<vmem>>, vector<8x288xbf16>
    %cst_79 = arith.constant dense<0.000000e+00> : vector<4x288xf32>
    %86 = tpu.matmul %84, %85, %cst_79 {dimension_numbers = #tpu.dot_dimension_numbers<[1], [0], [0], [1], [0, 0, 1, 1], [], []>} : vector<4x8xbf16>, vector<8x288xbf16>, vector<4x288xf32> -> vector<4x288xf32>
    %87 = arith.addf %82, %86 : vector<4x288xf32>
    %c4_80 = arith.constant 4 : index
    %c0_81 = arith.constant 0 : index
    %c0_82 = arith.constant 0 : index
    %88 = vector.load %arg6[%c4_80, %c0_81, %c0_82] : memref<9x4x8xbf16, #tpu.memory_space<vmem>>, vector<1x4x8xbf16>
    %89 = vector.shape_cast %88 : vector<1x4x8xbf16> to vector<4x8xbf16>
    %c0_83 = arith.constant 0 : index
    %c19_84 = arith.constant 19 : index
    %90 = vector.load %arg12[%c0_83, %c19_84] : memref<12x384xbf16, #tpu.memory_space<vmem>>, vector<8x288xbf16>
    %cst_85 = arith.constant dense<0.000000e+00> : vector<4x288xf32>
    %91 = tpu.matmul %89, %90, %cst_85 {dimension_numbers = #tpu.dot_dimension_numbers<[1], [0], [0], [1], [0, 0, 1, 1], [], []>} : vector<4x8xbf16>, vector<8x288xbf16>, vector<4x288xf32> -> vector<4x288xf32>
    %92 = arith.addf %87, %91 : vector<4x288xf32>
    %c5_86 = arith.constant 5 : index
    %c0_87 = arith.constant 0 : index
    %c0_88 = arith.constant 0 : index
    %93 = vector.load %arg6[%c5_86, %c0_87, %c0_88] : memref<9x4x8xbf16, #tpu.memory_space<vmem>>, vector<1x4x8xbf16>
    %94 = vector.shape_cast %93 : vector<1x4x8xbf16> to vector<4x8xbf16>
    %c0_89 = arith.constant 0 : index
    %c20_90 = arith.constant 20 : index
    %95 = vector.load %arg12[%c0_89, %c20_90] : memref<12x384xbf16, #tpu.memory_space<vmem>>, vector<8x288xbf16>
    %cst_91 = arith.constant dense<0.000000e+00> : vector<4x288xf32>
    %96 = tpu.matmul %94, %95, %cst_91 {dimension_numbers = #tpu.dot_dimension_numbers<[1], [0], [0], [1], [0, 0, 1, 1], [], []>} : vector<4x8xbf16>, vector<8x288xbf16>, vector<4x288xf32> -> vector<4x288xf32>
    %97 = arith.addf %92, %96 : vector<4x288xf32>
    %c6_92 = arith.constant 6 : index
    %c0_93 = arith.constant 0 : index
    %c0_94 = arith.constant 0 : index
    %98 = vector.load %arg6[%c6_92, %c0_93, %c0_94] : memref<9x4x8xbf16, #tpu.memory_space<vmem>>, vector<1x4x8xbf16>
    %99 = vector.shape_cast %98 : vector<1x4x8xbf16> to vector<4x8xbf16>
    %c0_95 = arith.constant 0 : index
    %c36_96 = arith.constant 36 : index
    %100 = vector.load %arg12[%c0_95, %c36_96] : memref<12x384xbf16, #tpu.memory_space<vmem>>, vector<8x288xbf16>
    %cst_97 = arith.constant dense<0.000000e+00> : vector<4x288xf32>
    %101 = tpu.matmul %99, %100, %cst_97 {dimension_numbers = #tpu.dot_dimension_numbers<[1], [0], [0], [1], [0, 0, 1, 1], [], []>} : vector<4x8xbf16>, vector<8x288xbf16>, vector<4x288xf32> -> vector<4x288xf32>
    %102 = arith.addf %97, %101 : vector<4x288xf32>
    %c7_98 = arith.constant 7 : index
    %c0_99 = arith.constant 0 : index
    %c0_100 = arith.constant 0 : index
    %103 = vector.load %arg6[%c7_98, %c0_99, %c0_100] : memref<9x4x8xbf16, #tpu.memory_space<vmem>>, vector<1x4x8xbf16>
    %104 = vector.shape_cast %103 : vector<1x4x8xbf16> to vector<4x8xbf16>
    %c0_101 = arith.constant 0 : index
    %c37_102 = arith.constant 37 : index
    %105 = vector.load %arg12[%c0_101, %c37_102] : memref<12x384xbf16, #tpu.memory_space<vmem>>, vector<8x288xbf16>
    %cst_103 = arith.constant dense<0.000000e+00> : vector<4x288xf32>
    %106 = tpu.matmul %104, %105, %cst_103 {dimension_numbers = #tpu.dot_dimension_numbers<[1], [0], [0], [1], [0, 0, 1, 1], [], []>} : vector<4x8xbf16>, vector<8x288xbf16>, vector<4x288xf32> -> vector<4x288xf32>
    %107 = arith.addf %102, %106 : vector<4x288xf32>
    %c8_104 = arith.constant 8 : index
    %c0_105 = arith.constant 0 : index
    %c0_106 = arith.constant 0 : index
    %108 = vector.load %arg6[%c8_104, %c0_105, %c0_106] : memref<9x4x8xbf16, #tpu.memory_space<vmem>>, vector<1x4x8xbf16>
    %109 = vector.shape_cast %108 : vector<1x4x8xbf16> to vector<4x8xbf16>
    %c0_107 = arith.constant 0 : index
    %c38_108 = arith.constant 38 : index
    %110 = vector.load %arg12[%c0_107, %c38_108] : memref<12x384xbf16, #tpu.memory_space<vmem>>, vector<8x288xbf16>
    %cst_109 = arith.constant dense<0.000000e+00> : vector<4x288xf32>
    %111 = tpu.matmul %109, %110, %cst_109 {dimension_numbers = #tpu.dot_dimension_numbers<[1], [0], [0], [1], [0, 0, 1, 1], [], []>} : vector<4x8xbf16>, vector<8x288xbf16>, vector<4x288xf32> -> vector<4x288xf32>
    %112 = arith.addf %107, %111 : vector<4x288xf32>
    %c1_110 = arith.constant 1 : index
    %113 = memref.load %arg1[%c1_110] : memref<4xf32, #tpu.memory_space<smem>>
    %cst_111 = arith.constant 0.000000e+00 : f32
    %114 = vector.broadcast %cst_111 : f32 to vector<4x288xf32>
    %115 = arith.cmpf ogt, %112, %114 : vector<4x288xf32>
    %116 = vector.broadcast %113 : f32 to vector<4x288xf32>
    %117 = arith.mulf %116, %112 : vector<4x288xf32>
    %118 = arith.select %115, %112, %117 : vector<4x288xi1>, vector<4x288xf32>
    %119 = arith.mulf %118, %2 : vector<4x288xf32>
    %120 = arith.truncf %119 : vector<4x288xf32> to vector<4x288xbf16>
    %c8_112 = arith.constant 8 : index
    %c19_113 = arith.constant 19 : index
    %121 = vector.load %arg12[%c8_112, %c19_113] : memref<12x384xbf16, #tpu.memory_space<vmem>>, vector<4x288xbf16>
    tpu.vector_store %arg12[%c8_112, %c19_113], %120 {strides = array<i32>} : memref<12x384xbf16, #tpu.memory_space<vmem>>, vector<4x288xbf16>,
    %c0_114 = arith.constant 0 : index
    %c0_115 = arith.constant 0 : index
    %c0_116 = arith.constant 0 : index
    %122 = vector.load %arg9[%c0_114, %c0_115, %c0_116] : memref<2x4x12xbf16, #tpu.memory_space<vmem>>, vector<1x4x12xbf16>
    %123 = vector.shape_cast %122 : vector<1x4x12xbf16> to vector<4x12xbf16>
    %c0_117 = arith.constant 0 : index
    %c0_118 = arith.constant 0 : index
    %124 = vector.load %arg12[%c0_117, %c0_118] : memref<12x384xbf16, #tpu.memory_space<vmem>>, vector<12x384xbf16>
    %cst_119 = arith.constant dense<0.000000e+00> : vector<4x384xf32>
    %125 = tpu.matmul %123, %124, %cst_119 {dimension_numbers = #tpu.dot_dimension_numbers<[1], [0], [0], [1], [0, 0, 1, 1], [], []>} : vector<4x12xbf16>, vector<12x384xbf16>, vector<4x384xf32> -> vector<4x384xf32>
    %126 = arith.extf %4 : vector<4x384xbf16> to vector<4x384xf32>
    %127 = arith.addf %125, %126 : vector<4x384xf32>
    %128 = arith.truncf %127 : vector<4x384xf32> to vector<4x384xbf16>
    %c0_120 = arith.constant 0 : index
    %c0_121 = arith.constant 0 : index
    %c0_122 = arith.constant 0 : index
    %129 = vector.load %arg10[%c0_120, %c0_121, %c0_122] : memref<2x4x4xbf16, #tpu.memory_space<vmem>>, vector<1x4x4xbf16>
    %130 = vector.shape_cast %129 : vector<1x4x4xbf16> to vector<4x4xbf16>
    %cst_123 = arith.constant dense<0.000000e+00> : vector<4x384xf32>
    %131 = tpu.matmul %130, %128, %cst_123 {dimension_numbers = #tpu.dot_dimension_numbers<[1], [0], [0], [1], [0, 0, 1, 1], [], []>} : vector<4x4xbf16>, vector<4x384xbf16>, vector<4x384xf32> -> vector<4x384xf32>
    %132 = arith.addf %8, %131 : vector<4x384xf32>
    %cst_124 = arith.constant 0.000000e+00 : bf16
    %133 = vector.broadcast %cst_124 : bf16 to vector<12x384xbf16>
    %c0_125 = arith.constant 0 : index
    %c0_126 = arith.constant 0 : index
    %134 = vector.load %arg12[%c0_125, %c0_126] : memref<12x384xbf16, #tpu.memory_space<vmem>>, vector<12x384xbf16>
    tpu.vector_store %arg12[%c0_125, %c0_126], %133 {strides = array<i32>} : memref<12x384xbf16, #tpu.memory_space<vmem>>, vector<12x384xbf16>,
    %c0_127 = arith.constant 0 : index
    %c0_128 = arith.constant 0 : index
    %135 = vector.load %arg12[%c0_127, %c0_128] : memref<12x384xbf16, #tpu.memory_space<vmem>>, vector<4x384xbf16>
    tpu.vector_store %arg12[%c0_127, %c0_128], %128 {strides = array<i32>} : memref<12x384xbf16, #tpu.memory_space<vmem>>, vector<4x384xbf16>,
    %cst_129 = arith.constant 0.000000e+00 : f32
    %136 = vector.broadcast %cst_129 : f32 to vector<4x288xf32>
    %c0_130 = arith.constant 0 : index
    %c0_131 = arith.constant 0 : index
    %c0_132 = arith.constant 0 : index
    %137 = vector.load %arg7[%c0_130, %c0_131, %c0_132] : memref<9x4x4xbf16, #tpu.memory_space<vmem>>, vector<1x4x4xbf16>
    %138 = vector.shape_cast %137 : vector<1x4x4xbf16> to vector<4x4xbf16>
    %c0_133 = arith.constant 0 : index
    %c0_134 = arith.constant 0 : index
    %139 = vector.load %arg12[%c0_133, %c0_134] : memref<12x384xbf16, #tpu.memory_space<vmem>>, vector<4x288xbf16>
    %cst_135 = arith.constant dense<0.000000e+00> : vector<4x288xf32>
    %140 = tpu.matmul %138, %139, %cst_135 {dimension_numbers = #tpu.dot_dimension_numbers<[1], [0], [0], [1], [0, 0, 1, 1], [], []>} : vector<4x4xbf16>, vector<4x288xbf16>, vector<4x288xf32> -> vector<4x288xf32>
    %141 = arith.addf %136, %140 : vector<4x288xf32>
    %c1_136 = arith.constant 1 : index
    %c0_137 = arith.constant 0 : index
    %c0_138 = arith.constant 0 : index
    %142 = vector.load %arg7[%c1_136, %c0_137, %c0_138] : memref<9x4x4xbf16, #tpu.memory_space<vmem>>, vector<1x4x4xbf16>
    %143 = vector.shape_cast %142 : vector<1x4x4xbf16> to vector<4x4xbf16>
    %c0_139 = arith.constant 0 : index
    %c1_140 = arith.constant 1 : index
    %144 = vector.load %arg12[%c0_139, %c1_140] : memref<12x384xbf16, #tpu.memory_space<vmem>>, vector<4x288xbf16>
    %cst_141 = arith.constant dense<0.000000e+00> : vector<4x288xf32>
    %145 = tpu.matmul %143, %144, %cst_141 {dimension_numbers = #tpu.dot_dimension_numbers<[1], [0], [0], [1], [0, 0, 1, 1], [], []>} : vector<4x4xbf16>, vector<4x288xbf16>, vector<4x288xf32> -> vector<4x288xf32>
    %146 = arith.addf %141, %145 : vector<4x288xf32>
    %c2_142 = arith.constant 2 : index
    %c0_143 = arith.constant 0 : index
    %c0_144 = arith.constant 0 : index
    %147 = vector.load %arg7[%c2_142, %c0_143, %c0_144] : memref<9x4x4xbf16, #tpu.memory_space<vmem>>, vector<1x4x4xbf16>
    %148 = vector.shape_cast %147 : vector<1x4x4xbf16> to vector<4x4xbf16>
    %c0_145 = arith.constant 0 : index
    %c2_146 = arith.constant 2 : index
    %149 = vector.load %arg12[%c0_145, %c2_146] : memref<12x384xbf16, #tpu.memory_space<vmem>>, vector<4x288xbf16>
    %cst_147 = arith.constant dense<0.000000e+00> : vector<4x288xf32>
    %150 = tpu.matmul %148, %149, %cst_147 {dimension_numbers = #tpu.dot_dimension_numbers<[1], [0], [0], [1], [0, 0, 1, 1], [], []>} : vector<4x4xbf16>, vector<4x288xbf16>, vector<4x288xf32> -> vector<4x288xf32>
    %151 = arith.addf %146, %150 : vector<4x288xf32>
    %c3_148 = arith.constant 3 : index
    %c0_149 = arith.constant 0 : index
    %c0_150 = arith.constant 0 : index
    %152 = vector.load %arg7[%c3_148, %c0_149, %c0_150] : memref<9x4x4xbf16, #tpu.memory_space<vmem>>, vector<1x4x4xbf16>
    %153 = vector.shape_cast %152 : vector<1x4x4xbf16> to vector<4x4xbf16>
    %c0_151 = arith.constant 0 : index
    %c18_152 = arith.constant 18 : index
    %154 = vector.load %arg12[%c0_151, %c18_152] : memref<12x384xbf16, #tpu.memory_space<vmem>>, vector<4x288xbf16>
    %cst_153 = arith.constant dense<0.000000e+00> : vector<4x288xf32>
    %155 = tpu.matmul %153, %154, %cst_153 {dimension_numbers = #tpu.dot_dimension_numbers<[1], [0], [0], [1], [0, 0, 1, 1], [], []>} : vector<4x4xbf16>, vector<4x288xbf16>, vector<4x288xf32> -> vector<4x288xf32>
    %156 = arith.addf %151, %155 : vector<4x288xf32>
    %c4_154 = arith.constant 4 : index
    %c0_155 = arith.constant 0 : index
    %c0_156 = arith.constant 0 : index
    %157 = vector.load %arg7[%c4_154, %c0_155, %c0_156] : memref<9x4x4xbf16, #tpu.memory_space<vmem>>, vector<1x4x4xbf16>
    %158 = vector.shape_cast %157 : vector<1x4x4xbf16> to vector<4x4xbf16>
    %c0_157 = arith.constant 0 : index
    %c19_158 = arith.constant 19 : index
    %159 = vector.load %arg12[%c0_157, %c19_158] : memref<12x384xbf16, #tpu.memory_space<vmem>>, vector<4x288xbf16>
    %cst_159 = arith.constant dense<0.000000e+00> : vector<4x288xf32>
    %160 = tpu.matmul %158, %159, %cst_159 {dimension_numbers = #tpu.dot_dimension_numbers<[1], [0], [0], [1], [0, 0, 1, 1], [], []>} : vector<4x4xbf16>, vector<4x288xbf16>, vector<4x288xf32> -> vector<4x288xf32>
    %161 = arith.addf %156, %160 : vector<4x288xf32>
    %c5_160 = arith.constant 5 : index
    %c0_161 = arith.constant 0 : index
    %c0_162 = arith.constant 0 : index
    %162 = vector.load %arg7[%c5_160, %c0_161, %c0_162] : memref<9x4x4xbf16, #tpu.memory_space<vmem>>, vector<1x4x4xbf16>
    %163 = vector.shape_cast %162 : vector<1x4x4xbf16> to vector<4x4xbf16>
    %c0_163 = arith.constant 0 : index
    %c20_164 = arith.constant 20 : index
    %164 = vector.load %arg12[%c0_163, %c20_164] : memref<12x384xbf16, #tpu.memory_space<vmem>>, vector<4x288xbf16>
    %cst_165 = arith.constant dense<0.000000e+00> : vector<4x288xf32>
    %165 = tpu.matmul %163, %164, %cst_165 {dimension_numbers = #tpu.dot_dimension_numbers<[1], [0], [0], [1], [0, 0, 1, 1], [], []>} : vector<4x4xbf16>, vector<4x288xbf16>, vector<4x288xf32> -> vector<4x288xf32>
    %166 = arith.addf %161, %165 : vector<4x288xf32>
    %c6_166 = arith.constant 6 : index
    %c0_167 = arith.constant 0 : index
    %c0_168 = arith.constant 0 : index
    %167 = vector.load %arg7[%c6_166, %c0_167, %c0_168] : memref<9x4x4xbf16, #tpu.memory_space<vmem>>, vector<1x4x4xbf16>
    %168 = vector.shape_cast %167 : vector<1x4x4xbf16> to vector<4x4xbf16>
    %c0_169 = arith.constant 0 : index
    %c36_170 = arith.constant 36 : index
    %169 = vector.load %arg12[%c0_169, %c36_170] : memref<12x384xbf16, #tpu.memory_space<vmem>>, vector<4x288xbf16>
    %cst_171 = arith.constant dense<0.000000e+00> : vector<4x288xf32>
    %170 = tpu.matmul %168, %169, %cst_171 {dimension_numbers = #tpu.dot_dimension_numbers<[1], [0], [0], [1], [0, 0, 1, 1], [], []>} : vector<4x4xbf16>, vector<4x288xbf16>, vector<4x288xf32> -> vector<4x288xf32>
    %171 = arith.addf %166, %170 : vector<4x288xf32>
    %c7_172 = arith.constant 7 : index
    %c0_173 = arith.constant 0 : index
    %c0_174 = arith.constant 0 : index
    %172 = vector.load %arg7[%c7_172, %c0_173, %c0_174] : memref<9x4x4xbf16, #tpu.memory_space<vmem>>, vector<1x4x4xbf16>
    %173 = vector.shape_cast %172 : vector<1x4x4xbf16> to vector<4x4xbf16>
    %c0_175 = arith.constant 0 : index
    %c37_176 = arith.constant 37 : index
    %174 = vector.load %arg12[%c0_175, %c37_176] : memref<12x384xbf16, #tpu.memory_space<vmem>>, vector<4x288xbf16>
    %cst_177 = arith.constant dense<0.000000e+00> : vector<4x288xf32>
    %175 = tpu.matmul %173, %174, %cst_177 {dimension_numbers = #tpu.dot_dimension_numbers<[1], [0], [0], [1], [0, 0, 1, 1], [], []>} : vector<4x4xbf16>, vector<4x288xbf16>, vector<4x288xf32> -> vector<4x288xf32>
    %176 = arith.addf %171, %175 : vector<4x288xf32>
    %c8_178 = arith.constant 8 : index
    %c0_179 = arith.constant 0 : index
    %c0_180 = arith.constant 0 : index
    %177 = vector.load %arg7[%c8_178, %c0_179, %c0_180] : memref<9x4x4xbf16, #tpu.memory_space<vmem>>, vector<1x4x4xbf16>
    %178 = vector.shape_cast %177 : vector<1x4x4xbf16> to vector<4x4xbf16>
    %c0_181 = arith.constant 0 : index
    %c38_182 = arith.constant 38 : index
    %179 = vector.load %arg12[%c0_181, %c38_182] : memref<12x384xbf16, #tpu.memory_space<vmem>>, vector<4x288xbf16>
    %cst_183 = arith.constant dense<0.000000e+00> : vector<4x288xf32>
    %180 = tpu.matmul %178, %179, %cst_183 {dimension_numbers = #tpu.dot_dimension_numbers<[1], [0], [0], [1], [0, 0, 1, 1], [], []>} : vector<4x4xbf16>, vector<4x288xbf16>, vector<4x288xf32> -> vector<4x288xf32>
    %181 = arith.addf %176, %180 : vector<4x288xf32>
    %c2_184 = arith.constant 2 : index
    %182 = memref.load %arg1[%c2_184] : memref<4xf32, #tpu.memory_space<smem>>
    %cst_185 = arith.constant 0.000000e+00 : f32
    %183 = vector.broadcast %cst_185 : f32 to vector<4x288xf32>
    %184 = arith.cmpf ogt, %181, %183 : vector<4x288xf32>
    %185 = vector.broadcast %182 : f32 to vector<4x288xf32>
    %186 = arith.mulf %185, %181 : vector<4x288xf32>
    %187 = arith.select %184, %181, %186 : vector<4x288xi1>, vector<4x288xf32>
    %188 = arith.mulf %187, %2 : vector<4x288xf32>
    %189 = arith.truncf %188 : vector<4x288xf32> to vector<4x288xbf16>
    %c4_186 = arith.constant 4 : index
    %c19_187 = arith.constant 19 : index
    %190 = vector.load %arg12[%c4_186, %c19_187] : memref<12x384xbf16, #tpu.memory_space<vmem>>, vector<4x288xbf16>
    tpu.vector_store %arg12[%c4_186, %c19_187], %189 {strides = array<i32>} : memref<12x384xbf16, #tpu.memory_space<vmem>>, vector<4x288xbf16>,
    %cst_188 = arith.constant 0.000000e+00 : f32
    %191 = vector.broadcast %cst_188 : f32 to vector<4x288xf32>
    %c0_189 = arith.constant 0 : index
    %c0_190 = arith.constant 0 : index
    %c0_191 = arith.constant 0 : index
    %192 = vector.load %arg8[%c0_189, %c0_190, %c0_191] : memref<9x4x8xbf16, #tpu.memory_space<vmem>>, vector<1x4x8xbf16>
    %193 = vector.shape_cast %192 : vector<1x4x8xbf16> to vector<4x8xbf16>
    %c0_192 = arith.constant 0 : index
    %c0_193 = arith.constant 0 : index
    %194 = vector.load %arg12[%c0_192, %c0_193] : memref<12x384xbf16, #tpu.memory_space<vmem>>, vector<8x288xbf16>
    %cst_194 = arith.constant dense<0.000000e+00> : vector<4x288xf32>
    %195 = tpu.matmul %193, %194, %cst_194 {dimension_numbers = #tpu.dot_dimension_numbers<[1], [0], [0], [1], [0, 0, 1, 1], [], []>} : vector<4x8xbf16>, vector<8x288xbf16>, vector<4x288xf32> -> vector<4x288xf32>
    %196 = arith.addf %191, %195 : vector<4x288xf32>
    %c1_195 = arith.constant 1 : index
    %c0_196 = arith.constant 0 : index
    %c0_197 = arith.constant 0 : index
    %197 = vector.load %arg8[%c1_195, %c0_196, %c0_197] : memref<9x4x8xbf16, #tpu.memory_space<vmem>>, vector<1x4x8xbf16>
    %198 = vector.shape_cast %197 : vector<1x4x8xbf16> to vector<4x8xbf16>
    %c0_198 = arith.constant 0 : index
    %c1_199 = arith.constant 1 : index
    %199 = vector.load %arg12[%c0_198, %c1_199] : memref<12x384xbf16, #tpu.memory_space<vmem>>, vector<8x288xbf16>
    %cst_200 = arith.constant dense<0.000000e+00> : vector<4x288xf32>
    %200 = tpu.matmul %198, %199, %cst_200 {dimension_numbers = #tpu.dot_dimension_numbers<[1], [0], [0], [1], [0, 0, 1, 1], [], []>} : vector<4x8xbf16>, vector<8x288xbf16>, vector<4x288xf32> -> vector<4x288xf32>
    %201 = arith.addf %196, %200 : vector<4x288xf32>
    %c2_201 = arith.constant 2 : index
    %c0_202 = arith.constant 0 : index
    %c0_203 = arith.constant 0 : index
    %202 = vector.load %arg8[%c2_201, %c0_202, %c0_203] : memref<9x4x8xbf16, #tpu.memory_space<vmem>>, vector<1x4x8xbf16>
    %203 = vector.shape_cast %202 : vector<1x4x8xbf16> to vector<4x8xbf16>
    %c0_204 = arith.constant 0 : index
    %c2_205 = arith.constant 2 : index
    %204 = vector.load %arg12[%c0_204, %c2_205] : memref<12x384xbf16, #tpu.memory_space<vmem>>, vector<8x288xbf16>
    %cst_206 = arith.constant dense<0.000000e+00> : vector<4x288xf32>
    %205 = tpu.matmul %203, %204, %cst_206 {dimension_numbers = #tpu.dot_dimension_numbers<[1], [0], [0], [1], [0, 0, 1, 1], [], []>} : vector<4x8xbf16>, vector<8x288xbf16>, vector<4x288xf32> -> vector<4x288xf32>
    %206 = arith.addf %201, %205 : vector<4x288xf32>
    %c3_207 = arith.constant 3 : index
    %c0_208 = arith.constant 0 : index
    %c0_209 = arith.constant 0 : index
    %207 = vector.load %arg8[%c3_207, %c0_208, %c0_209] : memref<9x4x8xbf16, #tpu.memory_space<vmem>>, vector<1x4x8xbf16>
    %208 = vector.shape_cast %207 : vector<1x4x8xbf16> to vector<4x8xbf16>
    %c0_210 = arith.constant 0 : index
    %c18_211 = arith.constant 18 : index
    %209 = vector.load %arg12[%c0_210, %c18_211] : memref<12x384xbf16, #tpu.memory_space<vmem>>, vector<8x288xbf16>
    %cst_212 = arith.constant dense<0.000000e+00> : vector<4x288xf32>
    %210 = tpu.matmul %208, %209, %cst_212 {dimension_numbers = #tpu.dot_dimension_numbers<[1], [0], [0], [1], [0, 0, 1, 1], [], []>} : vector<4x8xbf16>, vector<8x288xbf16>, vector<4x288xf32> -> vector<4x288xf32>
    %211 = arith.addf %206, %210 : vector<4x288xf32>
    %c4_213 = arith.constant 4 : index
    %c0_214 = arith.constant 0 : index
    %c0_215 = arith.constant 0 : index
    %212 = vector.load %arg8[%c4_213, %c0_214, %c0_215] : memref<9x4x8xbf16, #tpu.memory_space<vmem>>, vector<1x4x8xbf16>
    %213 = vector.shape_cast %212 : vector<1x4x8xbf16> to vector<4x8xbf16>
    %c0_216 = arith.constant 0 : index
    %c19_217 = arith.constant 19 : index
    %214 = vector.load %arg12[%c0_216, %c19_217] : memref<12x384xbf16, #tpu.memory_space<vmem>>, vector<8x288xbf16>
    %cst_218 = arith.constant dense<0.000000e+00> : vector<4x288xf32>
    %215 = tpu.matmul %213, %214, %cst_218 {dimension_numbers = #tpu.dot_dimension_numbers<[1], [0], [0], [1], [0, 0, 1, 1], [], []>} : vector<4x8xbf16>, vector<8x288xbf16>, vector<4x288xf32> -> vector<4x288xf32>
    %216 = arith.addf %211, %215 : vector<4x288xf32>
    %c5_219 = arith.constant 5 : index
    %c0_220 = arith.constant 0 : index
    %c0_221 = arith.constant 0 : index
    %217 = vector.load %arg8[%c5_219, %c0_220, %c0_221] : memref<9x4x8xbf16, #tpu.memory_space<vmem>>, vector<1x4x8xbf16>
    %218 = vector.shape_cast %217 : vector<1x4x8xbf16> to vector<4x8xbf16>
    %c0_222 = arith.constant 0 : index
    %c20_223 = arith.constant 20 : index
    %219 = vector.load %arg12[%c0_222, %c20_223] : memref<12x384xbf16, #tpu.memory_space<vmem>>, vector<8x288xbf16>
    %cst_224 = arith.constant dense<0.000000e+00> : vector<4x288xf32>
    %220 = tpu.matmul %218, %219, %cst_224 {dimension_numbers = #tpu.dot_dimension_numbers<[1], [0], [0], [1], [0, 0, 1, 1], [], []>} : vector<4x8xbf16>, vector<8x288xbf16>, vector<4x288xf32> -> vector<4x288xf32>
    %221 = arith.addf %216, %220 : vector<4x288xf32>
    %c6_225 = arith.constant 6 : index
    %c0_226 = arith.constant 0 : index
    %c0_227 = arith.constant 0 : index
    %222 = vector.load %arg8[%c6_225, %c0_226, %c0_227] : memref<9x4x8xbf16, #tpu.memory_space<vmem>>, vector<1x4x8xbf16>
    %223 = vector.shape_cast %222 : vector<1x4x8xbf16> to vector<4x8xbf16>
    %c0_228 = arith.constant 0 : index
    %c36_229 = arith.constant 36 : index
    %224 = vector.load %arg12[%c0_228, %c36_229] : memref<12x384xbf16, #tpu.memory_space<vmem>>, vector<8x288xbf16>
    %cst_230 = arith.constant dense<0.000000e+00> : vector<4x288xf32>
    %225 = tpu.matmul %223, %224, %cst_230 {dimension_numbers = #tpu.dot_dimension_numbers<[1], [0], [0], [1], [0, 0, 1, 1], [], []>} : vector<4x8xbf16>, vector<8x288xbf16>, vector<4x288xf32> -> vector<4x288xf32>
    %226 = arith.addf %221, %225 : vector<4x288xf32>
    %c7_231 = arith.constant 7 : index
    %c0_232 = arith.constant 0 : index
    %c0_233 = arith.constant 0 : index
    %227 = vector.load %arg8[%c7_231, %c0_232, %c0_233] : memref<9x4x8xbf16, #tpu.memory_space<vmem>>, vector<1x4x8xbf16>
    %228 = vector.shape_cast %227 : vector<1x4x8xbf16> to vector<4x8xbf16>
    %c0_234 = arith.constant 0 : index
    %c37_235 = arith.constant 37 : index
    %229 = vector.load %arg12[%c0_234, %c37_235] : memref<12x384xbf16, #tpu.memory_space<vmem>>, vector<8x288xbf16>
    %cst_236 = arith.constant dense<0.000000e+00> : vector<4x288xf32>
    %230 = tpu.matmul %228, %229, %cst_236 {dimension_numbers = #tpu.dot_dimension_numbers<[1], [0], [0], [1], [0, 0, 1, 1], [], []>} : vector<4x8xbf16>, vector<8x288xbf16>, vector<4x288xf32> -> vector<4x288xf32>
    %231 = arith.addf %226, %230 : vector<4x288xf32>
    %c8_237 = arith.constant 8 : index
    %c0_238 = arith.constant 0 : index
    %c0_239 = arith.constant 0 : index
    %232 = vector.load %arg8[%c8_237, %c0_238, %c0_239] : memref<9x4x8xbf16, #tpu.memory_space<vmem>>, vector<1x4x8xbf16>
    %233 = vector.shape_cast %232 : vector<1x4x8xbf16> to vector<4x8xbf16>
    %c0_240 = arith.constant 0 : index
    %c38_241 = arith.constant 38 : index
    %234 = vector.load %arg12[%c0_240, %c38_241] : memref<12x384xbf16, #tpu.memory_space<vmem>>, vector<8x288xbf16>
    %cst_242 = arith.constant dense<0.000000e+00> : vector<4x288xf32>
    %235 = tpu.matmul %233, %234, %cst_242 {dimension_numbers = #tpu.dot_dimension_numbers<[1], [0], [0], [1], [0, 0, 1, 1], [], []>} : vector<4x8xbf16>, vector<8x288xbf16>, vector<4x288xf32> -> vector<4x288xf32>
    %236 = arith.addf %231, %235 : vector<4x288xf32>
    %c3_243 = arith.constant 3 : index
    %237 = memref.load %arg1[%c3_243] : memref<4xf32, #tpu.memory_space<smem>>
    %cst_244 = arith.constant 0.000000e+00 : f32
    %238 = vector.broadcast %cst_244 : f32 to vector<4x288xf32>
    %239 = arith.cmpf ogt, %236, %238 : vector<4x288xf32>
    %240 = vector.broadcast %237 : f32 to vector<4x288xf32>
    %241 = arith.mulf %240, %236 : vector<4x288xf32>
    %242 = arith.select %239, %236, %241 : vector<4x288xi1>, vector<4x288xf32>
    %243 = arith.mulf %242, %2 : vector<4x288xf32>
    %244 = arith.truncf %243 : vector<4x288xf32> to vector<4x288xbf16>
    %c8_245 = arith.constant 8 : index
    %c19_246 = arith.constant 19 : index
    %245 = vector.load %arg12[%c8_245, %c19_246] : memref<12x384xbf16, #tpu.memory_space<vmem>>, vector<4x288xbf16>
    tpu.vector_store %arg12[%c8_245, %c19_246], %244 {strides = array<i32>} : memref<12x384xbf16, #tpu.memory_space<vmem>>, vector<4x288xbf16>,
    %c1_247 = arith.constant 1 : index
    %c0_248 = arith.constant 0 : index
    %c0_249 = arith.constant 0 : index
    %246 = vector.load %arg9[%c1_247, %c0_248, %c0_249] : memref<2x4x12xbf16, #tpu.memory_space<vmem>>, vector<1x4x12xbf16>
    %247 = vector.shape_cast %246 : vector<1x4x12xbf16> to vector<4x12xbf16>
    %c0_250 = arith.constant 0 : index
    %c0_251 = arith.constant 0 : index
    %248 = vector.load %arg12[%c0_250, %c0_251] : memref<12x384xbf16, #tpu.memory_space<vmem>>, vector<12x384xbf16>
    %cst_252 = arith.constant dense<0.000000e+00> : vector<4x384xf32>
    %249 = tpu.matmul %247, %248, %cst_252 {dimension_numbers = #tpu.dot_dimension_numbers<[1], [0], [0], [1], [0, 0, 1, 1], [], []>} : vector<4x12xbf16>, vector<12x384xbf16>, vector<4x384xf32> -> vector<4x384xf32>
    %250 = arith.extf %128 : vector<4x384xbf16> to vector<4x384xf32>
    %251 = arith.addf %249, %250 : vector<4x384xf32>
    %252 = arith.truncf %251 : vector<4x384xf32> to vector<4x384xbf16>
    %c1_253 = arith.constant 1 : index
    %c0_254 = arith.constant 0 : index
    %c0_255 = arith.constant 0 : index
    %253 = vector.load %arg10[%c1_253, %c0_254, %c0_255] : memref<2x4x4xbf16, #tpu.memory_space<vmem>>, vector<1x4x4xbf16>
    %254 = vector.shape_cast %253 : vector<1x4x4xbf16> to vector<4x4xbf16>
    %cst_256 = arith.constant dense<0.000000e+00> : vector<4x384xf32>
    %255 = tpu.matmul %254, %252, %cst_256 {dimension_numbers = #tpu.dot_dimension_numbers<[1], [0], [0], [1], [0, 0, 1, 1], [], []>} : vector<4x4xbf16>, vector<4x384xbf16>, vector<4x384xf32> -> vector<4x384xf32>
    %256 = arith.addf %132, %255 : vector<4x384xf32>
    %c0_257 = arith.constant 0 : index
    %c0_258 = arith.constant 0 : index
    %c0_259 = arith.constant 0 : index
    %257 = vector.load %arg11[%c0_257, %c0_258, %c0_259] : memref<1x4x384xf32, #tpu.memory_space<vmem>>, vector<1x4x384xf32>
    %258 = vector.shape_cast %257 : vector<1x4x384xf32> to vector<4x384xf32>
    %259 = vector.shape_cast %256 : vector<4x384xf32> to vector<1x4x384xf32>
    tpu.vector_store %arg11[%c0_257, %c0_258, %c0_259], %259 {strides = array<i32>} : memref<1x4x384xf32, #tpu.memory_space<vmem>>, vector<1x4x384xf32>,
    return
  }
  func.func @transform_0(%arg0: i32) -> i32 {
    %c0_i32 = arith.constant 0 : i32
    %c0_i32_0 = arith.constant 0 : i32
    return %c0_i32 : i32
  }
  func.func @transform_1(%arg0: i32) -> (i32, i32) {
    %c0_i32 = arith.constant 0 : i32
    %c0_i32_0 = arith.constant 0 : i32
    %c0_i32_1 = arith.constant 0 : i32
    return %c0_i32, %c0_i32_0 : i32, i32
  }
  func.func @transform_2(%arg0: i32) -> (i32, i32) {
    %c0_i32 = arith.constant 0 : i32
    %c0_i32_0 = arith.constant 0 : i32
    %c0_i32_1 = arith.constant 0 : i32
    return %c0_i32, %c0_i32_0 : i32, i32
  }
  func.func @transform_3(%arg0: i32) -> (i32, i32, i32) {
    %c0_i32 = arith.constant 0 : i32
    %c0_i32_0 = arith.constant 0 : i32
    %c0_i32_1 = arith.constant 0 : i32
    return %arg0, %c0_i32, %c0_i32_0 : i32, i32, i32
  }
  func.func @transform_4(%arg0: i32) -> (i32, i32, i32) {
    %c0_i32 = arith.constant 0 : i32
    %c0_i32_0 = arith.constant 0 : i32
    %c0_i32_1 = arith.constant 0 : i32
    %c0_i32_2 = arith.constant 0 : i32
    return %c0_i32, %c0_i32_0, %c0_i32_1 : i32, i32, i32
  }
  func.func @transform_5(%arg0: i32) -> (i32, i32, i32) {
    %c0_i32 = arith.constant 0 : i32
    %c0_i32_0 = arith.constant 0 : i32
    %c0_i32_1 = arith.constant 0 : i32
    %c0_i32_2 = arith.constant 0 : i32
    return %c0_i32, %c0_i32_0, %c0_i32_1 : i32, i32, i32
  }
  func.func @transform_6(%arg0: i32) -> (i32, i32, i32) {
    %c0_i32 = arith.constant 0 : i32
    %c0_i32_0 = arith.constant 0 : i32
    %c0_i32_1 = arith.constant 0 : i32
    %c0_i32_2 = arith.constant 0 : i32
    return %c0_i32, %c0_i32_0, %c0_i32_1 : i32, i32, i32
  }
  func.func @transform_7(%arg0: i32) -> (i32, i32, i32) {
    %c0_i32 = arith.constant 0 : i32
    %c0_i32_0 = arith.constant 0 : i32
    %c0_i32_1 = arith.constant 0 : i32
    %c0_i32_2 = arith.constant 0 : i32
    return %c0_i32, %c0_i32_0, %c0_i32_1 : i32, i32, i32
  }
  func.func @transform_8(%arg0: i32) -> (i32, i32, i32) {
    %c0_i32 = arith.constant 0 : i32
    %c0_i32_0 = arith.constant 0 : i32
    %c0_i32_1 = arith.constant 0 : i32
    %c0_i32_2 = arith.constant 0 : i32
    return %c0_i32, %c0_i32_0, %c0_i32_1 : i32, i32, i32
  }
  func.func @transform_9(%arg0: i32) -> (i32, i32, i32) {
    %c0_i32 = arith.constant 0 : i32
    %c0_i32_0 = arith.constant 0 : i32
    %c0_i32_1 = arith.constant 0 : i32
    %c0_i32_2 = arith.constant 0 : i32
    return %c0_i32, %c0_i32_0, %c0_i32_1 : i32, i32, i32
  }
  func.func @transform_10(%arg0: i32) -> (i32, i32, i32) {
    %c0_i32 = arith.constant 0 : i32
    %c0_i32_0 = arith.constant 0 : i32
    %c0_i32_1 = arith.constant 0 : i32
    return %arg0, %c0_i32, %c0_i32_0 : i32, i32, i32
  }
}

</mosaic_0001>

<llo_original>
// kernel: grdb_forward.1
$region0: #{grdb_forward.1}
  #allocation0 [shape = 'u32[]', space=smem, size = 0x4, offset = 0x4, fixed_abs, tag = 'smem constant byte address 0x4 - core index']
  #allocation1 [shape = 'u32[72,128]{1,0:T(1,128)}', space=vmem, size = 0x9000, scoped, tag = 'internal scratch']
  #allocation2 [shape = 'bf16[12,384]{1,0:T(8,128)(2,1)}', space=vmem, size = 0x3000, scoped, tag = 'scratch operand']
  %s0 = inlined_call_operand.vmem [shape: f32[4], index: 0, kind: input, shape index: {}]
  %s1 = inlined_call_operand.vmem [shape: f32[1,288], index: 1, kind: input, shape index: {}]
  %s2 = inlined_call_operand.vmem [shape: f32[4,1], index: 2, kind: input, shape index: {}]
  %s3 = inlined_call_operand.vmem [shape: bf16[2,4,384], index: 3, kind: input, shape index: {}]
  %s4 = inlined_call_operand.vmem [shape: bf16[9,4,4], index: 4, kind: input, shape index: {}]
  %s5 = inlined_call_operand.vmem [shape: bf16[9,4,8], index: 5, kind: input, shape index: {}]
  %s6 = inlined_call_operand.vmem [shape: bf16[9,4,4], index: 6, kind: input, shape index: {}]
  %s7 = inlined_call_operand.vmem [shape: bf16[9,4,8], index: 7, kind: input, shape index: {}]
  %s8 = inlined_call_operand.vmem [shape: bf16[2,4,12], index: 8, kind: input, shape index: {}]
  %s9 = inlined_call_operand.vmem [shape: bf16[2,4,4], index: 9, kind: input, shape index: {}]
  %s10 = inlined_call_operand.vmem [shape: f32[2,4,384], index: 10, kind: output, shape index: {}]
  %s11 = sld [smem:[#allocation0]]
  $region77: #{grdb_forward.1} parent=0
    _
  %s13 = ssub.s32 1, %s11
  %s14 = scalar_select 0, %s13, %s11
  $region1: #{grdb_forward.1} parent=0
    #allocation3 [shape = 'u8[512]{0}', space=smem, size = 0x200, scoped, tag = 'input window, operand 0, single buffered']
    #allocation4 [shape = 's32[2]{0}', space=sflag, size = 0x8, scoped, tag = 'scoped memory for grdb_forward.1']
    %15 = vsyncpa [#allocation4], 0
    loop: start=0, step=1, limit=4
    $region2: #{grdb_forward.1} parent=1 // loop_pre_header
      _
    $region3: #{grdb_forward.1} parent=1 // loop_header
      %s17 = sphi 0, %s21
      %p18 = scmp.ge.s32.totalorder %s17, 4
      %s25 = sphi 0, %s25
      %s27 = sphi 0, %s25
      %s28 = sphi 0, %s27
      %s42 = sphi 0, %s28
      %s46 = sphi 0, %s46
      %s48 = sphi 0, %s46
      %s49 = sphi 0, %s48
      %s63 = sphi 0, %s49
      %s67 = sphi 0, %s67
      %s69 = sphi 0, %s67
      %s70 = sphi 0, %s69
      %s84 = sphi 0, %s70
      %s90 = sphi 0, %s92
      %s93 = sphi 0, %s90
      %s94 = sphi 0, %s93
      %s110 = sphi 0, %s94
      %s114 = sphi 0, %s114
      %s116 = sphi 0, %s114
      %s117 = sphi 0, %s116
      %s131 = sphi 0, %s117
      %s135 = sphi 0, %s135
      %s137 = sphi 0, %s135
      %s138 = sphi 0, %s137
      %s152 = sphi 0, %s138
      %s156 = sphi 0, %s156
      %s158 = sphi 0, %s156
      %s159 = sphi 0, %s158
      %s173 = sphi 0, %s159
      %s177 = sphi 0, %s177
      %s179 = sphi 0, %s177
      %s180 = sphi 0, %s179
      %s194 = sphi 0, %s180
      %s198 = sphi 0, %s198
      %s200 = sphi 0, %s198
      %s201 = sphi 0, %s200
      %s215 = sphi 0, %s201
      %s219 = sphi 0, %s219
      %s221 = sphi 0, %s219
      %s222 = sphi 0, %s221
      %s236 = sphi 0, %s222
      %s242 = sphi 0, %s244
      %s245 = sphi 0, %s242
      %s246 = sphi 0, %s245
      %s262 = sphi 0, %s246
    $region4: #{grdb_forward.1} parent=1 // loop_header_branch
      %20 = sbr.rel (%p18) target = $region8
    $region5: #{grdb_forward.1} parent=1 // loop_body
      %s22 = ssub.s32 %s17, 1
      %s23 = ssub.s32 %s17, 2
      %s24 = sadd.s32 %s17, 1
      %s26 = sadd.s32 %s25, 1
      %p29 = scmp.eq.s32.totalorder %s17, 1
      %p30 = scmp.ne.s32.totalorder %s25, %s27
      %p31 = scmp.eq.s32.totalorder %s17, 0
      %p32 = por %p30, %p31
      %p33 = scmp.ne.s32.totalorder %s25, %s27
      %p34 = scmp.eq.s32.totalorder %s22, 1
      %p35 = por %p33, %p34
      %p36 = scmp.ne.s32.totalorder %s27, %s28
      %p37 = scmp.eq.s32.totalorder %s22, 0
      %p38 = por %p36, %p37
      %p39 = scmp.ne.s32.totalorder %s27, %s28
      %p40 = scmp.eq.s32.totalorder %s23, 1
      %p41 = por %p39, %p40
      %p43 = scmp.ne.s32.totalorder %s28, %s42
      %p44 = scmp.eq.s32.totalorder %s23, 0
      %p45 = por %p43, %p44
      %s47 = sadd.s32 %s46, 1
      %p50 = scmp.eq.s32.totalorder %s17, 1
      %p51 = scmp.ne.s32.totalorder %s46, %s48
      %p52 = scmp.eq.s32.totalorder %s17, 0
      %p53 = por %p51, %p52
      %p54 = scmp.ne.s32.totalorder %s46, %s48
      %p55 = scmp.eq.s32.totalorder %s22, 1
      %p56 = por %p54, %p55
      %p57 = scmp.ne.s32.totalorder %s48, %s49
      %p58 = scmp.eq.s32.totalorder %s22, 0
      %p59 = por %p57, %p58
      %p60 = scmp.ne.s32.totalorder %s48, %s49
      %p61 = scmp.eq.s32.totalorder %s23, 1
      %p62 = por %p60, %p61
      %p64 = scmp.ne.s32.totalorder %s49, %s63
      %p65 = scmp.eq.s32.totalorder %s23, 0
      %p66 = por %p64, %p65
      %s68 = sadd.s32 %s67, 1
      %p71 = scmp.eq.s32.totalorder %s17, 1
      %p72 = scmp.ne.s32.totalorder %s67, %s69
      %p73 = scmp.eq.s32.totalorder %s17, 0
      %p74 = por %p72, %p73
      %p75 = scmp.ne.s32.totalorder %s67, %s69
      %p76 = scmp.eq.s32.totalorder %s22, 1
      %p77 = por %p75, %p76
      %p78 = scmp.ne.s32.totalorder %s69, %s70
      %p79 = scmp.eq.s32.totalorder %s22, 0
      %p80 = por %p78, %p79
      %p81 = scmp.ne.s32.totalorder %s69, %s70
      %p82 = scmp.eq.s32.totalorder %s23, 1
      %p83 = por %p81, %p82
      %p85 = scmp.ne.s32.totalorder %s70, %s84
      %p86 = scmp.eq.s32.totalorder %s23, 0
      %p87 = por %p85, %p86
      %s88 = ssub.s32 %s17, %s24
      %p89 = scmp.eq.s32.totalorder %s88, 0
      %s91 = sadd.s32 %s90, 1
      %s92 = scalar_select %p89, %s90, %s91
      %p95 = pneg %p89
      %p96 = scmp.eq.s32.totalorder %s17, 1
      %p97 = por %p95, %p96
      %p98 = scmp.ne.s32.totalorder %s90, %s93
      %p99 = scmp.eq.s32.totalorder %s17, 0
      %p100 = por %p98, %p99
      %p101 = scmp.ne.s32.totalorder %s90, %s93
      %p102 = scmp.eq.s32.totalorder %s22, 1
      %p103 = por %p101, %p102
      %p104 = scmp.ne.s32.totalorder %s93, %s94
      %p105 = scmp.eq.s32.totalorder %s22, 0
      %p106 = por %p104, %p105
      %p107 = scmp.ne.s32.totalorder %s93, %s94
      %p108 = scmp.eq.s32.totalorder %s23, 1
      %p109 = por %p107, %p108
      %p111 = scmp.ne.s32.totalorder %s94, %s110
      %p112 = scmp.eq.s32.totalorder %s23, 0
      %p113 = por %p111, %p112
      %s115 = sadd.s32 %s114, 1
      %p118 = scmp.eq.s32.totalorder %s17, 1
      %p119 = scmp.ne.s32.totalorder %s114, %s116
      %p120 = scmp.eq.s32.totalorder %s17, 0
      %p121 = por %p119, %p120
      %p122 = scmp.ne.s32.totalorder %s114, %s116
      %p123 = scmp.eq.s32.totalorder %s22, 1
      %p124 = por %p122, %p123
      %p125 = scmp.ne.s32.totalorder %s116, %s117
      %p126 = scmp.eq.s32.totalorder %s22, 0
      %p127 = por %p125, %p126
      %p128 = scmp.ne.s32.totalorder %s116, %s117
      %p129 = scmp.eq.s32.totalorder %s23, 1
      %p130 = por %p128, %p129
      %p132 = scmp.ne.s32.totalorder %s117, %s131
      %p133 = scmp.eq.s32.totalorder %s23, 0
      %p134 = por %p132, %p133
      %s136 = sadd.s32 %s135, 1
      %p139 = scmp.eq.s32.totalorder %s17, 1
      %p140 = scmp.ne.s32.totalorder %s135, %s137
      %p141 = scmp.eq.s32.totalorder %s17, 0
      %p142 = por %p140, %p141
      %p143 = scmp.ne.s32.totalorder %s135, %s137
      %p144 = scmp.eq.s32.totalorder %s22, 1
      %p145 = por %p143, %p144
      %p146 = scmp.ne.s32.totalorder %s137, %s138
      %p147 = scmp.eq.s32.totalorder %s22, 0
      %p148 = por %p146, %p147
      %p149 = scmp.ne.s32.totalorder %s137, %s138
      %p150 = scmp.eq.s32.totalorder %s23, 1
      %p151 = por %p149, %p150
      %p153 = scmp.ne.s32.totalorder %s138, %s152
      %p154 = scmp.eq.s32.totalorder %s23, 0
      %p155 = por %p153, %p154
      %s157 = sadd.s32 %s156, 1
      %p160 = scmp.eq.s32.totalorder %s17, 1
      %p161 = scmp.ne.s32.totalorder %s156, %s158
      %p162 = scmp.eq.s32.totalorder %s17, 0
      %p163 = por %p161, %p162
      %p164 = scmp.ne.s32.totalorder %s156, %s158
      %p165 = scmp.eq.s32.totalorder %s22, 1
      %p166 = por %p164, %p165
      %p167 = scmp.ne.s32.totalorder %s158, %s159
      %p168 = scmp.eq.s32.totalorder %s22, 0
      %p169 = por %p167, %p168
      %p170 = scmp.ne.s32.totalorder %s158, %s159
      %p171 = scmp.eq.s32.totalorder %s23, 1
      %p172 = por %p170, %p171
      %p174 = scmp.ne.s32.totalorder %s159, %s173
      %p175 = scmp.eq.s32.totalorder %s23, 0
      %p176 = por %p174, %p175
      %s178 = sadd.s32 %s177, 1
      %p181 = scmp.eq.s32.totalorder %s17, 1
      %p182 = scmp.ne.s32.totalorder %s177, %s179
      %p183 = scmp.eq.s32.totalorder %s17, 0
      %p184 = por %p182, %p183
      %p185 = scmp.ne.s32.totalorder %s177, %s179
      %p186 = scmp.eq.s32.totalorder %s22, 1
      %p187 = por %p185, %p186
      %p188 = scmp.ne.s32.totalorder %s179, %s180
      %p189 = scmp.eq.s32.totalorder %s22, 0
      %p190 = por %p188, %p189
      %p191 = scmp.ne.s32.totalorder %s179, %s180
      %p192 = scmp.eq.s32.totalorder %s23, 1
      %p193 = por %p191, %p192
      %p195 = scmp.ne.s32.totalorder %s180, %s194
      %p196 = scmp.eq.s32.totalorder %s23, 0
      %p197 = por %p195, %p196
      %s199 = sadd.s32 %s198, 1
      %p202 = scmp.eq.s32.totalorder %s17, 1
      %p203 = scmp.ne.s32.totalorder %s198, %s200
      %p204 = scmp.eq.s32.totalorder %s17, 0
      %p205 = por %p203, %p204
      %p206 = scmp.ne.s32.totalorder %s198, %s200
      %p207 = scmp.eq.s32.totalorder %s22, 1
      %p208 = por %p206, %p207
      %p209 = scmp.ne.s32.totalorder %s200, %s201
      %p210 = scmp.eq.s32.totalorder %s22, 0
      %p211 = por %p209, %p210
      %p212 = scmp.ne.s32.totalorder %s200, %s201
      %p213 = scmp.eq.s32.totalorder %s23, 1
      %p214 = por %p212, %p213
      %p216 = scmp.ne.s32.totalorder %s201, %s215
      %p217 = scmp.eq.s32.totalorder %s23, 0
      %p218 = por %p216, %p217
      %s220 = sadd.s32 %s219, 1
      %p223 = scmp.eq.s32.totalorder %s17, 1
      %p224 = scmp.ne.s32.totalorder %s219, %s221
      %p225 = scmp.eq.s32.totalorder %s17, 0
      %p226 = por %p224, %p225
      %p227 = scmp.ne.s32.totalorder %s219, %s221
      %p228 = scmp.eq.s32.totalorder %s22, 1
      %p229 = por %p227, %p228
      %p230 = scmp.ne.s32.totalorder %s221, %s222
      %p231 = scmp.eq.s32.totalorder %s22, 0
      %p232 = por %p230, %p231
      %p233 = scmp.ne.s32.totalorder %s221, %s222
      %p234 = scmp.eq.s32.totalorder %s23, 1
      %p235 = por %p233, %p234
      %p237 = scmp.ne.s32.totalorder %s222, %s236
      %p238 = scmp.eq.s32.totalorder %s23, 0
      %p239 = por %p237, %p238
      %s240 = ssub.s32 %s17, %s24
      %p241 = scmp.eq.s32.totalorder %s240, 0
      %s243 = sadd.s32 %s242, 1
      %s244 = scalar_select %p241, %s242, %s243
      %p247 = pneg %p241
      %p248 = scmp.eq.s32.totalorder %s17, 1
      %p249 = por %p247, %p248
      %p250 = scmp.ne.s32.totalorder %s242, %s245
      %p251 = scmp.eq.s32.totalorder %s17, 0
      %p252 = por %p250, %p251
      %p253 = scmp.ne.s32.totalorder %s242, %s245
      %p254 = scmp.eq.s32.totalorder %s22, 1
      %p255 = por %p253, %p254
      %p256 = scmp.ne.s32.totalorder %s245, %s246
      %p257 = scmp.eq.s32.totalorder %s22, 0
      %p258 = por %p256, %p257
      %p259 = scmp.ne.s32.totalorder %s245, %s246
      %p260 = scmp.eq.s32.totalorder %s23, 1
      %p261 = por %p259, %p260
      %p263 = scmp.ne.s32.totalorder %s246, %s262
      %p264 = scmp.eq.s32.totalorder %s23, 0
      %p265 = por %p263, %p264
      %p266 = scmp.le.s32.totalorder 1, %s17
      %p267 = scmp.lt.s32.totalorder %s17, 3
      %p268 = pnand %p266, %p267
      %p269 = pneg %p268
      // Predicated region
      $region9: #{grdb_forward.1} parent=5 // pred_check
        _
      $region10: #{grdb_forward.1} parent=5 // pred_check_branch
        %271 = sbr.rel (%p268) target = $region12
      $region11: #{grdb_forward.1} parent=5 // pred_region
        %s272 = ssub.s32 %s17, 1
        // Predicated region
        $region13: #{grdb_forward.1} parent=11 // pred_check
          %p273 = pneg %p38
        $region14: #{grdb_forward.1} parent=11 // pred_check_branch
          %275 = sbr.rel (%p273) target = $region16
        $region15: #{grdb_forward.1} parent=11 // pred_region
          %277 = vsyncadd [#allocation4], 0
          %s279 = sshll.u32 %s0, 4
          %s280 = int_to_ptr.vmem [resolvable:$true] %s279
          %282 = dma.vmem_to_smem %s280, 16, [#allocation3], [#allocation4]
        $region16: #{grdb_forward.1} parent=11 // pred_fallthru
          _
        // Predicated region
        $region17: #{grdb_forward.1} parent=11 // pred_check
          %p283 = pneg %p59
        $region18: #{grdb_forward.1} parent=11 // pred_check_branch
          %285 = sbr.rel (%p283) target = $region20
        $region19: #{grdb_forward.1} parent=11 // pred_region
          _
        $region20: #{grdb_forward.1} parent=11 // pred_fallthru
          _
        // Predicated region
        $region21: #{grdb_forward.1} parent=11 // pred_check
          %p286 = pneg %p80
        $region22: #{grdb_forward.1} parent=11 // pred_check_branch
          %288 = sbr.rel (%p286) target = $region24
        $region23: #{grdb_forward.1} parent=11 // pred_region
          _
        $region24: #{grdb_forward.1} parent=11 // pred_fallthru
          _
        // Predicated region
        $region25: #{grdb_forward.1} parent=11 // pred_check
          %p289 = pneg %p127
        $region26: #{grdb_forward.1} parent=11 // pred_check_branch
          %291 = sbr.rel (%p289) target = $region28
        $region27: #{grdb_forward.1} parent=11 // pred_region
          _
        $region28: #{grdb_forward.1} parent=11 // pred_fallthru
          _
        // Predicated region
        $region29: #{grdb_forward.1} parent=11 // pred_check
          %p292 = pneg %p148
        $region30: #{grdb_forward.1} parent=11 // pred_check_branch
          %294 = sbr.rel (%p292) target = $region32
        $region31: #{grdb_forward.1} parent=11 // pred_region
          _
        $region32: #{grdb_forward.1} parent=11 // pred_fallthru
          _
        // Predicated region
        $region33: #{grdb_forward.1} parent=11 // pred_check
          %p295 = pneg %p169
        $region34: #{grdb_forward.1} parent=11 // pred_check_branch
          %297 = sbr.rel (%p295) target = $region36
        $region35: #{grdb_forward.1} parent=11 // pred_region
          _
        $region36: #{grdb_forward.1} parent=11 // pred_fallthru
          _
        // Predicated region
        $region37: #{grdb_forward.1} parent=11 // pred_check
          %p298 = pneg %p190
        $region38: #{grdb_forward.1} parent=11 // pred_check_branch
          %300 = sbr.rel (%p298) target = $region40
        $region39: #{grdb_forward.1} parent=11 // pred_region
          _
        $region40: #{grdb_forward.1} parent=11 // pred_fallthru
          _
        // Predicated region
        $region41: #{grdb_forward.1} parent=11 // pred_check
          %p301 = pneg %p211
        $region42: #{grdb_forward.1} parent=11 // pred_check_branch
          %303 = sbr.rel (%p301) target = $region44
        $region43: #{grdb_forward.1} parent=11 // pred_region
          _
        $region44: #{grdb_forward.1} parent=11 // pred_fallthru
          _
        // Predicated region
        $region45: #{grdb_forward.1} parent=11 // pred_check
          %p304 = pneg %p232
        $region46: #{grdb_forward.1} parent=11 // pred_check_branch
          %306 = sbr.rel (%p304) target = $region48
        $region47: #{grdb_forward.1} parent=11 // pred_region
          _
        $region48: #{grdb_forward.1} parent=11 // pred_fallthru
          _
      $region12: #{grdb_forward.1} parent=5 // pred_fallthru
        _
      %p307 = scmp.lt.s32.totalorder %s17, 2
      // Predicated region
      $region49: #{grdb_forward.1} parent=5 // pred_check
        %p308 = pneg %p307
      $region50: #{grdb_forward.1} parent=5 // pred_check_branch
        %310 = sbr.rel (%p308) target = $region52
      $region51: #{grdb_forward.1} parent=5 // pred_region
        // Predicated region
        $region53: #{grdb_forward.1} parent=51 // pred_check
          %p311 = pneg %p100
        $region54: #{grdb_forward.1} parent=51 // pred_check_branch
          %313 = sbr.rel (%p311) target = $region56
        $region55: #{grdb_forward.1} parent=51 // pred_region
          %p314 = scmp.lt.s32.totalorder %s17, 1
          %s315 = scalar_select %p314, %s17, 1
          %s316 = smul.addr %s315, 3
          %s317 = smul.addr %s316, 2
          %s318 = scalar_lea.vmem %s3, %s317
        $region56: #{grdb_forward.1} parent=51 // pred_fallthru
          _
      $region52: #{grdb_forward.1} parent=5 // pred_fallthru
        _
      %p319 = scmp.le.s32.totalorder 1, %s17
      %p320 = scmp.lt.s32.totalorder %s17, 3
      %p321 = pnand %p319, %p320
      %p322 = pneg %p321
      // Predicated region
      $region57: #{grdb_forward.1} parent=5 // pred_check
        _
      $region58: #{grdb_forward.1} parent=5 // pred_check_branch
        %324 = sbr.rel (%p321) target = $region60
      $region59: #{grdb_forward.1} parent=5 // pred_region
        %s325 = ssub.s32 %s17, 1
        // Predicated region
        $region61: #{grdb_forward.1} parent=59 // pred_check
          %p326 = pneg %p38
        $region62: #{grdb_forward.1} parent=59 // pred_check_branch
          %328 = sbr.rel (%p326) target = $region64
        $region63: #{grdb_forward.1} parent=59 // pred_region
          %330 = dma.done [#allocation4], 16
        $region64: #{grdb_forward.1} parent=59 // pred_fallthru
          _
        %331 = sfence
        %p332 = pneg %p38
        %p333 = pneg %p35
        %p334 = pneg %p59
        %p335 = pneg %p56
        %p336 = pneg %p80
        %p337 = pneg %p77
        %p338 = scmp.lt.s32.totalorder %s22, 1
        %s339 = scalar_select %p338, %s22, 1
        %s340 = smul.addr %s339, 3
        %s341 = smul.addr %s340, 2
        %s342 = scalar_lea.vmem %s3, %s341
        %p343 = pneg %p106
        %p344 = pneg %p103
        %p345 = pneg %p127
        %p346 = pneg %p124
        %p347 = pneg %p148
        %p348 = pneg %p145
        %p349 = pneg %p169
        %p350 = pneg %p166
        %p351 = pneg %p190
        %p352 = pneg %p187
        %p353 = pneg %p211
        %p354 = pneg %p208
        %p355 = pneg %p232
        %p356 = pneg %p229
        %p357 = pneg %p258
        %p358 = pneg %p255
        %p359 = scmp.lt.s32.totalorder %s22, 1
        %s360 = scalar_select %p359, %s22, 1
        %s361 = smul.addr %s360, 3
        %s362 = smul.addr %s361, 4
        %s363 = scalar_lea.vmem %s10, %s362
        %p364 = scmp.lt.s32.totalorder %s22, 1
        %s365 = scalar_select %p364, %s22, 1
        %s366 = smul.addr %s365, 3
        %s367 = smul.addr %s366, 2
        %s368 = scalar_lea.vmem %s3, %s367
        %p369 = scmp.lt.s32.totalorder %s22, 1
        %s370 = scalar_select %p369, %s22, 1
        %s371 = smul.addr %s370, 3
        %s372 = smul.addr %s371, 4
        %s373 = scalar_lea.vmem %s10, %s372
        %v375 = vld [vmem:[%s1] sm:$0x7]
        %v377 = vperm.slane %v375, 0
        %v378 = vperm.slane %v375, 1
        %v379 = vperm.slane %v375, 2
        %v383 = vld [vmem:[%s368] sm:$0x3f]
        %v384 = vunpack.c.l.bf16 %v383
        %v385 = vunpack.c.h.bf16 %v383
        %v386 = vld [vmem:[%s2] sm:$0xf]
        %388 = vset.pattern.permute.xlu0 0
        %389 = vperm.xlu0 %388, %v386
        %v390 = vpop.permute.xlu0 %389
        %v392 = vunpack.c.l.s4 839922192
        %v393 = vunpack.c.0.s8 %v392
        %v394 = vperm.slane %v390, %v393
        %v396 = vadd.f32 %v384, %v394
        %v397 = vadd.f32 %v385, %v394
        %398 = vst [vmem:[#allocation2] sm:$0xff] 0
        %399 = vst [vmem:[#allocation2 + $0x8] sm:$0xf] 0
        %400 = vst [vmem:[#allocation2 + $0xc] sm:$0x33] 0
        %401 = vst [vmem:[#allocation2 + $0x14] sm:$0x3] 0
        %403 = vst [vmem:[#allocation1] ss:$2 sm:$0xff] %v383
        %v404 = vld.sshfl [vmem:[#allocation1] sm:$0xff pattern:$0x75643120]
        %v405 = vld.sshfl [vmem:[#allocation1 + $0x8] sm:$0xff pattern:$0x75643120]
        %408 = vst [vmem:[#allocation2] sm:$0x33] %v404
        %409 = vst [vmem:[#allocation2 + $0x8] sm:$0x3] %v405
        %v410 = vld [vmem:[%s4] sm:$0x3]
        %v411 = vld [vmem:[#allocation2] sm:$0x33]
        %v412 = vld [vmem:[#allocation2 + $0x8] sm:$0x3]
        %s413 = scalar_lea.vmem %s4, 2
        %v414 = vld [vmem:[%s413] sm:$0x3]
        %v417 = vunpack.c.l.b16 %v411
        %v418 = vunpack.c.h.b16 %v411
        %v419 = vunpack.c.l.b16 %v412
        %v420 = vpack.c.b16 %v417, %v417
        %v421 = vpack.c.b16 %v418, %v418
        %v422 = vpack.c.b16 %v419, %v419
        %423 = vrot.lane.b32.xlu0 %v420, 127
        %v424 = vpop.permute.xlu0 %423
        %425 = vrot.lane.b32.xlu0 %v421, 127
        %v426 = vpop.permute.xlu0 %425
        %427 = vrot.lane.b32.xlu0 %v422, 127
        %v428 = vpop.permute.xlu0 %427
        %vm429 = vcmask 1039360
        %v430 = vsel %vm429, %v424, %v426
        %v431 = vsel %vm429, %v426, %v428
        %vm432 = vcmask 31744
        %v434 = vsel %vm432, %v414, 0
        %vm436 = vcmask 1041408
        %v438 = vsel %vm436, %v430, 0
        %v441 = vsel %vm436, %v431, 0
        %v444 = vsel %vm436, %v428, 0
        %446 = vmatpush.bf16.msra.mxu0 0
        %447 = vmatpush.bf16.msra.mxu0 0
        %448 = vmatpush.bf16.msra.mxu0 0
        %449 = vmatpush.bf16.msra.mxu0 0
        %450 = vmatpush.bf16.msra.mxu0 0
        %451 = vmatpush.bf16.msra.mxu0 0
        %452 = vmatpush.bf16.msra.mxu0 0
        %453 = vmatpush.bf16.msra.mxu0 %v438
        %454 = vmatmul.bf16.gmra.mxu0 %v434
        %v455 = vpop.f32.mrf.mxu0
        %v456 = vadd.f32 0.0, %v455
        %v457 = vpop.f32.mrf.mxu0
        %458 = vdwg.mxu0
        %459 = vmatpush.bf16.msra.mxu0 0
        %460 = vmatpush.bf16.msra.mxu0 0
        %461 = vmatpush.bf16.msra.mxu0 0
        %462 = vmatpush.bf16.msra.mxu0 0
        %463 = vmatpush.bf16.msra.mxu0 0
        %464 = vmatpush.bf16.msra.mxu0 0
        %465 = vmatpush.bf16.msra.mxu0 0
        %466 = vmatpush.bf16.msra.mxu0 %v441
        %467 = vmatmul.bf16.gmra.mxu0 %v434
        %v468 = vpop.f32.mrf.mxu0
        %v469 = vadd.f32 0.0, %v468
        %v470 = vpop.f32.mrf.mxu0
        %471 = vdwg.mxu0
        %472 = vmatpush.bf16.msra.mxu0 0
        %473 = vmatpush.bf16.msra.mxu0 0
        %474 = vmatpush.bf16.msra.mxu0 0
        %475 = vmatpush.bf16.msra.mxu0 0
        %476 = vmatpush.bf16.msra.mxu0 0
        %477 = vmatpush.bf16.msra.mxu0 0
        %478 = vmatpush.bf16.msra.mxu0 0
        %479 = vmatpush.bf16.msra.mxu0 %v444
        %480 = vmatmul.bf16.gmra.mxu0 %v434
        %v481 = vpop.f32.mrf.mxu0
        %v482 = vadd.f32 0.0, %v481
        %v483 = vpop.f32.mrf.mxu0
        %484 = vdwg.mxu0
        %v486 = vsel %vm432, %v410, 0
        %v489 = vsel %vm436, %v420, 0
        %v492 = vsel %vm436, %v421, 0
        %v495 = vsel %vm436, %v422, 0
        %497 = vmatpush.bf16.msra.mxu0 0
        %498 = vmatpush.bf16.msra.mxu0 0
        %499 = vmatpush.bf16.msra.mxu0 0
        %500 = vmatpush.bf16.msra.mxu0 0
        %501 = vmatpush.bf16.msra.mxu0 0
        %502 = vmatpush.bf16.msra.mxu0 0
        %503 = vmatpush.bf16.msra.mxu0 0
        %504 = vmatpush.bf16.msra.mxu0 %v489
        %505 = vmatmul.bf16.gmra.mxu0 %v486
        %v506 = vpop.f32.mrf.mxu0
        %v507 = vadd.f32 %v456, %v506
        %v508 = vpop.f32.mrf.mxu0
        %509 = vdwg.mxu0
        %510 = vmatpush.bf16.msra.mxu0 0
        %511 = vmatpush.bf16.msra.mxu0 0
        %512 = vmatpush.bf16.msra.mxu0 0
        %513 = vmatpush.bf16.msra.mxu0 0
        %514 = vmatpush.bf16.msra.mxu0 0
        %515 = vmatpush.bf16.msra.mxu0 0
        %516 = vmatpush.bf16.msra.mxu0 0
        %517 = vmatpush.bf16.msra.mxu0 %v492
        %518 = vmatmul.bf16.gmra.mxu0 %v486
        %v519 = vpop.f32.mrf.mxu0
        %v520 = vadd.f32 %v469, %v519
        %v521 = vpop.f32.mrf.mxu0
        %522 = vdwg.mxu0
        %523 = vmatpush.bf16.msra.mxu0 0
        %524 = vmatpush.bf16.msra.mxu0 0
        %525 = vmatpush.bf16.msra.mxu0 0
        %526 = vmatpush.bf16.msra.mxu0 0
        %527 = vmatpush.bf16.msra.mxu0 0
        %528 = vmatpush.bf16.msra.mxu0 0
        %529 = vmatpush.bf16.msra.mxu0 0
        %530 = vmatpush.bf16.msra.mxu0 %v495
        %531 = vmatmul.bf16.gmra.mxu0 %v486
        %v532 = vpop.f32.mrf.mxu0
        %v533 = vadd.f32 %v482, %v532
        %v534 = vpop.f32.mrf.mxu0
        %535 = vdwg.mxu0
        %s536 = scalar_lea.vmem %s4, 4
        %v537 = vld [vmem:[%s536] sm:$0x3]
        %538 = vrot.lane.b32.xlu0 %v420, 126
        %v539 = vpop.permute.xlu0 %538
        %540 = vrot.lane.b32.xlu0 %v421, 126
        %v541 = vpop.permute.xlu0 %540
        %542 = vrot.lane.b32.xlu0 %v422, 126
        %v543 = vpop.permute.xlu0 %542
        %vm544 = vcmask 1031168
        %v545 = vsel %vm544, %v539, %v541
        %v546 = vsel %vm544, %v541, %v543
        %v548 = vsel %vm432, %v537, 0
        %v551 = vsel %vm436, %v545, 0
        %v554 = vsel %vm436, %v546, 0
        %v557 = vsel %vm436, %v543, 0
        %559 = vmatpush.bf16.msra.mxu0 0
        %560 = vmatpush.bf16.msra.mxu0 0
        %561 = vmatpush.bf16.msra.mxu0 0
        %562 = vmatpush.bf16.msra.mxu0 0
        %563 = vmatpush.bf16.msra.mxu0 0
        %564 = vmatpush.bf16.msra.mxu0 0
        %565 = vmatpush.bf16.msra.mxu0 0
        %566 = vmatpush.bf16.msra.mxu0 %v551
        %567 = vmatmul.bf16.gmra.mxu0 %v548
        %v568 = vpop.f32.mrf.mxu0
        %v569 = vadd.f32 0.0, %v568
        %v570 = vpop.f32.mrf.mxu0
        %571 = vdwg.mxu0
        %572 = vmatpush.bf16.msra.mxu0 0
        %573 = vmatpush.bf16.msra.mxu0 0
        %574 = vmatpush.bf16.msra.mxu0 0
        %575 = vmatpush.bf16.msra.mxu0 0
        %576 = vmatpush.bf16.msra.mxu0 0
        %577 = vmatpush.bf16.msra.mxu0 0
        %578 = vmatpush.bf16.msra.mxu0 0
        %579 = vmatpush.bf16.msra.mxu0 %v554
        %580 = vmatmul.bf16.gmra.mxu0 %v548
        %v581 = vpop.f32.mrf.mxu0
        %v582 = vadd.f32 0.0, %v581
        %v583 = vpop.f32.mrf.mxu0
        %584 = vdwg.mxu0
        %585 = vmatpush.bf16.msra.mxu0 0
        %586 = vmatpush.bf16.msra.mxu0 0
        %587 = vmatpush.bf16.msra.mxu0 0
        %588 = vmatpush.bf16.msra.mxu0 0
        %589 = vmatpush.bf16.msra.mxu0 0
        %590 = vmatpush.bf16.msra.mxu0 0
        %591 = vmatpush.bf16.msra.mxu0 0
        %592 = vmatpush.bf16.msra.mxu0 %v557
        %593 = vmatmul.bf16.gmra.mxu0 %v548
        %v594 = vpop.f32.mrf.mxu0
        %v595 = vadd.f32 0.0, %v594
        %v596 = vpop.f32.mrf.mxu0
        %597 = vdwg.mxu0
        %v598 = vadd.f32 %v507, %v569
        %v599 = vadd.f32 %v520, %v582
        %v600 = vadd.f32 %v533, %v595
        %s601 = scalar_lea.vmem %s4, 6
        %v602 = vld [vmem:[%s601] sm:$0x3]
        %603 = vrot.lane.b32.xlu0 %v420, 110
        %v604 = vpop.permute.xlu0 %603
        %605 = vrot.lane.b32.xlu0 %v421, 110
        %v606 = vpop.permute.xlu0 %605
        %607 = vrot.lane.b32.xlu0 %v422, 110
        %v608 = vpop.permute.xlu0 %607
        %vm609 = vcmask 900096
        %v610 = vsel %vm609, %v604, %v606
        %v611 = vsel %vm609, %v606, %v608
        %v613 = vsel %vm432, %v602, 0
        %v616 = vsel %vm436, %v610, 0
        %v619 = vsel %vm436, %v611, 0
        %v622 = vsel %vm436, %v608, 0
        %624 = vmatpush.bf16.msra.mxu0 0
        %625 = vmatpush.bf16.msra.mxu0 0
        %626 = vmatpush.bf16.msra.mxu0 0
        %627 = vmatpush.bf16.msra.mxu0 0
        %628 = vmatpush.bf16.msra.mxu0 0
        %629 = vmatpush.bf16.msra.mxu0 0
        %630 = vmatpush.bf16.msra.mxu0 0
        %631 = vmatpush.bf16.msra.mxu0 %v616
        %632 = vmatmul.bf16.gmra.mxu0 %v613
        %v633 = vpop.f32.mrf.mxu0
        %v634 = vadd.f32 0.0, %v633
        %v635 = vpop.f32.mrf.mxu0
        %636 = vdwg.mxu0
        %637 = vmatpush.bf16.msra.mxu0 0
        %638 = vmatpush.bf16.msra.mxu0 0
        %639 = vmatpush.bf16.msra.mxu0 0
        %640 = vmatpush.bf16.msra.mxu0 0
        %641 = vmatpush.bf16.msra.mxu0 0
        %642 = vmatpush.bf16.msra.mxu0 0
        %643 = vmatpush.bf16.msra.mxu0 0
        %644 = vmatpush.bf16.msra.mxu0 %v619
        %645 = vmatmul.bf16.gmra.mxu0 %v613
        %v646 = vpop.f32.mrf.mxu0
        %v647 = vadd.f32 0.0, %v646
        %v648 = vpop.f32.mrf.mxu0
        %649 = vdwg.mxu0
        %650 = vmatpush.bf16.msra.mxu0 0
        %651 = vmatpush.bf16.msra.mxu0 0
        %652 = vmatpush.bf16.msra.mxu0 0
        %653 = vmatpush.bf16.msra.mxu0 0
        %654 = vmatpush.bf16.msra.mxu0 0
        %655 = vmatpush.bf16.msra.mxu0 0
        %656 = vmatpush.bf16.msra.mxu0 0
        %657 = vmatpush.bf16.msra.mxu0 %v622
        %658 = vmatmul.bf16.gmra.mxu0 %v613
        %v659 = vpop.f32.mrf.mxu0
        %v660 = vadd.f32 0.0, %v659
        %v661 = vpop.f32.mrf.mxu0
        %662 = vdwg.mxu0
        %v663 = vadd.f32 %v598, %v634
        %v664 = vadd.f32 %v599, %v647
        %v665 = vadd.f32 %v600, %v660
        %s666 = scalar_lea.vmem %s4, 8
        %v667 = vld [vmem:[%s666] sm:$0x3]
        %668 = vrot.lane.b32.xlu0 %v420, 109
        %v669 = vpop.permute.xlu0 %668
        %670 = vrot.lane.b32.xlu0 %v421, 109
        %v671 = vpop.permute.xlu0 %670
        %672 = vrot.lane.b32.xlu0 %v422, 109
        %v673 = vpop.permute.xlu0 %672
        %vm674 = vcmask 891904
        %v675 = vsel %vm674, %v669, %v671
        %v676 = vsel %vm674, %v671, %v673
        %v678 = vsel %vm432, %v667, 0
        %v681 = vsel %vm436, %v675, 0
        %v684 = vsel %vm436, %v676, 0
        %v687 = vsel %vm436, %v673, 0
        %689 = vmatpush.bf16.msra.mxu0 0
        %690 = vmatpush.bf16.msra.mxu0 0
        %691 = vmatpush.bf16.msra.mxu0 0
        %692 = vmatpush.bf16.msra.mxu0 0
        %693 = vmatpush.bf16.msra.mxu0 0
        %694 = vmatpush.bf16.msra.mxu0 0
        %695 = vmatpush.bf16.msra.mxu0 0
        %696 = vmatpush.bf16.msra.mxu0 %v681
        %697 = vmatmul.bf16.gmra.mxu0 %v678
        %v698 = vpop.f32.mrf.mxu0
        %v699 = vadd.f32 0.0, %v698
        %v700 = vpop.f32.mrf.mxu0
        %701 = vdwg.mxu0
        %702 = vmatpush.bf16.msra.mxu0 0
        %703 = vmatpush.bf16.msra.mxu0 0
        %704 = vmatpush.bf16.msra.mxu0 0
        %705 = vmatpush.bf16.msra.mxu0 0
        %706 = vmatpush.bf16.msra.mxu0 0
        %707 = vmatpush.bf16.msra.mxu0 0
        %708 = vmatpush.bf16.msra.mxu0 0
        %709 = vmatpush.bf16.msra.mxu0 %v684
        %710 = vmatmul.bf16.gmra.mxu0 %v678
        %v711 = vpop.f32.mrf.mxu0
        %v712 = vadd.f32 0.0, %v711
        %v713 = vpop.f32.mrf.mxu0
        %714 = vdwg.mxu0
        %715 = vmatpush.bf16.msra.mxu0 0
        %716 = vmatpush.bf16.msra.mxu0 0
        %717 = vmatpush.bf16.msra.mxu0 0
        %718 = vmatpush.bf16.msra.mxu0 0
        %719 = vmatpush.bf16.msra.mxu0 0
        %720 = vmatpush.bf16.msra.mxu0 0
        %721 = vmatpush.bf16.msra.mxu0 0
        %722 = vmatpush.bf16.msra.mxu0 %v687
        %723 = vmatmul.bf16.gmra.mxu0 %v678
        %v724 = vpop.f32.mrf.mxu0
        %v725 = vadd.f32 0.0, %v724
        %v726 = vpop.f32.mrf.mxu0
        %727 = vdwg.mxu0
        %v728 = vadd.f32 %v663, %v699
        %v729 = vadd.f32 %v664, %v712
        %v730 = vadd.f32 %v665, %v725
        %s731 = scalar_lea.vmem %s4, 10
        %v732 = vld [vmem:[%s731] sm:$0x3]
        %733 = vrot.lane.b32.xlu0 %v420, 108
        %v734 = vpop.permute.xlu0 %733
        %735 = vrot.lane.b32.xlu0 %v421, 108
        %v736 = vpop.permute.xlu0 %735
        %737 = vrot.lane.b32.xlu0 %v422, 108
        %v738 = vpop.permute.xlu0 %737
        %vm739 = vcmask 883712
        %v740 = vsel %vm739, %v734, %v736
        %v741 = vsel %vm739, %v736, %v738
        %v743 = vsel %vm432, %v732, 0
        %v746 = vsel %vm436, %v740, 0
        %v749 = vsel %vm436, %v741, 0
        %v752 = vsel %vm436, %v738, 0
        %754 = vmatpush.bf16.msra.mxu0 0
        %755 = vmatpush.bf16.msra.mxu0 0
        %756 = vmatpush.bf16.msra.mxu0 0
        %757 = vmatpush.bf16.msra.mxu0 0
        %758 = vmatpush.bf16.msra.mxu0 0
        %759 = vmatpush.bf16.msra.mxu0 0
        %760 = vmatpush.bf16.msra.mxu0 0
        %761 = vmatpush.bf16.msra.mxu0 %v746
        %762 = vmatmul.bf16.gmra.mxu0 %v743
        %v763 = vpop.f32.mrf.mxu0
        %v764 = vadd.f32 0.0, %v763
        %v765 = vpop.f32.mrf.mxu0
        %766 = vdwg.mxu0
        %767 = vmatpush.bf16.msra.mxu0 0
        %768 = vmatpush.bf16.msra.mxu0 0
        %769 = vmatpush.bf16.msra.mxu0 0
        %770 = vmatpush.bf16.msra.mxu0 0
        %771 = vmatpush.bf16.msra.mxu0 0
        %772 = vmatpush.bf16.msra.mxu0 0
        %773 = vmatpush.bf16.msra.mxu0 0
        %774 = vmatpush.bf16.msra.mxu0 %v749
        %775 = vmatmul.bf16.gmra.mxu0 %v743
        %v776 = vpop.f32.mrf.mxu0
        %v777 = vadd.f32 0.0, %v776
        %v778 = vpop.f32.mrf.mxu0
        %779 = vdwg.mxu0
        %780 = vmatpush.bf16.msra.mxu0 0
        %781 = vmatpush.bf16.msra.mxu0 0
        %782 = vmatpush.bf16.msra.mxu0 0
        %783 = vmatpush.bf16.msra.mxu0 0
        %784 = vmatpush.bf16.msra.mxu0 0
        %785 = vmatpush.bf16.msra.mxu0 0
        %786 = vmatpush.bf16.msra.mxu0 0
        %787 = vmatpush.bf16.msra.mxu0 %v752
        %788 = vmatmul.bf16.gmra.mxu0 %v743
        %v789 = vpop.f32.mrf.mxu0
        %v790 = vadd.f32 0.0, %v789
        %v791 = vpop.f32.mrf.mxu0
        %792 = vdwg.mxu0
        %v793 = vadd.f32 %v728, %v764
        %v794 = vadd.f32 %v729, %v777
        %v795 = vadd.f32 %v730, %v790
        %s796 = scalar_lea.vmem %s4, 12
        %v797 = vld [vmem:[%s796] sm:$0x3]
        %798 = vrot.lane.b32.xlu0 %v420, 92
        %v799 = vpop.permute.xlu0 %798
        %800 = vrot.lane.b32.xlu0 %v421, 92
        %v801 = vpop.permute.xlu0 %800
        %802 = vrot.lane.b32.xlu0 %v422, 92
        %v803 = vpop.permute.xlu0 %802
        %vm804 = vcmask 752640
        %v805 = vsel %vm804, %v799, %v801
        %v806 = vsel %vm804, %v801, %v803
        %v808 = vsel %vm432, %v797, 0
        %v811 = vsel %vm436, %v805, 0
        %v814 = vsel %vm436, %v806, 0
        %v817 = vsel %vm436, %v803, 0
        %819 = vmatpush.bf16.msra.mxu0 0
        %820 = vmatpush.bf16.msra.mxu0 0
        %821 = vmatpush.bf16.msra.mxu0 0
        %822 = vmatpush.bf16.msra.mxu0 0
        %823 = vmatpush.bf16.msra.mxu0 0
        %824 = vmatpush.bf16.msra.mxu0 0
        %825 = vmatpush.bf16.msra.mxu0 0
        %826 = vmatpush.bf16.msra.mxu0 %v811
        %827 = vmatmul.bf16.gmra.mxu0 %v808
        %v828 = vpop.f32.mrf.mxu0
        %v829 = vadd.f32 0.0, %v828
        %v830 = vpop.f32.mrf.mxu0
        %831 = vdwg.mxu0
        %832 = vmatpush.bf16.msra.mxu0 0
        %833 = vmatpush.bf16.msra.mxu0 0
        %834 = vmatpush.bf16.msra.mxu0 0
        %835 = vmatpush.bf16.msra.mxu0 0
        %836 = vmatpush.bf16.msra.mxu0 0
        %837 = vmatpush.bf16.msra.mxu0 0
        %838 = vmatpush.bf16.msra.mxu0 0
        %839 = vmatpush.bf16.msra.mxu0 %v814
        %840 = vmatmul.bf16.gmra.mxu0 %v808
        %v841 = vpop.f32.mrf.mxu0
        %v842 = vadd.f32 0.0, %v841
        %v843 = vpop.f32.mrf.mxu0
        %844 = vdwg.mxu0
        %845 = vmatpush.bf16.msra.mxu0 0
        %846 = vmatpush.bf16.msra.mxu0 0
        %847 = vmatpush.bf16.msra.mxu0 0
        %848 = vmatpush.bf16.msra.mxu0 0
        %849 = vmatpush.bf16.msra.mxu0 0
        %850 = vmatpush.bf16.msra.mxu0 0
        %851 = vmatpush.bf16.msra.mxu0 0
        %852 = vmatpush.bf16.msra.mxu0 %v817
        %853 = vmatmul.bf16.gmra.mxu0 %v808
        %v854 = vpop.f32.mrf.mxu0
        %v855 = vadd.f32 0.0, %v854
        %v856 = vpop.f32.mrf.mxu0
        %857 = vdwg.mxu0
        %v858 = vadd.f32 %v793, %v829
        %v859 = vadd.f32 %v794, %v842
        %v860 = vadd.f32 %v795, %v855
        %s861 = scalar_lea.vmem %s4, 14
        %v862 = vld [vmem:[%s861] sm:$0x3]
        %863 = vrot.lane.b32.xlu0 %v420, 91
        %v864 = vpop.permute.xlu0 %863
        %865 = vrot.lane.b32.xlu0 %v421, 91
        %v866 = vpop.permute.xlu0 %865
        %867 = vrot.lane.b32.xlu0 %v422, 91
        %v868 = vpop.permute.xlu0 %867
        %vm869 = vcmask 744448
        %v870 = vsel %vm869, %v864, %v866
        %v871 = vsel %vm869, %v866, %v868
        %v873 = vsel %vm432, %v862, 0
        %v876 = vsel %vm436, %v870, 0
        %v879 = vsel %vm436, %v871, 0
        %v882 = vsel %vm436, %v868, 0
        %884 = vmatpush.bf16.msra.mxu0 0
        %885 = vmatpush.bf16.msra.mxu0 0
        %886 = vmatpush.bf16.msra.mxu0 0
        %887 = vmatpush.bf16.msra.mxu0 0
        %888 = vmatpush.bf16.msra.mxu0 0
        %889 = vmatpush.bf16.msra.mxu0 0
        %890 = vmatpush.bf16.msra.mxu0 0
        %891 = vmatpush.bf16.msra.mxu0 %v876
        %892 = vmatmul.bf16.gmra.mxu0 %v873
        %v893 = vpop.f32.mrf.mxu0
        %v894 = vadd.f32 0.0, %v893
        %v895 = vpop.f32.mrf.mxu0
        %896 = vdwg.mxu0
        %897 = vmatpush.bf16.msra.mxu0 0
        %898 = vmatpush.bf16.msra.mxu0 0
        %899 = vmatpush.bf16.msra.mxu0 0
        %900 = vmatpush.bf16.msra.mxu0 0
        %901 = vmatpush.bf16.msra.mxu0 0
        %902 = vmatpush.bf16.msra.mxu0 0
        %903 = vmatpush.bf16.msra.mxu0 0
        %904 = vmatpush.bf16.msra.mxu0 %v879
        %905 = vmatmul.bf16.gmra.mxu0 %v873
        %v906 = vpop.f32.mrf.mxu0
        %v907 = vadd.f32 0.0, %v906
        %v908 = vpop.f32.mrf.mxu0
        %909 = vdwg.mxu0
        %910 = vmatpush.bf16.msra.mxu0 0
        %911 = vmatpush.bf16.msra.mxu0 0
        %912 = vmatpush.bf16.msra.mxu0 0
        %913 = vmatpush.bf16.msra.mxu0 0
        %914 = vmatpush.bf16.msra.mxu0 0
        %915 = vmatpush.bf16.msra.mxu0 0
        %916 = vmatpush.bf16.msra.mxu0 0
        %917 = vmatpush.bf16.msra.mxu0 %v882
        %918 = vmatmul.bf16.gmra.mxu0 %v873
        %v919 = vpop.f32.mrf.mxu0
        %v920 = vadd.f32 0.0, %v919
        %v921 = vpop.f32.mrf.mxu0
        %922 = vdwg.mxu0
        %v923 = vadd.f32 %v858, %v894
        %v924 = vadd.f32 %v859, %v907
        %v925 = vadd.f32 %v860, %v920
        %s926 = scalar_lea.vmem %s4, 16
        %v927 = vld [vmem:[%s926] sm:$0x3]
        %928 = vrot.lane.b32.xlu0 %v420, 90
        %v929 = vpop.permute.xlu0 %928
        %930 = vrot.lane.b32.xlu0 %v421, 90
        %v931 = vpop.permute.xlu0 %930
        %932 = vrot.lane.b32.xlu0 %v422, 90
        %v933 = vpop.permute.xlu0 %932
        %vm934 = vcmask 736256
        %v935 = vsel %vm934, %v929, %v931
        %v936 = vsel %vm934, %v931, %v933
        %v938 = vsel %vm432, %v927, 0
        %v941 = vsel %vm436, %v935, 0
        %v944 = vsel %vm436, %v936, 0
        %v947 = vsel %vm436, %v933, 0
        %949 = vmatpush.bf16.msra.mxu0 0
        %950 = vmatpush.bf16.msra.mxu0 0
        %951 = vmatpush.bf16.msra.mxu0 0
        %952 = vmatpush.bf16.msra.mxu0 0
        %953 = vmatpush.bf16.msra.mxu0 0
        %954 = vmatpush.bf16.msra.mxu0 0
        %955 = vmatpush.bf16.msra.mxu0 0
        %956 = vmatpush.bf16.msra.mxu0 %v941
        %957 = vmatmul.bf16.gmra.mxu0 %v938
        %v958 = vpop.f32.mrf.mxu0
        %v959 = vadd.f32 0.0, %v958
        %v960 = vpop.f32.mrf.mxu0
        %961 = vdwg.mxu0
        %962 = vmatpush.bf16.msra.mxu0 0
        %963 = vmatpush.bf16.msra.mxu0 0
        %964 = vmatpush.bf16.msra.mxu0 0
        %965 = vmatpush.bf16.msra.mxu0 0
        %966 = vmatpush.bf16.msra.mxu0 0
        %967 = vmatpush.bf16.msra.mxu0 0
        %968 = vmatpush.bf16.msra.mxu0 0
        %969 = vmatpush.bf16.msra.mxu0 %v944
        %970 = vmatmul.bf16.gmra.mxu0 %v938
        %v971 = vpop.f32.mrf.mxu0
        %v972 = vadd.f32 0.0, %v971
        %v973 = vpop.f32.mrf.mxu0
        %974 = vdwg.mxu0
        %975 = vmatpush.bf16.msra.mxu0 0
        %976 = vmatpush.bf16.msra.mxu0 0
        %977 = vmatpush.bf16.msra.mxu0 0
        %978 = vmatpush.bf16.msra.mxu0 0
        %979 = vmatpush.bf16.msra.mxu0 0
        %980 = vmatpush.bf16.msra.mxu0 0
        %981 = vmatpush.bf16.msra.mxu0 0
        %982 = vmatpush.bf16.msra.mxu0 %v947
        %983 = vmatmul.bf16.gmra.mxu0 %v938
        %v984 = vpop.f32.mrf.mxu0
        %v985 = vadd.f32 0.0, %v984
        %v986 = vpop.f32.mrf.mxu0
        %987 = vdwg.mxu0
        %v988 = vadd.f32 %v923, %v959
        %v989 = vadd.f32 %v924, %v972
        %v990 = vadd.f32 %v925, %v985
        %s991 = sld [smem:[#allocation3]]
        %vm992 = vcmp.gt.f32.partialorder %v988, 0.0
        %vm993 = vcmp.gt.f32.partialorder %v989, 0.0
        %vm994 = vcmp.gt.f32.partialorder %v990, 0.0
        %v995 = vstv %s991
        %v996 = vmul.f32 %v995, %v988
        %v997 = vmul.f32 %v995, %v989
        %v998 = vmul.f32 %v995, %v990
        %v999 = vsel %vm992, %v988, %v996
        %v1000 = vsel %vm993, %v989, %v997
        %v1001 = vsel %vm994, %v990, %v998
        %v1002 = vmul.f32 %v999, %v377
        %v1003 = vmul.f32 %v1000, %v378
        %v1004 = vmul.f32 %v1001, %v379
        %v1005 = vpack.c.bf16 %v1003, %v1002
        %v1006 = vpack.c.bf16 %v1004, %v1004
        %v1009 = vrot.slane %v1005, 6
        %v1010 = vrot.slane %v1006, 6
        %1011 = vrot.lane.b32.xlu0 %v1009, 19
        %v1012 = vpop.permute.xlu0 %1011
        %1013 = vrot.lane.b32.xlu0 %v1010, 19
        %v1014 = vpop.permute.xlu0 %1013
        %v1015 = vrot.slane %v1012, 4
        %vm1016 = vcmask 154624
        %v1017 = vsel %vm1016, %v1015, %v1012
        %v1018 = vsel %vm1016, %v1015, %v1014
        %vm1021 = vcmask 1043610
        %vm1022 = vcmask 1047558
        %vm1023 = vmor %vm1022, %vm1021
        %1024 = vst.msk [vmem:[#allocation2] sm:$0xcc] %vm1023, %v1017
        %vm1025 = vcmask 412674
        %1026 = vst.msk [vmem:[#allocation2 + $0x8] sm:$0xc] %vm1025, %v1018
        %v1027 = vld [vmem:[%s5] sm:$0x3]
        %v1028 = vld [vmem:[#allocation2] sm:$0xff]
        %v1029 = vld [vmem:[#allocation2 + $0x8] sm:$0xf]
        %s1030 = scalar_lea.vmem %s5, 2
        %v1031 = vld [vmem:[%s1030] sm:$0x3]
        %v1034 = vunpack.c.l.b16 %v1028
        %v1035 = vunpack.c.h.b16 %v1028
        %v1036 = vunpack.c.l.b16 %v1029
        %v1037 = vpack.c.b16 %v1034, %v1034
        %v1038 = vpack.c.b16 %v1035, %v1035
        %v1039 = vpack.c.b16 %v1036, %v1036
        %1040 = vrot.lane.b32.xlu0 %v1037, 127
        %v1041 = vpop.permute.xlu0 %1040
        %1042 = vrot.lane.b32.xlu0 %v1038, 127
        %v1043 = vpop.permute.xlu0 %1042
        %1044 = vrot.lane.b32.xlu0 %v1039, 127
        %v1045 = vpop.permute.xlu0 %1044
        %v1046 = vsel %vm429, %v1041, %v1043
        %v1047 = vsel %vm429, %v1043, %v1045
        %vm1048 = vcmask 64512
        %v1050 = vsel %vm1048, %v1031, 0
        %vm1052 = vcmask 1043456
        %v1054 = vsel %vm1052, %v1046, 0
        %v1057 = vsel %vm1052, %v1047, 0
        %v1060 = vsel %vm1052, %v1045, 0
        %1062 = vmatpush.bf16.msra.mxu0 0
        %1063 = vmatpush.bf16.msra.mxu0 0
        %1064 = vmatpush.bf16.msra.mxu0 0
        %1065 = vmatpush.bf16.msra.mxu0 0
        %1066 = vmatpush.bf16.msra.mxu0 0
        %1067 = vmatpush.bf16.msra.mxu0 0
        %1068 = vmatpush.bf16.msra.mxu0 0
        %1069 = vmatpush.bf16.msra.mxu0 %v1054
        %1070 = vmatmul.bf16.gmra.mxu0 %v1050
        %v1071 = vpop.f32.mrf.mxu0
        %v1072 = vadd.f32 0.0, %v1071
        %v1073 = vpop.f32.mrf.mxu0
        %1074 = vdwg.mxu0
        %1075 = vmatpush.bf16.msra.mxu0 0
        %1076 = vmatpush.bf16.msra.mxu0 0
        %1077 = vmatpush.bf16.msra.mxu0 0
        %1078 = vmatpush.bf16.msra.mxu0 0
        %1079 = vmatpush.bf16.msra.mxu0 0
        %1080 = vmatpush.bf16.msra.mxu0 0
        %1081 = vmatpush.bf16.msra.mxu0 0
        %1082 = vmatpush.bf16.msra.mxu0 %v1057
        %1083 = vmatmul.bf16.gmra.mxu0 %v1050
        %v1084 = vpop.f32.mrf.mxu0
        %v1085 = vadd.f32 0.0, %v1084
        %v1086 = vpop.f32.mrf.mxu0
        %1087 = vdwg.mxu0
        %1088 = vmatpush.bf16.msra.mxu0 0
        %1089 = vmatpush.bf16.msra.mxu0 0
        %1090 = vmatpush.bf16.msra.mxu0 0
        %1091 = vmatpush.bf16.msra.mxu0 0
        %1092 = vmatpush.bf16.msra.mxu0 0
        %1093 = vmatpush.bf16.msra.mxu0 0
        %1094 = vmatpush.bf16.msra.mxu0 0
        %1095 = vmatpush.bf16.msra.mxu0 %v1060
        %1096 = vmatmul.bf16.gmra.mxu0 %v1050
        %v1097 = vpop.f32.mrf.mxu0
        %v1098 = vadd.f32 0.0, %v1097
        %v1099 = vpop.f32.mrf.mxu0
        %1100 = vdwg.mxu0
        %v1102 = vsel %vm1048, %v1027, 0
        %v1105 = vsel %vm1052, %v1037, 0
        %v1108 = vsel %vm1052, %v1038, 0
        %v1111 = vsel %vm1052, %v1039, 0
        %1113 = vmatpush.bf16.msra.mxu0 0
        %1114 = vmatpush.bf16.msra.mxu0 0
        %1115 = vmatpush.bf16.msra.mxu0 0
        %1116 = vmatpush.bf16.msra.mxu0 0
        %1117 = vmatpush.bf16.msra.mxu0 0
        %1118 = vmatpush.bf16.msra.mxu0 0
        %1119 = vmatpush.bf16.msra.mxu0 0
        %1120 = vmatpush.bf16.msra.mxu0 %v1105
        %1121 = vmatmul.bf16.gmra.mxu0 %v1102
        %v1122 = vpop.f32.mrf.mxu0
        %v1123 = vadd.f32 %v1072, %v1122
        %v1124 = vpop.f32.mrf.mxu0
        %1125 = vdwg.mxu0
        %1126 = vmatpush.bf16.msra.mxu0 0
        %1127 = vmatpush.bf16.msra.mxu0 0
        %1128 = vmatpush.bf16.msra.mxu0 0
        %1129 = vmatpush.bf16.msra.mxu0 0
        %1130 = vmatpush.bf16.msra.mxu0 0
        %1131 = vmatpush.bf16.msra.mxu0 0
        %1132 = vmatpush.bf16.msra.mxu0 0
        %1133 = vmatpush.bf16.msra.mxu0 %v1108
        %1134 = vmatmul.bf16.gmra.mxu0 %v1102
        %v1135 = vpop.f32.mrf.mxu0
        %v1136 = vadd.f32 %v1085, %v1135
        %v1137 = vpop.f32.mrf.mxu0
        %1138 = vdwg.mxu0
        %1139 = vmatpush.bf16.msra.mxu0 0
        %1140 = vmatpush.bf16.msra.mxu0 0
        %1141 = vmatpush.bf16.msra.mxu0 0
        %1142 = vmatpush.bf16.msra.mxu0 0
        %1143 = vmatpush.bf16.msra.mxu0 0
        %1144 = vmatpush.bf16.msra.mxu0 0
        %1145 = vmatpush.bf16.msra.mxu0 0
        %1146 = vmatpush.bf16.msra.mxu0 %v1111
        %1147 = vmatmul.bf16.gmra.mxu0 %v1102
        %v1148 = vpop.f32.mrf.mxu0
        %v1149 = vadd.f32 %v1098, %v1148
        %v1150 = vpop.f32.mrf.mxu0
        %1151 = vdwg.mxu0
        %s1152 = scalar_lea.vmem %s5, 4
        %v1153 = vld [vmem:[%s1152] sm:$0x3]
        %1154 = vrot.lane.b32.xlu0 %v1037, 126
        %v1155 = vpop.permute.xlu0 %1154
        %1156 = vrot.lane.b32.xlu0 %v1038, 126
        %v1157 = vpop.permute.xlu0 %1156
        %1158 = vrot.lane.b32.xlu0 %v1039, 126
        %v1159 = vpop.permute.xlu0 %1158
        %v1160 = vsel %vm544, %v1155, %v1157
        %v1161 = vsel %vm544, %v1157, %v1159
        %v1163 = vsel %vm1048, %v1153, 0
        %v1166 = vsel %vm1052, %v1160, 0
        %v1169 = vsel %vm1052, %v1161, 0
        %v1172 = vsel %vm1052, %v1159, 0
        %1174 = vmatpush.bf16.msra.mxu0 0
        %1175 = vmatpush.bf16.msra.mxu0 0
        %1176 = vmatpush.bf16.msra.mxu0 0
        %1177 = vmatpush.bf16.msra.mxu0 0
        %1178 = vmatpush.bf16.msra.mxu0 0
        %1179 = vmatpush.bf16.msra.mxu0 0
        %1180 = vmatpush.bf16.msra.mxu0 0
        %1181 = vmatpush.bf16.msra.mxu0 %v1166
        %1182 = vmatmul.bf16.gmra.mxu0 %v1163
        %v1183 = vpop.f32.mrf.mxu0
        %v1184 = vadd.f32 0.0, %v1183
        %v1185 = vpop.f32.mrf.mxu0
        %1186 = vdwg.mxu0
        %1187 = vmatpush.bf16.msra.mxu0 0
        %1188 = vmatpush.bf16.msra.mxu0 0
        %1189 = vmatpush.bf16.msra.mxu0 0
        %1190 = vmatpush.bf16.msra.mxu0 0
        %1191 = vmatpush.bf16.msra.mxu0 0
        %1192 = vmatpush.bf16.msra.mxu0 0
        %1193 = vmatpush.bf16.msra.mxu0 0
        %1194 = vmatpush.bf16.msra.mxu0 %v1169
        %1195 = vmatmul.bf16.gmra.mxu0 %v1163
        %v1196 = vpop.f32.mrf.mxu0
        %v1197 = vadd.f32 0.0, %v1196
        %v1198 = vpop.f32.mrf.mxu0
        %1199 = vdwg.mxu0
        %1200 = vmatpush.bf16.msra.mxu0 0
        %1201 = vmatpush.bf16.msra.mxu0 0
        %1202 = vmatpush.bf16.msra.mxu0 0
        %1203 = vmatpush.bf16.msra.mxu0 0
        %1204 = vmatpush.bf16.msra.mxu0 0
        %1205 = vmatpush.bf16.msra.mxu0 0
        %1206 = vmatpush.bf16.msra.mxu0 0
        %1207 = vmatpush.bf16.msra.mxu0 %v1172
        %1208 = vmatmul.bf16.gmra.mxu0 %v1163
        %v1209 = vpop.f32.mrf.mxu0
        %v1210 = vadd.f32 0.0, %v1209
        %v1211 = vpop.f32.mrf.mxu0
        %1212 = vdwg.mxu0
        %v1213 = vadd.f32 %v1123, %v1184
        %v1214 = vadd.f32 %v1136, %v1197
        %v1215 = vadd.f32 %v1149, %v1210
        %s1216 = scalar_lea.vmem %s5, 6
        %v1217 = vld [vmem:[%s1216] sm:$0x3]
        %1218 = vrot.lane.b32.xlu0 %v1037, 110
        %v1219 = vpop.permute.xlu0 %1218
        %1220 = vrot.lane.b32.xlu0 %v1038, 110
        %v1221 = vpop.permute.xlu0 %1220
        %1222 = vrot.lane.b32.xlu0 %v1039, 110
        %v1223 = vpop.permute.xlu0 %1222
        %v1224 = vsel %vm609, %v1219, %v1221
        %v1225 = vsel %vm609, %v1221, %v1223
        %v1227 = vsel %vm1048, %v1217, 0
        %v1230 = vsel %vm1052, %v1224, 0
        %v1233 = vsel %vm1052, %v1225, 0
        %v1236 = vsel %vm1052, %v1223, 0
        %1238 = vmatpush.bf16.msra.mxu0 0
        %1239 = vmatpush.bf16.msra.mxu0 0
        %1240 = vmatpush.bf16.msra.mxu0 0
        %1241 = vmatpush.bf16.msra.mxu0 0
        %1242 = vmatpush.bf16.msra.mxu0 0
        %1243 = vmatpush.bf16.msra.mxu0 0
        %1244 = vmatpush.bf16.msra.mxu0 0
        %1245 = vmatpush.bf16.msra.mxu0 %v1230
        %1246 = vmatmul.bf16.gmra.mxu0 %v1227
        %v1247 = vpop.f32.mrf.mxu0
        %v1248 = vadd.f32 0.0, %v1247
        %v1249 = vpop.f32.mrf.mxu0
        %1250 = vdwg.mxu0
        %1251 = vmatpush.bf16.msra.mxu0 0
        %1252 = vmatpush.bf16.msra.mxu0 0
        %1253 = vmatpush.bf16.msra.mxu0 0
        %1254 = vmatpush.bf16.msra.mxu0 0
        %1255 = vmatpush.bf16.msra.mxu0 0
        %1256 = vmatpush.bf16.msra.mxu0 0
        %1257 = vmatpush.bf16.msra.mxu0 0
        %1258 = vmatpush.bf16.msra.mxu0 %v1233
        %1259 = vmatmul.bf16.gmra.mxu0 %v1227
        %v1260 = vpop.f32.mrf.mxu0
        %v1261 = vadd.f32 0.0, %v1260
        %v1262 = vpop.f32.mrf.mxu0
        %1263 = vdwg.mxu0
        %1264 = vmatpush.bf16.msra.mxu0 0
        %1265 = vmatpush.bf16.msra.mxu0 0
        %1266 = vmatpush.bf16.msra.mxu0 0
        %1267 = vmatpush.bf16.msra.mxu0 0
        %1268 = vmatpush.bf16.msra.mxu0 0
        %1269 = vmatpush.bf16.msra.mxu0 0
        %1270 = vmatpush.bf16.msra.mxu0 0
        %1271 = vmatpush.bf16.msra.mxu0 %v1236
        %1272 = vmatmul.bf16.gmra.mxu0 %v1227
        %v1273 = vpop.f32.mrf.mxu0
        %v1274 = vadd.f32 0.0, %v1273
        %v1275 = vpop.f32.mrf.mxu0
        %1276 = vdwg.mxu0
        %v1277 = vadd.f32 %v1213, %v1248
        %v1278 = vadd.f32 %v1214, %v1261
        %v1279 = vadd.f32 %v1215, %v1274
        %s1280 = scalar_lea.vmem %s5, 8
        %v1281 = vld [vmem:[%s1280] sm:$0x3]
        %1282 = vrot.lane.b32.xlu0 %v1037, 109
        %v1283 = vpop.permute.xlu0 %1282
        %1284 = vrot.lane.b32.xlu0 %v1038, 109
        %v1285 = vpop.permute.xlu0 %1284
        %1286 = vrot.lane.b32.xlu0 %v1039, 109
        %v1287 = vpop.permute.xlu0 %1286
        %v1288 = vsel %vm674, %v1283, %v1285
        %v1289 = vsel %vm674, %v1285, %v1287
        %v1291 = vsel %vm1048, %v1281, 0
        %v1294 = vsel %vm1052, %v1288, 0
        %v1297 = vsel %vm1052, %v1289, 0
        %v1300 = vsel %vm1052, %v1287, 0
        %1302 = vmatpush.bf16.msra.mxu0 0
        %1303 = vmatpush.bf16.msra.mxu0 0
        %1304 = vmatpush.bf16.msra.mxu0 0
        %1305 = vmatpush.bf16.msra.mxu0 0
        %1306 = vmatpush.bf16.msra.mxu0 0
        %1307 = vmatpush.bf16.msra.mxu0 0
        %1308 = vmatpush.bf16.msra.mxu0 0
        %1309 = vmatpush.bf16.msra.mxu0 %v1294
        %1310 = vmatmul.bf16.gmra.mxu0 %v1291
        %v1311 = vpop.f32.mrf.mxu0
        %v1312 = vadd.f32 0.0, %v1311
        %v1313 = vpop.f32.mrf.mxu0
        %1314 = vdwg.mxu0
        %1315 = vmatpush.bf16.msra.mxu0 0
        %1316 = vmatpush.bf16.msra.mxu0 0
        %1317 = vmatpush.bf16.msra.mxu0 0
        %1318 = vmatpush.bf16.msra.mxu0 0
        %1319 = vmatpush.bf16.msra.mxu0 0
        %1320 = vmatpush.bf16.msra.mxu0 0
        %1321 = vmatpush.bf16.msra.mxu0 0
        %1322 = vmatpush.bf16.msra.mxu0 %v1297
        %1323 = vmatmul.bf16.gmra.mxu0 %v1291
        %v1324 = vpop.f32.mrf.mxu0
        %v1325 = vadd.f32 0.0, %v1324
        %v1326 = vpop.f32.mrf.mxu0
        %1327 = vdwg.mxu0
        %1328 = vmatpush.bf16.msra.mxu0 0
        %1329 = vmatpush.bf16.msra.mxu0 0
        %1330 = vmatpush.bf16.msra.mxu0 0
        %1331 = vmatpush.bf16.msra.mxu0 0
        %1332 = vmatpush.bf16.msra.mxu0 0
        %1333 = vmatpush.bf16.msra.mxu0 0
        %1334 = vmatpush.bf16.msra.mxu0 0
        %1335 = vmatpush.bf16.msra.mxu0 %v1300
        %1336 = vmatmul.bf16.gmra.mxu0 %v1291
        %v1337 = vpop.f32.mrf.mxu0
        %v1338 = vadd.f32 0.0, %v1337
        %v1339 = vpop.f32.mrf.mxu0
        %1340 = vdwg.mxu0
        %v1341 = vadd.f32 %v1277, %v1312
        %v1342 = vadd.f32 %v1278, %v1325
        %v1343 = vadd.f32 %v1279, %v1338
        %s1344 = scalar_lea.vmem %s5, 10
        %v1345 = vld [vmem:[%s1344] sm:$0x3]
        %1346 = vrot.lane.b32.xlu0 %v1037, 108
        %v1347 = vpop.permute.xlu0 %1346
        %1348 = vrot.lane.b32.xlu0 %v1038, 108
        %v1349 = vpop.permute.xlu0 %1348
        %1350 = vrot.lane.b32.xlu0 %v1039, 108
        %v1351 = vpop.permute.xlu0 %1350
        %v1352 = vsel %vm739, %v1347, %v1349
        %v1353 = vsel %vm739, %v1349, %v1351
        %v1355 = vsel %vm1048, %v1345, 0
        %v1358 = vsel %vm1052, %v1352, 0
        %v1361 = vsel %vm1052, %v1353, 0
        %v1364 = vsel %vm1052, %v1351, 0
        %1366 = vmatpush.bf16.msra.mxu0 0
        %1367 = vmatpush.bf16.msra.mxu0 0
        %1368 = vmatpush.bf16.msra.mxu0 0
        %1369 = vmatpush.bf16.msra.mxu0 0
        %1370 = vmatpush.bf16.msra.mxu0 0
        %1371 = vmatpush.bf16.msra.mxu0 0
        %1372 = vmatpush.bf16.msra.mxu0 0
        %1373 = vmatpush.bf16.msra.mxu0 %v1358
        %1374 = vmatmul.bf16.gmra.mxu0 %v1355
        %v1375 = vpop.f32.mrf.mxu0
        %v1376 = vadd.f32 0.0, %v1375
        %v1377 = vpop.f32.mrf.mxu0
        %1378 = vdwg.mxu0
        %1379 = vmatpush.bf16.msra.mxu0 0
        %1380 = vmatpush.bf16.msra.mxu0 0
        %1381 = vmatpush.bf16.msra.mxu0 0
        %1382 = vmatpush.bf16.msra.mxu0 0
        %1383 = vmatpush.bf16.msra.mxu0 0
        %1384 = vmatpush.bf16.msra.mxu0 0
        %1385 = vmatpush.bf16.msra.mxu0 0
        %1386 = vmatpush.bf16.msra.mxu0 %v1361
        %1387 = vmatmul.bf16.gmra.mxu0 %v1355
        %v1388 = vpop.f32.mrf.mxu0
        %v1389 = vadd.f32 0.0, %v1388
        %v1390 = vpop.f32.mrf.mxu0
        %1391 = vdwg.mxu0
        %1392 = vmatpush.bf16.msra.mxu0 0
        %1393 = vmatpush.bf16.msra.mxu0 0
        %1394 = vmatpush.bf16.msra.mxu0 0
        %1395 = vmatpush.bf16.msra.mxu0 0
        %1396 = vmatpush.bf16.msra.mxu0 0
        %1397 = vmatpush.bf16.msra.mxu0 0
        %1398 = vmatpush.bf16.msra.mxu0 0
        %1399 = vmatpush.bf16.msra.mxu0 %v1364
        %1400 = vmatmul.bf16.gmra.mxu0 %v1355
        %v1401 = vpop.f32.mrf.mxu0
        %v1402 = vadd.f32 0.0, %v1401
        %v1403 = vpop.f32.mrf.mxu0
        %1404 = vdwg.mxu0
        %v1405 = vadd.f32 %v1341, %v1376
        %v1406 = vadd.f32 %v1342, %v1389
        %v1407 = vadd.f32 %v1343, %v1402
        %s1408 = scalar_lea.vmem %s5, 12
        %v1409 = vld [vmem:[%s1408] sm:$0x3]
        %1410 = vrot.lane.b32.xlu0 %v1037, 92
        %v1411 = vpop.permute.xlu0 %1410
        %1412 = vrot.lane.b32.xlu0 %v1038, 92
        %v1413 = vpop.permute.xlu0 %1412
        %1414 = vrot.lane.b32.xlu0 %v1039, 92
        %v1415 = vpop.permute.xlu0 %1414
        %v1416 = vsel %vm804, %v1411, %v1413
        %v1417 = vsel %vm804, %v1413, %v1415
        %v1419 = vsel %vm1048, %v1409, 0
        %v1422 = vsel %vm1052, %v1416, 0
        %v1425 = vsel %vm1052, %v1417, 0
        %v1428 = vsel %vm1052, %v1415, 0
        %1430 = vmatpush.bf16.msra.mxu0 0
        %1431 = vmatpush.bf16.msra.mxu0 0
        %1432 = vmatpush.bf16.msra.mxu0 0
        %1433 = vmatpush.bf16.msra.mxu0 0
        %1434 = vmatpush.bf16.msra.mxu0 0
        %1435 = vmatpush.bf16.msra.mxu0 0
        %1436 = vmatpush.bf16.msra.mxu0 0
        %1437 = vmatpush.bf16.msra.mxu0 %v1422
        %1438 = vmatmul.bf16.gmra.mxu0 %v1419
        %v1439 = vpop.f32.mrf.mxu0
        %v1440 = vadd.f32 0.0, %v1439
        %v1441 = vpop.f32.mrf.mxu0
        %1442 = vdwg.mxu0
        %1443 = vmatpush.bf16.msra.mxu0 0
        %1444 = vmatpush.bf16.msra.mxu0 0
        %1445 = vmatpush.bf16.msra.mxu0 0
        %1446 = vmatpush.bf16.msra.mxu0 0
        %1447 = vmatpush.bf16.msra.mxu0 0
        %1448 = vmatpush.bf16.msra.mxu0 0
        %1449 = vmatpush.bf16.msra.mxu0 0
        %1450 = vmatpush.bf16.msra.mxu0 %v1425
        %1451 = vmatmul.bf16.gmra.mxu0 %v1419
        %v1452 = vpop.f32.mrf.mxu0
        %v1453 = vadd.f32 0.0, %v1452
        %v1454 = vpop.f32.mrf.mxu0
        %1455 = vdwg.mxu0
        %1456 = vmatpush.bf16.msra.mxu0 0
        %1457 = vmatpush.bf16.msra.mxu0 0
        %1458 = vmatpush.bf16.msra.mxu0 0
        %1459 = vmatpush.bf16.msra.mxu0 0
        %1460 = vmatpush.bf16.msra.mxu0 0
        %1461 = vmatpush.bf16.msra.mxu0 0
        %1462 = vmatpush.bf16.msra.mxu0 0
        %1463 = vmatpush.bf16.msra.mxu0 %v1428
        %1464 = vmatmul.bf16.gmra.mxu0 %v1419
        %v1465 = vpop.f32.mrf.mxu0
        %v1466 = vadd.f32 0.0, %v1465
        %v1467 = vpop.f32.mrf.mxu0
        %1468 = vdwg.mxu0
        %v1469 = vadd.f32 %v1405, %v1440
        %v1470 = vadd.f32 %v1406, %v1453
        %v1471 = vadd.f32 %v1407, %v1466
        %s1472 = scalar_lea.vmem %s5, 14
        %v1473 = vld [vmem:[%s1472] sm:$0x3]
        %1474 = vrot.lane.b32.xlu0 %v1037, 91
        %v1475 = vpop.permute.xlu0 %1474
        %1476 = vrot.lane.b32.xlu0 %v1038, 91
        %v1477 = vpop.permute.xlu0 %1476
        %1478 = vrot.lane.b32.xlu0 %v1039, 91
        %v1479 = vpop.permute.xlu0 %1478
        %v1480 = vsel %vm869, %v1475, %v1477
        %v1481 = vsel %vm869, %v1477, %v1479
        %v1483 = vsel %vm1048, %v1473, 0
        %v1486 = vsel %vm1052, %v1480, 0
        %v1489 = vsel %vm1052, %v1481, 0
        %v1492 = vsel %vm1052, %v1479, 0
        %1494 = vmatpush.bf16.msra.mxu0 0
        %1495 = vmatpush.bf16.msra.mxu0 0
        %1496 = vmatpush.bf16.msra.mxu0 0
        %1497 = vmatpush.bf16.msra.mxu0 0
        %1498 = vmatpush.bf16.msra.mxu0 0
        %1499 = vmatpush.bf16.msra.mxu0 0
        %1500 = vmatpush.bf16.msra.mxu0 0
        %1501 = vmatpush.bf16.msra.mxu0 %v1486
        %1502 = vmatmul.bf16.gmra.mxu0 %v1483
        %v1503 = vpop.f32.mrf.mxu0
        %v1504 = vadd.f32 0.0, %v1503
        %v1505 = vpop.f32.mrf.mxu0
        %1506 = vdwg.mxu0
        %1507 = vmatpush.bf16.msra.mxu0 0
        %1508 = vmatpush.bf16.msra.mxu0 0
        %1509 = vmatpush.bf16.msra.mxu0 0
        %1510 = vmatpush.bf16.msra.mxu0 0
        %1511 = vmatpush.bf16.msra.mxu0 0
        %1512 = vmatpush.bf16.msra.mxu0 0
        %1513 = vmatpush.bf16.msra.mxu0 0
        %1514 = vmatpush.bf16.msra.mxu0 %v1489
        %1515 = vmatmul.bf16.gmra.mxu0 %v1483
        %v1516 = vpop.f32.mrf.mxu0
        %v1517 = vadd.f32 0.0, %v1516
        %v1518 = vpop.f32.mrf.mxu0
        %1519 = vdwg.mxu0
        %1520 = vmatpush.bf16.msra.mxu0 0
        %1521 = vmatpush.bf16.msra.mxu0 0
        %1522 = vmatpush.bf16.msra.mxu0 0
        %1523 = vmatpush.bf16.msra.mxu0 0
        %1524 = vmatpush.bf16.msra.mxu0 0
        %1525 = vmatpush.bf16.msra.mxu0 0
        %1526 = vmatpush.bf16.msra.mxu0 0
        %1527 = vmatpush.bf16.msra.mxu0 %v1492
        %1528 = vmatmul.bf16.gmra.mxu0 %v1483
        %v1529 = vpop.f32.mrf.mxu0
        %v1530 = vadd.f32 0.0, %v1529
        %v1531 = vpop.f32.mrf.mxu0
        %1532 = vdwg.mxu0
        %v1533 = vadd.f32 %v1469, %v1504
        %v1534 = vadd.f32 %v1470, %v1517
        %v1535 = vadd.f32 %v1471, %v1530
        %s1536 = scalar_lea.vmem %s5, 16
        %v1537 = vld [vmem:[%s1536] sm:$0x3]
        %1538 = vrot.lane.b32.xlu0 %v1037, 90
        %v1539 = vpop.permute.xlu0 %1538
        %1540 = vrot.lane.b32.xlu0 %v1038, 90
        %v1541 = vpop.permute.xlu0 %1540
        %1542 = vrot.lane.b32.xlu0 %v1039, 90
        %v1543 = vpop.permute.xlu0 %1542
        %v1544 = vsel %vm934, %v1539, %v1541
        %v1545 = vsel %vm934, %v1541, %v1543
        %v1547 = vsel %vm1048, %v1537, 0
        %v1550 = vsel %vm1052, %v1544, 0
        %v1553 = vsel %vm1052, %v1545, 0
        %v1556 = vsel %vm1052, %v1543, 0
        %1558 = vmatpush.bf16.msra.mxu0 0
        %1559 = vmatpush.bf16.msra.mxu0 0
        %1560 = vmatpush.bf16.msra.mxu0 0
        %1561 = vmatpush.bf16.msra.mxu0 0
        %1562 = vmatpush.bf16.msra.mxu0 0
        %1563 = vmatpush.bf16.msra.mxu0 0
        %1564 = vmatpush.bf16.msra.mxu0 0
        %1565 = vmatpush.bf16.msra.mxu0 %v1550
        %1566 = vmatmul.bf16.gmra.mxu0 %v1547
        %v1567 = vpop.f32.mrf.mxu0
        %v1568 = vadd.f32 0.0, %v1567
        %v1569 = vpop.f32.mrf.mxu0
        %1570 = vdwg.mxu0
        %1571 = vmatpush.bf16.msra.mxu0 0
        %1572 = vmatpush.bf16.msra.mxu0 0
        %1573 = vmatpush.bf16.msra.mxu0 0
        %1574 = vmatpush.bf16.msra.mxu0 0
        %1575 = vmatpush.bf16.msra.mxu0 0
        %1576 = vmatpush.bf16.msra.mxu0 0
        %1577 = vmatpush.bf16.msra.mxu0 0
        %1578 = vmatpush.bf16.msra.mxu0 %v1553
        %1579 = vmatmul.bf16.gmra.mxu0 %v1547
        %v1580 = vpop.f32.mrf.mxu0
        %v1581 = vadd.f32 0.0, %v1580
        %v1582 = vpop.f32.mrf.mxu0
        %1583 = vdwg.mxu0
        %1584 = vmatpush.bf16.msra.mxu0 0
        %1585 = vmatpush.bf16.msra.mxu0 0
        %1586 = vmatpush.bf16.msra.mxu0 0
        %1587 = vmatpush.bf16.msra.mxu0 0
        %1588 = vmatpush.bf16.msra.mxu0 0
        %1589 = vmatpush.bf16.msra.mxu0 0
        %1590 = vmatpush.bf16.msra.mxu0 0
        %1591 = vmatpush.bf16.msra.mxu0 %v1556
        %1592 = vmatmul.bf16.gmra.mxu0 %v1547
        %v1593 = vpop.f32.mrf.mxu0
        %v1594 = vadd.f32 0.0, %v1593
        %v1595 = vpop.f32.mrf.mxu0
        %1596 = vdwg.mxu0
        %v1597 = vadd.f32 %v1533, %v1568
        %v1598 = vadd.f32 %v1534, %v1581
        %v1599 = vadd.f32 %v1535, %v1594
        %s1600 = sld [smem:[#allocation3 + $0x1]]
        %vm1601 = vcmp.gt.f32.partialorder %v1597, 0.0
        %vm1602 = vcmp.gt.f32.partialorder %v1598, 0.0
        %vm1603 = vcmp.gt.f32.partialorder %v1599, 0.0
        %v1604 = vstv %s1600
        %v1605 = vmul.f32 %v1604, %v1597
        %v1606 = vmul.f32 %v1604, %v1598
        %v1607 = vmul.f32 %v1604, %v1599
        %v1608 = vsel %vm1601, %v1597, %v1605
        %v1609 = vsel %vm1602, %v1598, %v1606
        %v1610 = vsel %vm1603, %v1599, %v1607
        %v1611 = vmul.f32 %v1608, %v377
        %v1612 = vmul.f32 %v1609, %v378
        %v1613 = vmul.f32 %v1610, %v379
        %v1614 = vpack.c.bf16 %v1612, %v1611
        %v1615 = vpack.c.bf16 %v1613, %v1613
        %1618 = vrot.lane.b32.xlu0 %v1614, 19
        %v1619 = vpop.permute.xlu0 %1618
        %1620 = vrot.lane.b32.xlu0 %v1615, 19
        %v1621 = vpop.permute.xlu0 %1620
        %v1622 = vrot.slane %v1619, 4
        %v1623 = vsel %vm1016, %v1622, %v1619
        %v1624 = vsel %vm1016, %v1622, %v1621
        %vm1627 = vcmask 1041560
        %vm1628 = vcmask 1045508
        %vm1629 = vmor %vm1628, %vm1627
        %1630 = vst.msk [vmem:[#allocation2 + $0xc] sm:$0x33] %vm1629, %v1623
        %vm1631 = vcmask 410624
        %1632 = vst.msk [vmem:[#allocation2 + $0x14] sm:$0x3] %vm1631, %v1624
        %v1633 = vld [vmem:[%s8] sm:$0x3]
        %v1634 = vld [vmem:[#allocation2] sm:$0xff]
        %v1635 = vld [vmem:[#allocation2 + $0x8] sm:$0xf]
        %v1636 = vld [vmem:[#allocation2 + $0xc] sm:$0x33]
        %v1637 = vld [vmem:[#allocation2 + $0x14] sm:$0x3]
        %v1642 = vunpack.c.l.b16 %v1634
        %v1643 = vunpack.c.h.b16 %v1634
        %v1644 = vunpack.c.l.b16 %v1635
        %v1645 = vunpack.c.l.b16 %v1636
        %v1646 = vunpack.c.h.b16 %v1636
        %v1647 = vunpack.c.l.b16 %v1637
        %v1648 = vpack.c.b16 %v1645, %v1642
        %v1649 = vpack.c.b16 %v1646, %v1643
        %v1650 = vpack.c.b16 %v1647, %v1644
        %1653 = vst [vmem:[#allocation1] ss:$2 sm:$0xff] %v384
        %s1654 = scalar_lea.vmem [#allocation1], 16
        %1655 = vst [vmem:[%s1654] ss:$2 sm:$0xff] %v385
        %v1656 = vld.sshfl [vmem:[#allocation1] sm:$0xff pattern:$0x75316420]
        %v1657 = vld.sshfl [vmem:[#allocation1 + $0x8] sm:$0xff pattern:$0x75316420]
        %v1658 = vld.sshfl [vmem:[#allocation1 + $0x10] sm:$0xff pattern:$0x75316420]
        %vm1662 = vcmask 97280
        %v1664 = vsel %vm1662, %v1633, 0
        %vm1666 = vcmask 1045504
        %v1668 = vsel %vm1666, %v1648, 0
        %v1671 = vsel %vm1666, %v1649, 0
        %v1674 = vsel %vm1666, %v1650, 0
        %1676 = vmatpush.bf16.msra.mxu0 0
        %1677 = vmatpush.bf16.msra.mxu0 0
        %1678 = vmatpush.bf16.msra.mxu0 0
        %1679 = vmatpush.bf16.msra.mxu0 0
        %1680 = vmatpush.bf16.msra.mxu0 0
        %1681 = vmatpush.bf16.msra.mxu0 0
        %1682 = vmatpush.bf16.msra.mxu0 0
        %1683 = vmatpush.bf16.msra.mxu0 %v1668
        %1684 = vmatmul.bf16.gmra.mxu0 %v1664
        %v1685 = vpop.f32.mrf.mxu0
        %v1686 = vadd.f32 %v1656, %v1685
        %v1687 = vpop.f32.mrf.mxu0
        %1688 = vdwg.mxu0
        %1689 = vmatpush.bf16.msra.mxu0 0
        %1690 = vmatpush.bf16.msra.mxu0 0
        %1691 = vmatpush.bf16.msra.mxu0 0
        %1692 = vmatpush.bf16.msra.mxu0 0
        %1693 = vmatpush.bf16.msra.mxu0 0
        %1694 = vmatpush.bf16.msra.mxu0 0
        %1695 = vmatpush.bf16.msra.mxu0 0
        %1696 = vmatpush.bf16.msra.mxu0 %v1671
        %1697 = vmatmul.bf16.gmra.mxu0 %v1664
        %v1698 = vpop.f32.mrf.mxu0
        %v1699 = vadd.f32 %v1657, %v1698
        %v1700 = vpop.f32.mrf.mxu0
        %1701 = vdwg.mxu0
        %1702 = vmatpush.bf16.msra.mxu0 0
        %1703 = vmatpush.bf16.msra.mxu0 0
        %1704 = vmatpush.bf16.msra.mxu0 0
        %1705 = vmatpush.bf16.msra.mxu0 0
        %1706 = vmatpush.bf16.msra.mxu0 0
        %1707 = vmatpush.bf16.msra.mxu0 0
        %1708 = vmatpush.bf16.msra.mxu0 0
        %1709 = vmatpush.bf16.msra.mxu0 %v1674
        %1710 = vmatmul.bf16.gmra.mxu0 %v1664
        %v1711 = vpop.f32.mrf.mxu0
        %v1712 = vadd.f32 %v1658, %v1711
        %v1713 = vpop.f32.mrf.mxu0
        %1714 = vdwg.mxu0
        %v1715 = vpack.c.bf16 %v1699, %v1686
        %v1716 = vpack.c.bf16 %v1712, %v1712
        %v1717 = vld [vmem:[%s9] sm:$0x3]
        %v1720 = vunpack.c.l.b16 %v1715
        %v1721 = vunpack.c.h.b16 %v1715
        %v1722 = vunpack.c.l.b16 %v1716
        %v1723 = vpack.c.b16 %v1720, %v1720
        %v1724 = vpack.c.b16 %v1721, %v1721
        %v1725 = vpack.c.b16 %v1722, %v1722
        %v1727 = vsel %vm432, %v1717, 0
        %v1730 = vsel %vm436, %v1723, 0
        %v1733 = vsel %vm436, %v1724, 0
        %v1736 = vsel %vm436, %v1725, 0
        %1738 = vmatpush.bf16.msra.mxu0 0
        %1739 = vmatpush.bf16.msra.mxu0 0
        %1740 = vmatpush.bf16.msra.mxu0 0
        %1741 = vmatpush.bf16.msra.mxu0 0
        %1742 = vmatpush.bf16.msra.mxu0 0
        %1743 = vmatpush.bf16.msra.mxu0 0
        %1744 = vmatpush.bf16.msra.mxu0 0
        %1745 = vmatpush.bf16.msra.mxu0 %v1730
        %1746 = vmatmul.bf16.gmra.mxu0 %v1727
        %v1747 = vpop.f32.mrf.mxu0
        %v1748 = vadd.f32 0.0, %v1747
        %v1749 = vpop.f32.mrf.mxu0
        %1750 = vdwg.mxu0
        %1751 = vmatpush.bf16.msra.mxu0 0
        %1752 = vmatpush.bf16.msra.mxu0 0
        %1753 = vmatpush.bf16.msra.mxu0 0
        %1754 = vmatpush.bf16.msra.mxu0 0
        %1755 = vmatpush.bf16.msra.mxu0 0
        %1756 = vmatpush.bf16.msra.mxu0 0
        %1757 = vmatpush.bf16.msra.mxu0 0
        %1758 = vmatpush.bf16.msra.mxu0 %v1733
        %1759 = vmatmul.bf16.gmra.mxu0 %v1727
        %v1760 = vpop.f32.mrf.mxu0
        %v1761 = vadd.f32 0.0, %v1760
        %v1762 = vpop.f32.mrf.mxu0
        %1763 = vdwg.mxu0
        %1764 = vmatpush.bf16.msra.mxu0 0
        %1765 = vmatpush.bf16.msra.mxu0 0
        %1766 = vmatpush.bf16.msra.mxu0 0
        %1767 = vmatpush.bf16.msra.mxu0 0
        %1768 = vmatpush.bf16.msra.mxu0 0
        %1769 = vmatpush.bf16.msra.mxu0 0
        %1770 = vmatpush.bf16.msra.mxu0 0
        %1771 = vmatpush.bf16.msra.mxu0 %v1736
        %1772 = vmatmul.bf16.gmra.mxu0 %v1727
        %v1773 = vpop.f32.mrf.mxu0
        %v1774 = vadd.f32 0.0, %v1773
        %v1775 = vpop.f32.mrf.mxu0
        %1776 = vdwg.mxu0
        %v1779 = vrot.slane %v1761, 4
        %v1780 = vsel %vm1052, %v1748, %v1779
        %v1782 = vadd.f32 %v396, %v1780
        %v1783 = vadd.f32 %v397, %v1774
        %1784 = vst [vmem:[#allocation2] sm:$0xff] 0
        %1785 = vst [vmem:[#allocation2 + $0x8] sm:$0xf] 0
        %1786 = vst [vmem:[#allocation2 + $0xc] sm:$0x33] 0
        %1787 = vst [vmem:[#allocation2 + $0x14] sm:$0x3] 0
        %1788 = vst [vmem:[#allocation2] sm:$0x33] %v1715
        %1789 = vst [vmem:[#allocation2 + $0x8] sm:$0x3] %v1716
        %v1790 = vld [vmem:[%s6] sm:$0x3]
        %v1791 = vld [vmem:[#allocation2] sm:$0x33]
        %v1792 = vld [vmem:[#allocation2 + $0x8] sm:$0x3]
        %s1793 = scalar_lea.vmem %s6, 2
        %v1794 = vld [vmem:[%s1793] sm:$0x3]
        %v1797 = vunpack.c.l.b16 %v1791
        %v1798 = vunpack.c.h.b16 %v1791
        %v1799 = vunpack.c.l.b16 %v1792
        %v1800 = vpack.c.b16 %v1797, %v1797
        %v1801 = vpack.c.b16 %v1798, %v1798
        %v1802 = vpack.c.b16 %v1799, %v1799
        %1803 = vrot.lane.b32.xlu0 %v1800, 127
        %v1804 = vpop.permute.xlu0 %1803
        %1805 = vrot.lane.b32.xlu0 %v1801, 127
        %v1806 = vpop.permute.xlu0 %1805
        %1807 = vrot.lane.b32.xlu0 %v1802, 127
        %v1808 = vpop.permute.xlu0 %1807
        %v1809 = vsel %vm429, %v1804, %v1806
        %v1810 = vsel %vm429, %v1806, %v1808
        %v1812 = vsel %vm432, %v1794, 0
        %v1815 = vsel %vm436, %v1809, 0
        %v1818 = vsel %vm436, %v1810, 0
        %v1821 = vsel %vm436, %v1808, 0
        %1823 = vmatpush.bf16.msra.mxu0 0
        %1824 = vmatpush.bf16.msra.mxu0 0
        %1825 = vmatpush.bf16.msra.mxu0 0
        %1826 = vmatpush.bf16.msra.mxu0 0
        %1827 = vmatpush.bf16.msra.mxu0 0
        %1828 = vmatpush.bf16.msra.mxu0 0
        %1829 = vmatpush.bf16.msra.mxu0 0
        %1830 = vmatpush.bf16.msra.mxu0 %v1815
        %1831 = vmatmul.bf16.gmra.mxu0 %v1812
        %v1832 = vpop.f32.mrf.mxu0
        %v1833 = vadd.f32 0.0, %v1832
        %v1834 = vpop.f32.mrf.mxu0
        %1835 = vdwg.mxu0
        %1836 = vmatpush.bf16.msra.mxu0 0
        %1837 = vmatpush.bf16.msra.mxu0 0
        %1838 = vmatpush.bf16.msra.mxu0 0
        %1839 = vmatpush.bf16.msra.mxu0 0
        %1840 = vmatpush.bf16.msra.mxu0 0
        %1841 = vmatpush.bf16.msra.mxu0 0
        %1842 = vmatpush.bf16.msra.mxu0 0
        %1843 = vmatpush.bf16.msra.mxu0 %v1818
        %1844 = vmatmul.bf16.gmra.mxu0 %v1812
        %v1845 = vpop.f32.mrf.mxu0
        %v1846 = vadd.f32 0.0, %v1845
        %v1847 = vpop.f32.mrf.mxu0
        %1848 = vdwg.mxu0
        %1849 = vmatpush.bf16.msra.mxu0 0
        %1850 = vmatpush.bf16.msra.mxu0 0
        %1851 = vmatpush.bf16.msra.mxu0 0
        %1852 = vmatpush.bf16.msra.mxu0 0
        %1853 = vmatpush.bf16.msra.mxu0 0
        %1854 = vmatpush.bf16.msra.mxu0 0
        %1855 = vmatpush.bf16.msra.mxu0 0
        %1856 = vmatpush.bf16.msra.mxu0 %v1821
        %1857 = vmatmul.bf16.gmra.mxu0 %v1812
        %v1858 = vpop.f32.mrf.mxu0
        %v1859 = vadd.f32 0.0, %v1858
        %v1860 = vpop.f32.mrf.mxu0
        %1861 = vdwg.mxu0
        %v1863 = vsel %vm432, %v1790, 0
        %v1866 = vsel %vm436, %v1800, 0
        %v1869 = vsel %vm436, %v1801, 0
        %v1872 = vsel %vm436, %v1802, 0
        %1874 = vmatpush.bf16.msra.mxu0 0
        %1875 = vmatpush.bf16.msra.mxu0 0
        %1876 = vmatpush.bf16.msra.mxu0 0
        %1877 = vmatpush.bf16.msra.mxu0 0
        %1878 = vmatpush.bf16.msra.mxu0 0
        %1879 = vmatpush.bf16.msra.mxu0 0
        %1880 = vmatpush.bf16.msra.mxu0 0
        %1881 = vmatpush.bf16.msra.mxu0 %v1866
        %1882 = vmatmul.bf16.gmra.mxu0 %v1863
        %v1883 = vpop.f32.mrf.mxu0
        %v1884 = vadd.f32 %v1833, %v1883
        %v1885 = vpop.f32.mrf.mxu0
        %1886 = vdwg.mxu0
        %1887 = vmatpush.bf16.msra.mxu0 0
        %1888 = vmatpush.bf16.msra.mxu0 0
        %1889 = vmatpush.bf16.msra.mxu0 0
        %1890 = vmatpush.bf16.msra.mxu0 0
        %1891 = vmatpush.bf16.msra.mxu0 0
        %1892 = vmatpush.bf16.msra.mxu0 0
        %1893 = vmatpush.bf16.msra.mxu0 0
        %1894 = vmatpush.bf16.msra.mxu0 %v1869
        %1895 = vmatmul.bf16.gmra.mxu0 %v1863
        %v1896 = vpop.f32.mrf.mxu0
        %v1897 = vadd.f32 %v1846, %v1896
        %v1898 = vpop.f32.mrf.mxu0
        %1899 = vdwg.mxu0
        %1900 = vmatpush.bf16.msra.mxu0 0
        %1901 = vmatpush.bf16.msra.mxu0 0
        %1902 = vmatpush.bf16.msra.mxu0 0
        %1903 = vmatpush.bf16.msra.mxu0 0
        %1904 = vmatpush.bf16.msra.mxu0 0
        %1905 = vmatpush.bf16.msra.mxu0 0
        %1906 = vmatpush.bf16.msra.mxu0 0
        %1907 = vmatpush.bf16.msra.mxu0 %v1872
        %1908 = vmatmul.bf16.gmra.mxu0 %v1863
        %v1909 = vpop.f32.mrf.mxu0
        %v1910 = vadd.f32 %v1859, %v1909
        %v1911 = vpop.f32.mrf.mxu0
        %1912 = vdwg.mxu0
        %s1913 = scalar_lea.vmem %s6, 4
        %v1914 = vld [vmem:[%s1913] sm:$0x3]
        %1915 = vrot.lane.b32.xlu0 %v1800, 126
        %v1916 = vpop.permute.xlu0 %1915
        %1917 = vrot.lane.b32.xlu0 %v1801, 126
        %v1918 = vpop.permute.xlu0 %1917
        %1919 = vrot.lane.b32.xlu0 %v1802, 126
        %v1920 = vpop.permute.xlu0 %1919
        %v1921 = vsel %vm544, %v1916, %v1918
        %v1922 = vsel %vm544, %v1918, %v1920
        %v1924 = vsel %vm432, %v1914, 0
        %v1927 = vsel %vm436, %v1921, 0
        %v1930 = vsel %vm436, %v1922, 0
        %v1933 = vsel %vm436, %v1920, 0
        %1935 = vmatpush.bf16.msra.mxu0 0
        %1936 = vmatpush.bf16.msra.mxu0 0
        %1937 = vmatpush.bf16.msra.mxu0 0
        %1938 = vmatpush.bf16.msra.mxu0 0
        %1939 = vmatpush.bf16.msra.mxu0 0
        %1940 = vmatpush.bf16.msra.mxu0 0
        %1941 = vmatpush.bf16.msra.mxu0 0
        %1942 = vmatpush.bf16.msra.mxu0 %v1927
        %1943 = vmatmul.bf16.gmra.mxu0 %v1924
        %v1944 = vpop.f32.mrf.mxu0
        %v1945 = vadd.f32 0.0, %v1944
        %v1946 = vpop.f32.mrf.mxu0
        %1947 = vdwg.mxu0
        %1948 = vmatpush.bf16.msra.mxu0 0
        %1949 = vmatpush.bf16.msra.mxu0 0
        %1950 = vmatpush.bf16.msra.mxu0 0
        %1951 = vmatpush.bf16.msra.mxu0 0
        %1952 = vmatpush.bf16.msra.mxu0 0
        %1953 = vmatpush.bf16.msra.mxu0 0
        %1954 = vmatpush.bf16.msra.mxu0 0
        %1955 = vmatpush.bf16.msra.mxu0 %v1930
        %1956 = vmatmul.bf16.gmra.mxu0 %v1924
        %v1957 = vpop.f32.mrf.mxu0
        %v1958 = vadd.f32 0.0, %v1957
        %v1959 = vpop.f32.mrf.mxu0
        %1960 = vdwg.mxu0
        %1961 = vmatpush.bf16.msra.mxu0 0
        %1962 = vmatpush.bf16.msra.mxu0 0
        %1963 = vmatpush.bf16.msra.mxu0 0
        %1964 = vmatpush.bf16.msra.mxu0 0
        %1965 = vmatpush.bf16.msra.mxu0 0
        %1966 = vmatpush.bf16.msra.mxu0 0
        %1967 = vmatpush.bf16.msra.mxu0 0
        %1968 = vmatpush.bf16.msra.mxu0 %v1933
        %1969 = vmatmul.bf16.gmra.mxu0 %v1924
        %v1970 = vpop.f32.mrf.mxu0
        %v1971 = vadd.f32 0.0, %v1970
        %v1972 = vpop.f32.mrf.mxu0
        %1973 = vdwg.mxu0
        %v1974 = vadd.f32 %v1884, %v1945
        %v1975 = vadd.f32 %v1897, %v1958
        %v1976 = vadd.f32 %v1910, %v1971
        %s1977 = scalar_lea.vmem %s6, 6
        %v1978 = vld [vmem:[%s1977] sm:$0x3]
        %1979 = vrot.lane.b32.xlu0 %v1800, 110
        %v1980 = vpop.permute.xlu0 %1979
        %1981 = vrot.lane.b32.xlu0 %v1801, 110
        %v1982 = vpop.permute.xlu0 %1981
        %1983 = vrot.lane.b32.xlu0 %v1802, 110
        %v1984 = vpop.permute.xlu0 %1983
        %v1985 = vsel %vm609, %v1980, %v1982
        %v1986 = vsel %vm609, %v1982, %v1984
        %v1988 = vsel %vm432, %v1978, 0
        %v1991 = vsel %vm436, %v1985, 0
        %v1994 = vsel %vm436, %v1986, 0
        %v1997 = vsel %vm436, %v1984, 0
        %1999 = vmatpush.bf16.msra.mxu0 0
        %2000 = vmatpush.bf16.msra.mxu0 0
        %2001 = vmatpush.bf16.msra.mxu0 0
        %2002 = vmatpush.bf16.msra.mxu0 0
        %2003 = vmatpush.bf16.msra.mxu0 0
        %2004 = vmatpush.bf16.msra.mxu0 0
        %2005 = vmatpush.bf16.msra.mxu0 0
        %2006 = vmatpush.bf16.msra.mxu0 %v1991
        %2007 = vmatmul.bf16.gmra.mxu0 %v1988
        %v2008 = vpop.f32.mrf.mxu0
        %v2009 = vadd.f32 0.0, %v2008
        %v2010 = vpop.f32.mrf.mxu0
        %2011 = vdwg.mxu0
        %2012 = vmatpush.bf16.msra.mxu0 0
        %2013 = vmatpush.bf16.msra.mxu0 0
        %2014 = vmatpush.bf16.msra.mxu0 0
        %2015 = vmatpush.bf16.msra.mxu0 0
        %2016 = vmatpush.bf16.msra.mxu0 0
        %2017 = vmatpush.bf16.msra.mxu0 0
        %2018 = vmatpush.bf16.msra.mxu0 0
        %2019 = vmatpush.bf16.msra.mxu0 %v1994
        %2020 = vmatmul.bf16.gmra.mxu0 %v1988
        %v2021 = vpop.f32.mrf.mxu0
        %v2022 = vadd.f32 0.0, %v2021
        %v2023 = vpop.f32.mrf.mxu0
        %2024 = vdwg.mxu0
        %2025 = vmatpush.bf16.msra.mxu0 0
        %2026 = vmatpush.bf16.msra.mxu0 0
        %2027 = vmatpush.bf16.msra.mxu0 0
        %2028 = vmatpush.bf16.msra.mxu0 0
        %2029 = vmatpush.bf16.msra.mxu0 0
        %2030 = vmatpush.bf16.msra.mxu0 0
        %2031 = vmatpush.bf16.msra.mxu0 0
        %2032 = vmatpush.bf16.msra.mxu0 %v1997
        %2033 = vmatmul.bf16.gmra.mxu0 %v1988
        %v2034 = vpop.f32.mrf.mxu0
        %v2035 = vadd.f32 0.0, %v2034
        %v2036 = vpop.f32.mrf.mxu0
        %2037 = vdwg.mxu0
        %v2038 = vadd.f32 %v1974, %v2009
        %v2039 = vadd.f32 %v1975, %v2022
        %v2040 = vadd.f32 %v1976, %v2035
        %s2041 = scalar_lea.vmem %s6, 8
        %v2042 = vld [vmem:[%s2041] sm:$0x3]
        %2043 = vrot.lane.b32.xlu0 %v1800, 109
        %v2044 = vpop.permute.xlu0 %2043
        %2045 = vrot.lane.b32.xlu0 %v1801, 109
        %v2046 = vpop.permute.xlu0 %2045
        %2047 = vrot.lane.b32.xlu0 %v1802, 109
        %v2048 = vpop.permute.xlu0 %2047
        %v2049 = vsel %vm674, %v2044, %v2046
        %v2050 = vsel %vm674, %v2046, %v2048
        %v2052 = vsel %vm432, %v2042, 0
        %v2055 = vsel %vm436, %v2049, 0
        %v2058 = vsel %vm436, %v2050, 0
        %v2061 = vsel %vm436, %v2048, 0
        %2063 = vmatpush.bf16.msra.mxu0 0
        %2064 = vmatpush.bf16.msra.mxu0 0
        %2065 = vmatpush.bf16.msra.mxu0 0
        %2066 = vmatpush.bf16.msra.mxu0 0
        %2067 = vmatpush.bf16.msra.mxu0 0
        %2068 = vmatpush.bf16.msra.mxu0 0
        %2069 = vmatpush.bf16.msra.mxu0 0
        %2070 = vmatpush.bf16.msra.mxu0 %v2055
        %2071 = vmatmul.bf16.gmra.mxu0 %v2052
        %v2072 = vpop.f32.mrf.mxu0
        %v2073 = vadd.f32 0.0, %v2072
        %v2074 = vpop.f32.mrf.mxu0
        %2075 = vdwg.mxu0
        %2076 = vmatpush.bf16.msra.mxu0 0
        %2077 = vmatpush.bf16.msra.mxu0 0
        %2078 = vmatpush.bf16.msra.mxu0 0
        %2079 = vmatpush.bf16.msra.mxu0 0
        %2080 = vmatpush.bf16.msra.mxu0 0
        %2081 = vmatpush.bf16.msra.mxu0 0
        %2082 = vmatpush.bf16.msra.mxu0 0
        %2083 = vmatpush.bf16.msra.mxu0 %v2058
        %2084 = vmatmul.bf16.gmra.mxu0 %v2052
        %v2085 = vpop.f32.mrf.mxu0
        %v2086 = vadd.f32 0.0, %v2085
        %v2087 = vpop.f32.mrf.mxu0
        %2088 = vdwg.mxu0
        %2089 = vmatpush.bf16.msra.mxu0 0
        %2090 = vmatpush.bf16.msra.mxu0 0
        %2091 = vmatpush.bf16.msra.mxu0 0
        %2092 = vmatpush.bf16.msra.mxu0 0
        %2093 = vmatpush.bf16.msra.mxu0 0
        %2094 = vmatpush.bf16.msra.mxu0 0
        %2095 = vmatpush.bf16.msra.mxu0 0
        %2096 = vmatpush.bf16.msra.mxu0 %v2061
        %2097 = vmatmul.bf16.gmra.mxu0 %v2052
        %v2098 = vpop.f32.mrf.mxu0
        %v2099 = vadd.f32 0.0, %v2098
        %v2100 = vpop.f32.mrf.mxu0
        %2101 = vdwg.mxu0
        %v2102 = vadd.f32 %v2038, %v2073
        %v2103 = vadd.f32 %v2039, %v2086
        %v2104 = vadd.f32 %v2040, %v2099
        %s2105 = scalar_lea.vmem %s6, 10
        %v2106 = vld [vmem:[%s2105] sm:$0x3]
        %2107 = vrot.lane.b32.xlu0 %v1800, 108
        %v2108 = vpop.permute.xlu0 %2107
        %2109 = vrot.lane.b32.xlu0 %v1801, 108
        %v2110 = vpop.permute.xlu0 %2109
        %2111 = vrot.lane.b32.xlu0 %v1802, 108
        %v2112 = vpop.permute.xlu0 %2111
        %v2113 = vsel %vm739, %v2108, %v2110
        %v2114 = vsel %vm739, %v2110, %v2112
        %v2116 = vsel %vm432, %v2106, 0
        %v2119 = vsel %vm436, %v2113, 0
        %v2122 = vsel %vm436, %v2114, 0
        %v2125 = vsel %vm436, %v2112, 0
        %2127 = vmatpush.bf16.msra.mxu0 0
        %2128 = vmatpush.bf16.msra.mxu0 0
        %2129 = vmatpush.bf16.msra.mxu0 0
        %2130 = vmatpush.bf16.msra.mxu0 0
        %2131 = vmatpush.bf16.msra.mxu0 0
        %2132 = vmatpush.bf16.msra.mxu0 0
        %2133 = vmatpush.bf16.msra.mxu0 0
        %2134 = vmatpush.bf16.msra.mxu0 %v2119
        %2135 = vmatmul.bf16.gmra.mxu0 %v2116
        %v2136 = vpop.f32.mrf.mxu0
        %v2137 = vadd.f32 0.0, %v2136
        %v2138 = vpop.f32.mrf.mxu0
        %2139 = vdwg.mxu0
        %2140 = vmatpush.bf16.msra.mxu0 0
        %2141 = vmatpush.bf16.msra.mxu0 0
        %2142 = vmatpush.bf16.msra.mxu0 0
        %2143 = vmatpush.bf16.msra.mxu0 0
        %2144 = vmatpush.bf16.msra.mxu0 0
        %2145 = vmatpush.bf16.msra.mxu0 0
        %2146 = vmatpush.bf16.msra.mxu0 0
        %2147 = vmatpush.bf16.msra.mxu0 %v2122
        %2148 = vmatmul.bf16.gmra.mxu0 %v2116
        %v2149 = vpop.f32.mrf.mxu0
        %v2150 = vadd.f32 0.0, %v2149
        %v2151 = vpop.f32.mrf.mxu0
        %2152 = vdwg.mxu0
        %2153 = vmatpush.bf16.msra.mxu0 0
        %2154 = vmatpush.bf16.msra.mxu0 0
        %2155 = vmatpush.bf16.msra.mxu0 0
        %2156 = vmatpush.bf16.msra.mxu0 0
        %2157 = vmatpush.bf16.msra.mxu0 0
        %2158 = vmatpush.bf16.msra.mxu0 0
        %2159 = vmatpush.bf16.msra.mxu0 0
        %2160 = vmatpush.bf16.msra.mxu0 %v2125
        %2161 = vmatmul.bf16.gmra.mxu0 %v2116
        %v2162 = vpop.f32.mrf.mxu0
        %v2163 = vadd.f32 0.0, %v2162
        %v2164 = vpop.f32.mrf.mxu0
        %2165 = vdwg.mxu0
        %v2166 = vadd.f32 %v2102, %v2137
        %v2167 = vadd.f32 %v2103, %v2150
        %v2168 = vadd.f32 %v2104, %v2163
        %s2169 = scalar_lea.vmem %s6, 12
        %v2170 = vld [vmem:[%s2169] sm:$0x3]
        %2171 = vrot.lane.b32.xlu0 %v1800, 92
        %v2172 = vpop.permute.xlu0 %2171
        %2173 = vrot.lane.b32.xlu0 %v1801, 92
        %v2174 = vpop.permute.xlu0 %2173
        %2175 = vrot.lane.b32.xlu0 %v1802, 92
        %v2176 = vpop.permute.xlu0 %2175
        %v2177 = vsel %vm804, %v2172, %v2174
        %v2178 = vsel %vm804, %v2174, %v2176
        %v2180 = vsel %vm432, %v2170, 0
        %v2183 = vsel %vm436, %v2177, 0
        %v2186 = vsel %vm436, %v2178, 0
        %v2189 = vsel %vm436, %v2176, 0
        %2191 = vmatpush.bf16.msra.mxu0 0
        %2192 = vmatpush.bf16.msra.mxu0 0
        %2193 = vmatpush.bf16.msra.mxu0 0
        %2194 = vmatpush.bf16.msra.mxu0 0
        %2195 = vmatpush.bf16.msra.mxu0 0
        %2196 = vmatpush.bf16.msra.mxu0 0
        %2197 = vmatpush.bf16.msra.mxu0 0
        %2198 = vmatpush.bf16.msra.mxu0 %v2183
        %2199 = vmatmul.bf16.gmra.mxu0 %v2180
        %v2200 = vpop.f32.mrf.mxu0
        %v2201 = vadd.f32 0.0, %v2200
        %v2202 = vpop.f32.mrf.mxu0
        %2203 = vdwg.mxu0
        %2204 = vmatpush.bf16.msra.mxu0 0
        %2205 = vmatpush.bf16.msra.mxu0 0
        %2206 = vmatpush.bf16.msra.mxu0 0
        %2207 = vmatpush.bf16.msra.mxu0 0
        %2208 = vmatpush.bf16.msra.mxu0 0
        %2209 = vmatpush.bf16.msra.mxu0 0
        %2210 = vmatpush.bf16.msra.mxu0 0
        %2211 = vmatpush.bf16.msra.mxu0 %v2186
        %2212 = vmatmul.bf16.gmra.mxu0 %v2180
        %v2213 = vpop.f32.mrf.mxu0
        %v2214 = vadd.f32 0.0, %v2213
        %v2215 = vpop.f32.mrf.mxu0
        %2216 = vdwg.mxu0
        %2217 = vmatpush.bf16.msra.mxu0 0
        %2218 = vmatpush.bf16.msra.mxu0 0
        %2219 = vmatpush.bf16.msra.mxu0 0
        %2220 = vmatpush.bf16.msra.mxu0 0
        %2221 = vmatpush.bf16.msra.mxu0 0
        %2222 = vmatpush.bf16.msra.mxu0 0
        %2223 = vmatpush.bf16.msra.mxu0 0
        %2224 = vmatpush.bf16.msra.mxu0 %v2189
        %2225 = vmatmul.bf16.gmra.mxu0 %v2180
        %v2226 = vpop.f32.mrf.mxu0
        %v2227 = vadd.f32 0.0, %v2226
        %v2228 = vpop.f32.mrf.mxu0
        %2229 = vdwg.mxu0
        %v2230 = vadd.f32 %v2166, %v2201
        %v2231 = vadd.f32 %v2167, %v2214
        %v2232 = vadd.f32 %v2168, %v2227
        %s2233 = scalar_lea.vmem %s6, 14
        %v2234 = vld [vmem:[%s2233] sm:$0x3]
        %2235 = vrot.lane.b32.xlu0 %v1800, 91
        %v2236 = vpop.permute.xlu0 %2235
        %2237 = vrot.lane.b32.xlu0 %v1801, 91
        %v2238 = vpop.permute.xlu0 %2237
        %2239 = vrot.lane.b32.xlu0 %v1802, 91
        %v2240 = vpop.permute.xlu0 %2239
        %v2241 = vsel %vm869, %v2236, %v2238
        %v2242 = vsel %vm869, %v2238, %v2240
        %v2244 = vsel %vm432, %v2234, 0
        %v2247 = vsel %vm436, %v2241, 0
        %v2250 = vsel %vm436, %v2242, 0
        %v2253 = vsel %vm436, %v2240, 0
        %2255 = vmatpush.bf16.msra.mxu0 0
        %2256 = vmatpush.bf16.msra.mxu0 0
        %2257 = vmatpush.bf16.msra.mxu0 0
        %2258 = vmatpush.bf16.msra.mxu0 0
        %2259 = vmatpush.bf16.msra.mxu0 0
        %2260 = vmatpush.bf16.msra.mxu0 0
        %2261 = vmatpush.bf16.msra.mxu0 0
        %2262 = vmatpush.bf16.msra.mxu0 %v2247
        %2263 = vmatmul.bf16.gmra.mxu0 %v2244
        %v2264 = vpop.f32.mrf.mxu0
        %v2265 = vadd.f32 0.0, %v2264
        %v2266 = vpop.f32.mrf.mxu0
        %2267 = vdwg.mxu0
        %2268 = vmatpush.bf16.msra.mxu0 0
        %2269 = vmatpush.bf16.msra.mxu0 0
        %2270 = vmatpush.bf16.msra.mxu0 0
        %2271 = vmatpush.bf16.msra.mxu0 0
        %2272 = vmatpush.bf16.msra.mxu0 0
        %2273 = vmatpush.bf16.msra.mxu0 0
        %2274 = vmatpush.bf16.msra.mxu0 0
        %2275 = vmatpush.bf16.msra.mxu0 %v2250
        %2276 = vmatmul.bf16.gmra.mxu0 %v2244
        %v2277 = vpop.f32.mrf.mxu0
        %v2278 = vadd.f32 0.0, %v2277
        %v2279 = vpop.f32.mrf.mxu0
        %2280 = vdwg.mxu0
        %2281 = vmatpush.bf16.msra.mxu0 0
        %2282 = vmatpush.bf16.msra.mxu0 0
        %2283 = vmatpush.bf16.msra.mxu0 0
        %2284 = vmatpush.bf16.msra.mxu0 0
        %2285 = vmatpush.bf16.msra.mxu0 0
        %2286 = vmatpush.bf16.msra.mxu0 0
        %2287 = vmatpush.bf16.msra.mxu0 0
        %2288 = vmatpush.bf16.msra.mxu0 %v2253
        %2289 = vmatmul.bf16.gmra.mxu0 %v2244
        %v2290 = vpop.f32.mrf.mxu0
        %v2291 = vadd.f32 0.0, %v2290
        %v2292 = vpop.f32.mrf.mxu0
        %2293 = vdwg.mxu0
        %v2294 = vadd.f32 %v2230, %v2265
        %v2295 = vadd.f32 %v2231, %v2278
        %v2296 = vadd.f32 %v2232, %v2291
        %s2297 = scalar_lea.vmem %s6, 16
        %v2298 = vld [vmem:[%s2297] sm:$0x3]
        %2299 = vrot.lane.b32.xlu0 %v1800, 90
        %v2300 = vpop.permute.xlu0 %2299
        %2301 = vrot.lane.b32.xlu0 %v1801, 90
        %v2302 = vpop.permute.xlu0 %2301
        %2303 = vrot.lane.b32.xlu0 %v1802, 90
        %v2304 = vpop.permute.xlu0 %2303
        %v2305 = vsel %vm934, %v2300, %v2302
        %v2306 = vsel %vm934, %v2302, %v2304
        %v2308 = vsel %vm432, %v2298, 0
        %v2311 = vsel %vm436, %v2305, 0
        %v2314 = vsel %vm436, %v2306, 0
        %v2317 = vsel %vm436, %v2304, 0
        %2319 = vmatpush.bf16.msra.mxu0 0
        %2320 = vmatpush.bf16.msra.mxu0 0
        %2321 = vmatpush.bf16.msra.mxu0 0
        %2322 = vmatpush.bf16.msra.mxu0 0
        %2323 = vmatpush.bf16.msra.mxu0 0
        %2324 = vmatpush.bf16.msra.mxu0 0
        %2325 = vmatpush.bf16.msra.mxu0 0
        %2326 = vmatpush.bf16.msra.mxu0 %v2311
        %2327 = vmatmul.bf16.gmra.mxu0 %v2308
        %v2328 = vpop.f32.mrf.mxu0
        %v2329 = vadd.f32 0.0, %v2328
        %v2330 = vpop.f32.mrf.mxu0
        %2331 = vdwg.mxu0
        %2332 = vmatpush.bf16.msra.mxu0 0
        %2333 = vmatpush.bf16.msra.mxu0 0
        %2334 = vmatpush.bf16.msra.mxu0 0
        %2335 = vmatpush.bf16.msra.mxu0 0
        %2336 = vmatpush.bf16.msra.mxu0 0
        %2337 = vmatpush.bf16.msra.mxu0 0
        %2338 = vmatpush.bf16.msra.mxu0 0
        %2339 = vmatpush.bf16.msra.mxu0 %v2314
        %2340 = vmatmul.bf16.gmra.mxu0 %v2308
        %v2341 = vpop.f32.mrf.mxu0
        %v2342 = vadd.f32 0.0, %v2341
        %v2343 = vpop.f32.mrf.mxu0
        %2344 = vdwg.mxu0
        %2345 = vmatpush.bf16.msra.mxu0 0
        %2346 = vmatpush.bf16.msra.mxu0 0
        %2347 = vmatpush.bf16.msra.mxu0 0
        %2348 = vmatpush.bf16.msra.mxu0 0
        %2349 = vmatpush.bf16.msra.mxu0 0
        %2350 = vmatpush.bf16.msra.mxu0 0
        %2351 = vmatpush.bf16.msra.mxu0 0
        %2352 = vmatpush.bf16.msra.mxu0 %v2317
        %2353 = vmatmul.bf16.gmra.mxu0 %v2308
        %v2354 = vpop.f32.mrf.mxu0
        %v2355 = vadd.f32 0.0, %v2354
        %v2356 = vpop.f32.mrf.mxu0
        %2357 = vdwg.mxu0
        %v2358 = vadd.f32 %v2294, %v2329
        %v2359 = vadd.f32 %v2295, %v2342
        %v2360 = vadd.f32 %v2296, %v2355
        %s2361 = sld [smem:[#allocation3 + $0x2]]
        %vm2362 = vcmp.gt.f32.partialorder %v2358, 0.0
        %vm2363 = vcmp.gt.f32.partialorder %v2359, 0.0
        %vm2364 = vcmp.gt.f32.partialorder %v2360, 0.0
        %v2365 = vstv %s2361
        %v2366 = vmul.f32 %v2365, %v2358
        %v2367 = vmul.f32 %v2365, %v2359
        %v2368 = vmul.f32 %v2365, %v2360
        %v2369 = vsel %vm2362, %v2358, %v2366
        %v2370 = vsel %vm2363, %v2359, %v2367
        %v2371 = vsel %vm2364, %v2360, %v2368
        %v2372 = vmul.f32 %v2369, %v377
        %v2373 = vmul.f32 %v2370, %v378
        %v2374 = vmul.f32 %v2371, %v379
        %v2375 = vpack.c.bf16 %v2373, %v2372
        %v2376 = vpack.c.bf16 %v2374, %v2374
        %v2379 = vrot.slane %v2375, 6
        %v2380 = vrot.slane %v2376, 6
        %2381 = vrot.lane.b32.xlu0 %v2379, 19
        %v2382 = vpop.permute.xlu0 %2381
        %2383 = vrot.lane.b32.xlu0 %v2380, 19
        %v2384 = vpop.permute.xlu0 %2383
        %v2385 = vrot.slane %v2382, 4
        %v2386 = vsel %vm1016, %v2385, %v2382
        %v2387 = vsel %vm1016, %v2385, %v2384
        %2390 = vst.msk [vmem:[#allocation2] sm:$0xcc] %vm1023, %v2386
        %2391 = vst.msk [vmem:[#allocation2 + $0x8] sm:$0xc] %vm1025, %v2387
        %v2392 = vld [vmem:[%s7] sm:$0x3]
        %v2393 = vld [vmem:[#allocation2] sm:$0xff]
        %v2394 = vld [vmem:[#allocation2 + $0x8] sm:$0xf]
        %s2395 = scalar_lea.vmem %s7, 2
        %v2396 = vld [vmem:[%s2395] sm:$0x3]
        %v2399 = vunpack.c.l.b16 %v2393
        %v2400 = vunpack.c.h.b16 %v2393
        %v2401 = vunpack.c.l.b16 %v2394
        %v2402 = vpack.c.b16 %v2399, %v2399
        %v2403 = vpack.c.b16 %v2400, %v2400
        %v2404 = vpack.c.b16 %v2401, %v2401
        %2405 = vrot.lane.b32.xlu0 %v2402, 127
        %v2406 = vpop.permute.xlu0 %2405
        %2407 = vrot.lane.b32.xlu0 %v2403, 127
        %v2408 = vpop.permute.xlu0 %2407
        %2409 = vrot.lane.b32.xlu0 %v2404, 127
        %v2410 = vpop.permute.xlu0 %2409
        %v2411 = vsel %vm429, %v2406, %v2408
        %v2412 = vsel %vm429, %v2408, %v2410
        %v2414 = vsel %vm1048, %v2396, 0
        %v2417 = vsel %vm1052, %v2411, 0
        %v2420 = vsel %vm1052, %v2412, 0
        %v2423 = vsel %vm1052, %v2410, 0
        %2425 = vmatpush.bf16.msra.mxu0 0
        %2426 = vmatpush.bf16.msra.mxu0 0
        %2427 = vmatpush.bf16.msra.mxu0 0
        %2428 = vmatpush.bf16.msra.mxu0 0
        %2429 = vmatpush.bf16.msra.mxu0 0
        %2430 = vmatpush.bf16.msra.mxu0 0
        %2431 = vmatpush.bf16.msra.mxu0 0
        %2432 = vmatpush.bf16.msra.mxu0 %v2417
        %2433 = vmatmul.bf16.gmra.mxu0 %v2414
        %v2434 = vpop.f32.mrf.mxu0
        %v2435 = vadd.f32 0.0, %v2434
        %v2436 = vpop.f32.mrf.mxu0
        %2437 = vdwg.mxu0
        %2438 = vmatpush.bf16.msra.mxu0 0
        %2439 = vmatpush.bf16.msra.mxu0 0
        %2440 = vmatpush.bf16.msra.mxu0 0
        %2441 = vmatpush.bf16.msra.mxu0 0
        %2442 = vmatpush.bf16.msra.mxu0 0
        %2443 = vmatpush.bf16.msra.mxu0 0
        %2444 = vmatpush.bf16.msra.mxu0 0
        %2445 = vmatpush.bf16.msra.mxu0 %v2420
        %2446 = vmatmul.bf16.gmra.mxu0 %v2414
        %v2447 = vpop.f32.mrf.mxu0
        %v2448 = vadd.f32 0.0, %v2447
        %v2449 = vpop.f32.mrf.mxu0
        %2450 = vdwg.mxu0
        %2451 = vmatpush.bf16.msra.mxu0 0
        %2452 = vmatpush.bf16.msra.mxu0 0
        %2453 = vmatpush.bf16.msra.mxu0 0
        %2454 = vmatpush.bf16.msra.mxu0 0
        %2455 = vmatpush.bf16.msra.mxu0 0
        %2456 = vmatpush.bf16.msra.mxu0 0
        %2457 = vmatpush.bf16.msra.mxu0 0
        %2458 = vmatpush.bf16.msra.mxu0 %v2423
        %2459 = vmatmul.bf16.gmra.mxu0 %v2414
        %v2460 = vpop.f32.mrf.mxu0
        %v2461 = vadd.f32 0.0, %v2460
        %v2462 = vpop.f32.mrf.mxu0
        %2463 = vdwg.mxu0
        %v2465 = vsel %vm1048, %v2392, 0
        %v2468 = vsel %vm1052, %v2402, 0
        %v2471 = vsel %vm1052, %v2403, 0
        %v2474 = vsel %vm1052, %v2404, 0
        %2476 = vmatpush.bf16.msra.mxu0 0
        %2477 = vmatpush.bf16.msra.mxu0 0
        %2478 = vmatpush.bf16.msra.mxu0 0
        %2479 = vmatpush.bf16.msra.mxu0 0
        %2480 = vmatpush.bf16.msra.mxu0 0
        %2481 = vmatpush.bf16.msra.mxu0 0
        %2482 = vmatpush.bf16.msra.mxu0 0
        %2483 = vmatpush.bf16.msra.mxu0 %v2468
        %2484 = vmatmul.bf16.gmra.mxu0 %v2465
        %v2485 = vpop.f32.mrf.mxu0
        %v2486 = vadd.f32 %v2435, %v2485
        %v2487 = vpop.f32.mrf.mxu0
        %2488 = vdwg.mxu0
        %2489 = vmatpush.bf16.msra.mxu0 0
        %2490 = vmatpush.bf16.msra.mxu0 0
        %2491 = vmatpush.bf16.msra.mxu0 0
        %2492 = vmatpush.bf16.msra.mxu0 0
        %2493 = vmatpush.bf16.msra.mxu0 0
        %2494 = vmatpush.bf16.msra.mxu0 0
        %2495 = vmatpush.bf16.msra.mxu0 0
        %2496 = vmatpush.bf16.msra.mxu0 %v2471
        %2497 = vmatmul.bf16.gmra.mxu0 %v2465
        %v2498 = vpop.f32.mrf.mxu0
        %v2499 = vadd.f32 %v2448, %v2498
        %v2500 = vpop.f32.mrf.mxu0
        %2501 = vdwg.mxu0
        %2502 = vmatpush.bf16.msra.mxu0 0
        %2503 = vmatpush.bf16.msra.mxu0 0
        %2504 = vmatpush.bf16.msra.mxu0 0
        %2505 = vmatpush.bf16.msra.mxu0 0
        %2506 = vmatpush.bf16.msra.mxu0 0
        %2507 = vmatpush.bf16.msra.mxu0 0
        %2508 = vmatpush.bf16.msra.mxu0 0
        %2509 = vmatpush.bf16.msra.mxu0 %v2474
        %2510 = vmatmul.bf16.gmra.mxu0 %v2465
        %v2511 = vpop.f32.mrf.mxu0
        %v2512 = vadd.f32 %v2461, %v2511
        %v2513 = vpop.f32.mrf.mxu0
        %2514 = vdwg.mxu0
        %s2515 = scalar_lea.vmem %s7, 4
        %v2516 = vld [vmem:[%s2515] sm:$0x3]
        %2517 = vrot.lane.b32.xlu0 %v2402, 126
        %v2518 = vpop.permute.xlu0 %2517
        %2519 = vrot.lane.b32.xlu0 %v2403, 126
        %v2520 = vpop.permute.xlu0 %2519
        %2521 = vrot.lane.b32.xlu0 %v2404, 126
        %v2522 = vpop.permute.xlu0 %2521
        %v2523 = vsel %vm544, %v2518, %v2520
        %v2524 = vsel %vm544, %v2520, %v2522
        %v2526 = vsel %vm1048, %v2516, 0
        %v2529 = vsel %vm1052, %v2523, 0
        %v2532 = vsel %vm1052, %v2524, 0
        %v2535 = vsel %vm1052, %v2522, 0
        %2537 = vmatpush.bf16.msra.mxu0 0
        %2538 = vmatpush.bf16.msra.mxu0 0
        %2539 = vmatpush.bf16.msra.mxu0 0
        %2540 = vmatpush.bf16.msra.mxu0 0
        %2541 = vmatpush.bf16.msra.mxu0 0
        %2542 = vmatpush.bf16.msra.mxu0 0
        %2543 = vmatpush.bf16.msra.mxu0 0
        %2544 = vmatpush.bf16.msra.mxu0 %v2529
        %2545 = vmatmul.bf16.gmra.mxu0 %v2526
        %v2546 = vpop.f32.mrf.mxu0
        %v2547 = vadd.f32 0.0, %v2546
        %v2548 = vpop.f32.mrf.mxu0
        %2549 = vdwg.mxu0
        %2550 = vmatpush.bf16.msra.mxu0 0
        %2551 = vmatpush.bf16.msra.mxu0 0
        %2552 = vmatpush.bf16.msra.mxu0 0
        %2553 = vmatpush.bf16.msra.mxu0 0
        %2554 = vmatpush.bf16.msra.mxu0 0
        %2555 = vmatpush.bf16.msra.mxu0 0
        %2556 = vmatpush.bf16.msra.mxu0 0
        %2557 = vmatpush.bf16.msra.mxu0 %v2532
        %2558 = vmatmul.bf16.gmra.mxu0 %v2526
        %v2559 = vpop.f32.mrf.mxu0
        %v2560 = vadd.f32 0.0, %v2559
        %v2561 = vpop.f32.mrf.mxu0
        %2562 = vdwg.mxu0
        %2563 = vmatpush.bf16.msra.mxu0 0
        %2564 = vmatpush.bf16.msra.mxu0 0
        %2565 = vmatpush.bf16.msra.mxu0 0
        %2566 = vmatpush.bf16.msra.mxu0 0
        %2567 = vmatpush.bf16.msra.mxu0 0
        %2568 = vmatpush.bf16.msra.mxu0 0
        %2569 = vmatpush.bf16.msra.mxu0 0
        %2570 = vmatpush.bf16.msra.mxu0 %v2535
        %2571 = vmatmul.bf16.gmra.mxu0 %v2526
        %v2572 = vpop.f32.mrf.mxu0
        %v2573 = vadd.f32 0.0, %v2572
        %v2574 = vpop.f32.mrf.mxu0
        %2575 = vdwg.mxu0
        %v2576 = vadd.f32 %v2486, %v2547
        %v2577 = vadd.f32 %v2499, %v2560
        %v2578 = vadd.f32 %v2512, %v2573
        %s2579 = scalar_lea.vmem %s7, 6
        %v2580 = vld [vmem:[%s2579] sm:$0x3]
        %2581 = vrot.lane.b32.xlu0 %v2402, 110
        %v2582 = vpop.permute.xlu0 %2581
        %2583 = vrot.lane.b32.xlu0 %v2403, 110
        %v2584 = vpop.permute.xlu0 %2583
        %2585 = vrot.lane.b32.xlu0 %v2404, 110
        %v2586 = vpop.permute.xlu0 %2585
        %v2587 = vsel %vm609, %v2582, %v2584
        %v2588 = vsel %vm609, %v2584, %v2586
        %v2590 = vsel %vm1048, %v2580, 0
        %v2593 = vsel %vm1052, %v2587, 0
        %v2596 = vsel %vm1052, %v2588, 0
        %v2599 = vsel %vm1052, %v2586, 0
        %2601 = vmatpush.bf16.msra.mxu0 0
        %2602 = vmatpush.bf16.msra.mxu0 0
        %2603 = vmatpush.bf16.msra.mxu0 0
        %2604 = vmatpush.bf16.msra.mxu0 0
        %2605 = vmatpush.bf16.msra.mxu0 0
        %2606 = vmatpush.bf16.msra.mxu0 0
        %2607 = vmatpush.bf16.msra.mxu0 0
        %2608 = vmatpush.bf16.msra.mxu0 %v2593
        %2609 = vmatmul.bf16.gmra.mxu0 %v2590
        %v2610 = vpop.f32.mrf.mxu0
        %v2611 = vadd.f32 0.0, %v2610
        %v2612 = vpop.f32.mrf.mxu0
        %2613 = vdwg.mxu0
        %2614 = vmatpush.bf16.msra.mxu0 0
        %2615 = vmatpush.bf16.msra.mxu0 0
        %2616 = vmatpush.bf16.msra.mxu0 0
        %2617 = vmatpush.bf16.msra.mxu0 0
        %2618 = vmatpush.bf16.msra.mxu0 0
        %2619 = vmatpush.bf16.msra.mxu0 0
        %2620 = vmatpush.bf16.msra.mxu0 0
        %2621 = vmatpush.bf16.msra.mxu0 %v2596
        %2622 = vmatmul.bf16.gmra.mxu0 %v2590
        %v2623 = vpop.f32.mrf.mxu0
        %v2624 = vadd.f32 0.0, %v2623
        %v2625 = vpop.f32.mrf.mxu0
        %2626 = vdwg.mxu0
        %2627 = vmatpush.bf16.msra.mxu0 0
        %2628 = vmatpush.bf16.msra.mxu0 0
        %2629 = vmatpush.bf16.msra.mxu0 0
        %2630 = vmatpush.bf16.msra.mxu0 0
        %2631 = vmatpush.bf16.msra.mxu0 0
        %2632 = vmatpush.bf16.msra.mxu0 0
        %2633 = vmatpush.bf16.msra.mxu0 0
        %2634 = vmatpush.bf16.msra.mxu0 %v2599
        %2635 = vmatmul.bf16.gmra.mxu0 %v2590
        %v2636 = vpop.f32.mrf.mxu0
        %v2637 = vadd.f32 0.0, %v2636
        %v2638 = vpop.f32.mrf.mxu0
        %2639 = vdwg.mxu0
        %v2640 = vadd.f32 %v2576, %v2611
        %v2641 = vadd.f32 %v2577, %v2624
        %v2642 = vadd.f32 %v2578, %v2637
        %s2643 = scalar_lea.vmem %s7, 8
        %v2644 = vld [vmem:[%s2643] sm:$0x3]
        %2645 = vrot.lane.b32.xlu0 %v2402, 109
        %v2646 = vpop.permute.xlu0 %2645
        %2647 = vrot.lane.b32.xlu0 %v2403, 109
        %v2648 = vpop.permute.xlu0 %2647
        %2649 = vrot.lane.b32.xlu0 %v2404, 109
        %v2650 = vpop.permute.xlu0 %2649
        %v2651 = vsel %vm674, %v2646, %v2648
        %v2652 = vsel %vm674, %v2648, %v2650
        %v2654 = vsel %vm1048, %v2644, 0
        %v2657 = vsel %vm1052, %v2651, 0
        %v2660 = vsel %vm1052, %v2652, 0
        %v2663 = vsel %vm1052, %v2650, 0
        %2665 = vmatpush.bf16.msra.mxu0 0
        %2666 = vmatpush.bf16.msra.mxu0 0
        %2667 = vmatpush.bf16.msra.mxu0 0
        %2668 = vmatpush.bf16.msra.mxu0 0
        %2669 = vmatpush.bf16.msra.mxu0 0
        %2670 = vmatpush.bf16.msra.mxu0 0
        %2671 = vmatpush.bf16.msra.mxu0 0
        %2672 = vmatpush.bf16.msra.mxu0 %v2657
        %2673 = vmatmul.bf16.gmra.mxu0 %v2654
        %v2674 = vpop.f32.mrf.mxu0
        %v2675 = vadd.f32 0.0, %v2674
        %v2676 = vpop.f32.mrf.mxu0
        %2677 = vdwg.mxu0
        %2678 = vmatpush.bf16.msra.mxu0 0
        %2679 = vmatpush.bf16.msra.mxu0 0
        %2680 = vmatpush.bf16.msra.mxu0 0
        %2681 = vmatpush.bf16.msra.mxu0 0
        %2682 = vmatpush.bf16.msra.mxu0 0
        %2683 = vmatpush.bf16.msra.mxu0 0
        %2684 = vmatpush.bf16.msra.mxu0 0
        %2685 = vmatpush.bf16.msra.mxu0 %v2660
        %2686 = vmatmul.bf16.gmra.mxu0 %v2654
        %v2687 = vpop.f32.mrf.mxu0
        %v2688 = vadd.f32 0.0, %v2687
        %v2689 = vpop.f32.mrf.mxu0
        %2690 = vdwg.mxu0
        %2691 = vmatpush.bf16.msra.mxu0 0
        %2692 = vmatpush.bf16.msra.mxu0 0
        %2693 = vmatpush.bf16.msra.mxu0 0
        %2694 = vmatpush.bf16.msra.mxu0 0
        %2695 = vmatpush.bf16.msra.mxu0 0
        %2696 = vmatpush.bf16.msra.mxu0 0
        %2697 = vmatpush.bf16.msra.mxu0 0
        %2698 = vmatpush.bf16.msra.mxu0 %v2663
        %2699 = vmatmul.bf16.gmra.mxu0 %v2654
        %v2700 = vpop.f32.mrf.mxu0
        %v2701 = vadd.f32 0.0, %v2700
        %v2702 = vpop.f32.mrf.mxu0
        %2703 = vdwg.mxu0
        %v2704 = vadd.f32 %v2640, %v2675
        %v2705 = vadd.f32 %v2641, %v2688
        %v2706 = vadd.f32 %v2642, %v2701
        %s2707 = scalar_lea.vmem %s7, 10
        %v2708 = vld [vmem:[%s2707] sm:$0x3]
        %2709 = vrot.lane.b32.xlu0 %v2402, 108
        %v2710 = vpop.permute.xlu0 %2709
        %2711 = vrot.lane.b32.xlu0 %v2403, 108
        %v2712 = vpop.permute.xlu0 %2711
        %2713 = vrot.lane.b32.xlu0 %v2404, 108
        %v2714 = vpop.permute.xlu0 %2713
        %v2715 = vsel %vm739, %v2710, %v2712
        %v2716 = vsel %vm739, %v2712, %v2714
        %v2718 = vsel %vm1048, %v2708, 0
        %v2721 = vsel %vm1052, %v2715, 0
        %v2724 = vsel %vm1052, %v2716, 0
        %v2727 = vsel %vm1052, %v2714, 0
        %2729 = vmatpush.bf16.msra.mxu0 0
        %2730 = vmatpush.bf16.msra.mxu0 0
        %2731 = vmatpush.bf16.msra.mxu0 0
        %2732 = vmatpush.bf16.msra.mxu0 0
        %2733 = vmatpush.bf16.msra.mxu0 0
        %2734 = vmatpush.bf16.msra.mxu0 0
        %2735 = vmatpush.bf16.msra.mxu0 0
        %2736 = vmatpush.bf16.msra.mxu0 %v2721
        %2737 = vmatmul.bf16.gmra.mxu0 %v2718
        %v2738 = vpop.f32.mrf.mxu0
        %v2739 = vadd.f32 0.0, %v2738
        %v2740 = vpop.f32.mrf.mxu0
        %2741 = vdwg.mxu0
        %2742 = vmatpush.bf16.msra.mxu0 0
        %2743 = vmatpush.bf16.msra.mxu0 0
        %2744 = vmatpush.bf16.msra.mxu0 0
        %2745 = vmatpush.bf16.msra.mxu0 0
        %2746 = vmatpush.bf16.msra.mxu0 0
        %2747 = vmatpush.bf16.msra.mxu0 0
        %2748 = vmatpush.bf16.msra.mxu0 0
        %2749 = vmatpush.bf16.msra.mxu0 %v2724
        %2750 = vmatmul.bf16.gmra.mxu0 %v2718
        %v2751 = vpop.f32.mrf.mxu0
        %v2752 = vadd.f32 0.0, %v2751
        %v2753 = vpop.f32.mrf.mxu0
        %2754 = vdwg.mxu0
        %2755 = vmatpush.bf16.msra.mxu0 0
        %2756 = vmatpush.bf16.msra.mxu0 0
        %2757 = vmatpush.bf16.msra.mxu0 0
        %2758 = vmatpush.bf16.msra.mxu0 0
        %2759 = vmatpush.bf16.msra.mxu0 0
        %2760 = vmatpush.bf16.msra.mxu0 0
        %2761 = vmatpush.bf16.msra.mxu0 0
        %2762 = vmatpush.bf16.msra.mxu0 %v2727
        %2763 = vmatmul.bf16.gmra.mxu0 %v2718
        %v2764 = vpop.f32.mrf.mxu0
        %v2765 = vadd.f32 0.0, %v2764
        %v2766 = vpop.f32.mrf.mxu0
        %2767 = vdwg.mxu0
        %v2768 = vadd.f32 %v2704, %v2739
        %v2769 = vadd.f32 %v2705, %v2752
        %v2770 = vadd.f32 %v2706, %v2765
        %s2771 = scalar_lea.vmem %s7, 12
        %v2772 = vld [vmem:[%s2771] sm:$0x3]
        %2773 = vrot.lane.b32.xlu0 %v2402, 92
        %v2774 = vpop.permute.xlu0 %2773
        %2775 = vrot.lane.b32.xlu0 %v2403, 92
        %v2776 = vpop.permute.xlu0 %2775
        %2777 = vrot.lane.b32.xlu0 %v2404, 92
        %v2778 = vpop.permute.xlu0 %2777
        %v2779 = vsel %vm804, %v2774, %v2776
        %v2780 = vsel %vm804, %v2776, %v2778
        %v2782 = vsel %vm1048, %v2772, 0
        %v2785 = vsel %vm1052, %v2779, 0
        %v2788 = vsel %vm1052, %v2780, 0
        %v2791 = vsel %vm1052, %v2778, 0
        %2793 = vmatpush.bf16.msra.mxu0 0
        %2794 = vmatpush.bf16.msra.mxu0 0
        %2795 = vmatpush.bf16.msra.mxu0 0
        %2796 = vmatpush.bf16.msra.mxu0 0
        %2797 = vmatpush.bf16.msra.mxu0 0
        %2798 = vmatpush.bf16.msra.mxu0 0
        %2799 = vmatpush.bf16.msra.mxu0 0
        %2800 = vmatpush.bf16.msra.mxu0 %v2785
        %2801 = vmatmul.bf16.gmra.mxu0 %v2782
        %v2802 = vpop.f32.mrf.mxu0
        %v2803 = vadd.f32 0.0, %v2802
        %v2804 = vpop.f32.mrf.mxu0
        %2805 = vdwg.mxu0
        %2806 = vmatpush.bf16.msra.mxu0 0
        %2807 = vmatpush.bf16.msra.mxu0 0
        %2808 = vmatpush.bf16.msra.mxu0 0
        %2809 = vmatpush.bf16.msra.mxu0 0
        %2810 = vmatpush.bf16.msra.mxu0 0
        %2811 = vmatpush.bf16.msra.mxu0 0
        %2812 = vmatpush.bf16.msra.mxu0 0
        %2813 = vmatpush.bf16.msra.mxu0 %v2788
        %2814 = vmatmul.bf16.gmra.mxu0 %v2782
        %v2815 = vpop.f32.mrf.mxu0
        %v2816 = vadd.f32 0.0, %v2815
        %v2817 = vpop.f32.mrf.mxu0
        %2818 = vdwg.mxu0
        %2819 = vmatpush.bf16.msra.mxu0 0
        %2820 = vmatpush.bf16.msra.mxu0 0
        %2821 = vmatpush.bf16.msra.mxu0 0
        %2822 = vmatpush.bf16.msra.mxu0 0
        %2823 = vmatpush.bf16.msra.mxu0 0
        %2824 = vmatpush.bf16.msra.mxu0 0
        %2825 = vmatpush.bf16.msra.mxu0 0
        %2826 = vmatpush.bf16.msra.mxu0 %v2791
        %2827 = vmatmul.bf16.gmra.mxu0 %v2782
        %v2828 = vpop.f32.mrf.mxu0
        %v2829 = vadd.f32 0.0, %v2828
        %v2830 = vpop.f32.mrf.mxu0
        %2831 = vdwg.mxu0
        %v2832 = vadd.f32 %v2768, %v2803
        %v2833 = vadd.f32 %v2769, %v2816
        %v2834 = vadd.f32 %v2770, %v2829
        %s2835 = scalar_lea.vmem %s7, 14
        %v2836 = vld [vmem:[%s2835] sm:$0x3]
        %2837 = vrot.lane.b32.xlu0 %v2402, 91
        %v2838 = vpop.permute.xlu0 %2837
        %2839 = vrot.lane.b32.xlu0 %v2403, 91
        %v2840 = vpop.permute.xlu0 %2839
        %2841 = vrot.lane.b32.xlu0 %v2404, 91
        %v2842 = vpop.permute.xlu0 %2841
        %v2843 = vsel %vm869, %v2838, %v2840
        %v2844 = vsel %vm869, %v2840, %v2842
        %v2846 = vsel %vm1048, %v2836, 0
        %v2849 = vsel %vm1052, %v2843, 0
        %v2852 = vsel %vm1052, %v2844, 0
        %v2855 = vsel %vm1052, %v2842, 0
        %2857 = vmatpush.bf16.msra.mxu0 0
        %2858 = vmatpush.bf16.msra.mxu0 0
        %2859 = vmatpush.bf16.msra.mxu0 0
        %2860 = vmatpush.bf16.msra.mxu0 0
        %2861 = vmatpush.bf16.msra.mxu0 0
        %2862 = vmatpush.bf16.msra.mxu0 0
        %2863 = vmatpush.bf16.msra.mxu0 0
        %2864 = vmatpush.bf16.msra.mxu0 %v2849
        %2865 = vmatmul.bf16.gmra.mxu0 %v2846
        %v2866 = vpop.f32.mrf.mxu0
        %v2867 = vadd.f32 0.0, %v2866
        %v2868 = vpop.f32.mrf.mxu0
        %2869 = vdwg.mxu0
        %2870 = vmatpush.bf16.msra.mxu0 0
        %2871 = vmatpush.bf16.msra.mxu0 0
        %2872 = vmatpush.bf16.msra.mxu0 0
        %2873 = vmatpush.bf16.msra.mxu0 0
        %2874 = vmatpush.bf16.msra.mxu0 0
        %2875 = vmatpush.bf16.msra.mxu0 0
        %2876 = vmatpush.bf16.msra.mxu0 0
        %2877 = vmatpush.bf16.msra.mxu0 %v2852
        %2878 = vmatmul.bf16.gmra.mxu0 %v2846
        %v2879 = vpop.f32.mrf.mxu0
        %v2880 = vadd.f32 0.0, %v2879
        %v2881 = vpop.f32.mrf.mxu0
        %2882 = vdwg.mxu0
        %2883 = vmatpush.bf16.msra.mxu0 0
        %2884 = vmatpush.bf16.msra.mxu0 0
        %2885 = vmatpush.bf16.msra.mxu0 0
        %2886 = vmatpush.bf16.msra.mxu0 0
        %2887 = vmatpush.bf16.msra.mxu0 0
        %2888 = vmatpush.bf16.msra.mxu0 0
        %2889 = vmatpush.bf16.msra.mxu0 0
        %2890 = vmatpush.bf16.msra.mxu0 %v2855
        %2891 = vmatmul.bf16.gmra.mxu0 %v2846
        %v2892 = vpop.f32.mrf.mxu0
        %v2893 = vadd.f32 0.0, %v2892
        %v2894 = vpop.f32.mrf.mxu0
        %2895 = vdwg.mxu0
        %v2896 = vadd.f32 %v2832, %v2867
        %v2897 = vadd.f32 %v2833, %v2880
        %v2898 = vadd.f32 %v2834, %v2893
        %s2899 = scalar_lea.vmem %s7, 16
        %v2900 = vld [vmem:[%s2899] sm:$0x3]
        %2901 = vrot.lane.b32.xlu0 %v2402, 90
        %v2902 = vpop.permute.xlu0 %2901
        %2903 = vrot.lane.b32.xlu0 %v2403, 90
        %v2904 = vpop.permute.xlu0 %2903
        %2905 = vrot.lane.b32.xlu0 %v2404, 90
        %v2906 = vpop.permute.xlu0 %2905
        %v2907 = vsel %vm934, %v2902, %v2904
        %v2908 = vsel %vm934, %v2904, %v2906
        %v2910 = vsel %vm1048, %v2900, 0
        %v2913 = vsel %vm1052, %v2907, 0
        %v2916 = vsel %vm1052, %v2908, 0
        %v2919 = vsel %vm1052, %v2906, 0
        %2921 = vmatpush.bf16.msra.mxu0 0
        %2922 = vmatpush.bf16.msra.mxu0 0
        %2923 = vmatpush.bf16.msra.mxu0 0
        %2924 = vmatpush.bf16.msra.mxu0 0
        %2925 = vmatpush.bf16.msra.mxu0 0
        %2926 = vmatpush.bf16.msra.mxu0 0
        %2927 = vmatpush.bf16.msra.mxu0 0
        %2928 = vmatpush.bf16.msra.mxu0 %v2913
        %2929 = vmatmul.bf16.gmra.mxu0 %v2910
        %v2930 = vpop.f32.mrf.mxu0
        %v2931 = vadd.f32 0.0, %v2930
        %v2932 = vpop.f32.mrf.mxu0
        %2933 = vdwg.mxu0
        %2934 = vmatpush.bf16.msra.mxu0 0
        %2935 = vmatpush.bf16.msra.mxu0 0
        %2936 = vmatpush.bf16.msra.mxu0 0
        %2937 = vmatpush.bf16.msra.mxu0 0
        %2938 = vmatpush.bf16.msra.mxu0 0
        %2939 = vmatpush.bf16.msra.mxu0 0
        %2940 = vmatpush.bf16.msra.mxu0 0
        %2941 = vmatpush.bf16.msra.mxu0 %v2916
        %2942 = vmatmul.bf16.gmra.mxu0 %v2910
        %v2943 = vpop.f32.mrf.mxu0
        %v2944 = vadd.f32 0.0, %v2943
        %v2945 = vpop.f32.mrf.mxu0
        %2946 = vdwg.mxu0
        %2947 = vmatpush.bf16.msra.mxu0 0
        %2948 = vmatpush.bf16.msra.mxu0 0
        %2949 = vmatpush.bf16.msra.mxu0 0
        %2950 = vmatpush.bf16.msra.mxu0 0
        %2951 = vmatpush.bf16.msra.mxu0 0
        %2952 = vmatpush.bf16.msra.mxu0 0
        %2953 = vmatpush.bf16.msra.mxu0 0
        %2954 = vmatpush.bf16.msra.mxu0 %v2919
        %2955 = vmatmul.bf16.gmra.mxu0 %v2910
        %v2956 = vpop.f32.mrf.mxu0
        %v2957 = vadd.f32 0.0, %v2956
        %v2958 = vpop.f32.mrf.mxu0
        %2959 = vdwg.mxu0
        %v2960 = vadd.f32 %v2896, %v2931
        %v2961 = vadd.f32 %v2897, %v2944
        %v2962 = vadd.f32 %v2898, %v2957
        %s2963 = sld [smem:[#allocation3 + $0x3]]
        %vm2964 = vcmp.gt.f32.partialorder %v2960, 0.0
        %vm2965 = vcmp.gt.f32.partialorder %v2961, 0.0
        %vm2966 = vcmp.gt.f32.partialorder %v2962, 0.0
        %v2967 = vstv %s2963
        %v2968 = vmul.f32 %v2967, %v2960
        %v2969 = vmul.f32 %v2967, %v2961
        %v2970 = vmul.f32 %v2967, %v2962
        %v2971 = vsel %vm2964, %v2960, %v2968
        %v2972 = vsel %vm2965, %v2961, %v2969
        %v2973 = vsel %vm2966, %v2962, %v2970
        %v2974 = vmul.f32 %v2971, %v377
        %v2975 = vmul.f32 %v2972, %v378
        %v2976 = vmul.f32 %v2973, %v379
        %v2977 = vpack.c.bf16 %v2975, %v2974
        %v2978 = vpack.c.bf16 %v2976, %v2976
        %2981 = vrot.lane.b32.xlu0 %v2977, 19
        %v2982 = vpop.permute.xlu0 %2981
        %2983 = vrot.lane.b32.xlu0 %v2978, 19
        %v2984 = vpop.permute.xlu0 %2983
        %v2985 = vrot.slane %v2982, 4
        %v2986 = vsel %vm1016, %v2985, %v2982
        %v2987 = vsel %vm1016, %v2985, %v2984
        %2990 = vst.msk [vmem:[#allocation2 + $0xc] sm:$0x33] %vm1629, %v2986
        %2991 = vst.msk [vmem:[#allocation2 + $0x14] sm:$0x3] %vm1631, %v2987
        %s2992 = scalar_lea.vmem %s8, 2
        %v2993 = vld [vmem:[%s2992] sm:$0x3]
        %v2994 = vld [vmem:[#allocation2] sm:$0xff]
        %v2995 = vld [vmem:[#allocation2 + $0x8] sm:$0xf]
        %v2996 = vld [vmem:[#allocation2 + $0xc] sm:$0x33]
        %v2997 = vld [vmem:[#allocation2 + $0x14] sm:$0x3]
        %v2998 = vunpack.c.l.bf16 %v1715
        %v2999 = vunpack.c.h.bf16 %v1715
        %v3000 = vunpack.c.l.bf16 %v1716
        %v3005 = vunpack.c.l.b16 %v2994
        %v3006 = vunpack.c.h.b16 %v2994
        %v3007 = vunpack.c.l.b16 %v2995
        %v3008 = vunpack.c.l.b16 %v2996
        %v3009 = vunpack.c.h.b16 %v2996
        %v3010 = vunpack.c.l.b16 %v2997
        %v3011 = vpack.c.b16 %v3008, %v3005
        %v3012 = vpack.c.b16 %v3009, %v3006
        %v3013 = vpack.c.b16 %v3010, %v3007
        %v3015 = vsel %vm1662, %v2993, 0
        %v3018 = vsel %vm1666, %v3011, 0
        %v3021 = vsel %vm1666, %v3012, 0
        %v3024 = vsel %vm1666, %v3013, 0
        %3026 = vmatpush.bf16.msra.mxu0 0
        %3027 = vmatpush.bf16.msra.mxu0 0
        %3028 = vmatpush.bf16.msra.mxu0 0
        %3029 = vmatpush.bf16.msra.mxu0 0
        %3030 = vmatpush.bf16.msra.mxu0 0
        %3031 = vmatpush.bf16.msra.mxu0 0
        %3032 = vmatpush.bf16.msra.mxu0 0
        %3033 = vmatpush.bf16.msra.mxu0 %v3018
        %3034 = vmatmul.bf16.gmra.mxu0 %v3015
        %v3035 = vpop.f32.mrf.mxu0
        %v3036 = vadd.f32 %v2998, %v3035
        %v3037 = vpop.f32.mrf.mxu0
        %3038 = vdwg.mxu0
        %3039 = vmatpush.bf16.msra.mxu0 0
        %3040 = vmatpush.bf16.msra.mxu0 0
        %3041 = vmatpush.bf16.msra.mxu0 0
        %3042 = vmatpush.bf16.msra.mxu0 0
        %3043 = vmatpush.bf16.msra.mxu0 0
        %3044 = vmatpush.bf16.msra.mxu0 0
        %3045 = vmatpush.bf16.msra.mxu0 0
        %3046 = vmatpush.bf16.msra.mxu0 %v3021
        %3047 = vmatmul.bf16.gmra.mxu0 %v3015
        %v3048 = vpop.f32.mrf.mxu0
        %v3049 = vadd.f32 %v2999, %v3048
        %v3050 = vpop.f32.mrf.mxu0
        %3051 = vdwg.mxu0
        %3052 = vmatpush.bf16.msra.mxu0 0
        %3053 = vmatpush.bf16.msra.mxu0 0
        %3054 = vmatpush.bf16.msra.mxu0 0
        %3055 = vmatpush.bf16.msra.mxu0 0
        %3056 = vmatpush.bf16.msra.mxu0 0
        %3057 = vmatpush.bf16.msra.mxu0 0
        %3058 = vmatpush.bf16.msra.mxu0 0
        %3059 = vmatpush.bf16.msra.mxu0 %v3024
        %3060 = vmatmul.bf16.gmra.mxu0 %v3015
        %v3061 = vpop.f32.mrf.mxu0
        %v3062 = vadd.f32 %v3000, %v3061
        %v3063 = vpop.f32.mrf.mxu0
        %3064 = vdwg.mxu0
        %v3065 = vpack.c.bf16 %v3036, %v3036
        %v3066 = vpack.c.bf16 %v3049, %v3049
        %v3067 = vpack.c.bf16 %v3062, %v3062
        %s3068 = scalar_lea.vmem %s9, 2
        %v3069 = vld [vmem:[%s3068] sm:$0x3]
        %v3071 = vsel %vm432, %v3069, 0
        %v3074 = vsel %vm436, %v3065, 0
        %v3077 = vsel %vm436, %v3066, 0
        %v3080 = vsel %vm436, %v3067, 0
        %3082 = vmatpush.bf16.msra.mxu0 0
        %3083 = vmatpush.bf16.msra.mxu0 0
        %3084 = vmatpush.bf16.msra.mxu0 0
        %3085 = vmatpush.bf16.msra.mxu0 0
        %3086 = vmatpush.bf16.msra.mxu0 0
        %3087 = vmatpush.bf16.msra.mxu0 0
        %3088 = vmatpush.bf16.msra.mxu0 0
        %3089 = vmatpush.bf16.msra.mxu0 %v3074
        %3090 = vmatmul.bf16.gmra.mxu0 %v3071
        %v3091 = vpop.f32.mrf.mxu0
        %v3092 = vadd.f32 0.0, %v3091
        %v3093 = vpop.f32.mrf.mxu0
        %3094 = vdwg.mxu0
        %3095 = vmatpush.bf16.msra.mxu0 0
        %3096 = vmatpush.bf16.msra.mxu0 0
        %3097 = vmatpush.bf16.msra.mxu0 0
        %3098 = vmatpush.bf16.msra.mxu0 0
        %3099 = vmatpush.bf16.msra.mxu0 0
        %3100 = vmatpush.bf16.msra.mxu0 0
        %3101 = vmatpush.bf16.msra.mxu0 0
        %3102 = vmatpush.bf16.msra.mxu0 %v3077
        %3103 = vmatmul.bf16.gmra.mxu0 %v3071
        %v3104 = vpop.f32.mrf.mxu0
        %v3105 = vadd.f32 0.0, %v3104
        %v3106 = vpop.f32.mrf.mxu0
        %3107 = vdwg.mxu0
        %3108 = vmatpush.bf16.msra.mxu0 0
        %3109 = vmatpush.bf16.msra.mxu0 0
        %3110 = vmatpush.bf16.msra.mxu0 0
        %3111 = vmatpush.bf16.msra.mxu0 0
        %3112 = vmatpush.bf16.msra.mxu0 0
        %3113 = vmatpush.bf16.msra.mxu0 0
        %3114 = vmatpush.bf16.msra.mxu0 0
        %3115 = vmatpush.bf16.msra.mxu0 %v3080
        %3116 = vmatmul.bf16.gmra.mxu0 %v3071
        %v3117 = vpop.f32.mrf.mxu0
        %v3118 = vadd.f32 0.0, %v3117
        %v3119 = vpop.f32.mrf.mxu0
        %3120 = vdwg.mxu0
        %v3123 = vrot.slane %v3105, 4
        %v3124 = vsel %vm1052, %v3092, %v3123
        %v3126 = vadd.f32 %v1782, %v3124
        %v3127 = vadd.f32 %v1783, %v3118
        %3128 = vst [vmem:[%s373] sm:$0xff] %v3126
        %3129 = vst [vmem:[%s373 + $0x8] sm:$0xf] %v3127
        %p3130 = scmp.lt.s32.totalorder %s22, 1
        %s3131 = scalar_select %p3130, %s22, 1
        %s3132 = smul.addr %s3131, 3
        %s3133 = smul.addr %s3132, 4
        %s3134 = scalar_lea.vmem %s10, %s3133
        // Predicated region
        $region65: #{grdb_forward.1} parent=59 // pred_check
          %p3135 = pneg %p255
        $region66: #{grdb_forward.1} parent=59 // pred_check_branch
          %3137 = sbr.rel (%p3135) target = $region68
        $region67: #{grdb_forward.1} parent=59 // pred_region
          _
        $region68: #{grdb_forward.1} parent=59 // pred_fallthru
          _
      $region60: #{grdb_forward.1} parent=5 // pred_fallthru
        _
      %p3138 = scmp.le.s32.totalorder 2, %s17
      // Predicated region
      $region69: #{grdb_forward.1} parent=5 // pred_check
        %p3139 = pneg %p3138
      $region70: #{grdb_forward.1} parent=5 // pred_check_branch
        %3141 = sbr.rel (%p3139) target = $region72
      $region71: #{grdb_forward.1} parent=5 // pred_region
        %s3142 = ssub.s32 %s17, 2
        // Predicated region
        $region73: #{grdb_forward.1} parent=71 // pred_check
          %p3143 = pneg %p261
        $region74: #{grdb_forward.1} parent=71 // pred_check_branch
          %3145 = sbr.rel (%p3143) target = $region76
        $region75: #{grdb_forward.1} parent=71 // pred_region
          %p3146 = scmp.lt.s32.totalorder %s23, 1
          %s3147 = scalar_select %p3146, %s23, 1
          %s3148 = smul.addr %s3147, 3
          %s3149 = smul.addr %s3148, 4
          %s3150 = scalar_lea.vmem %s10, %s3149
        $region76: #{grdb_forward.1} parent=71 // pred_fallthru
          _
      $region72: #{grdb_forward.1} parent=5 // pred_fallthru
        _
    $region6: #{grdb_forward.1} parent=1 // loop_footer
      %s21 = sadd.s32 1, %s17
    $region7: #{grdb_forward.1} parent=1 // loop_footer_branch
      %16 = sbr.rel target = $region3
    $region8: #{grdb_forward.1} parent=1 // loop_exit
      _
    %3151 = vsyncpa [#allocation4], 1
    %s3152 = scalar_lea.sflag [#allocation4], 1
    %3153 = vsyncpa %s3152, 1

</llo_original>
